<compile_context>
chip_gen: v5e
topology: v5e:2x2
jax: 0.10.0
libtpu: 0.0.40
codegen_flags: <defaults>
</compile_context>

<pallas_src>
import jax
import jax.numpy as jnp
from jax import lax
from jax.experimental import pallas as pl
from jax.experimental.pallas import tpu as pltpu

# Problem sizes (consistent with the module's forward).
N, CIN, COUT = 2, 4, 8
H, W, K = 16, 16, 3
PAD = 1                    # padding = 1, stride = 1, dilation = 1, groups = 1
EPS = 1e-3                 # BatchNorm eps
HW = H * W                 # 256  (lane-dense output width)
NPIX = N * H * W           # 512  im2col rows
TAPS = K * K * CIN         # 36   im2col columns (kh, kw, ci)
NBR = 3                    # branches: [square, vertical, horizontal]
OCH = NBR * COUT           # 24   stacked output channels


def _acblock_relu_kernel(xpad_ref, wstk_ref, gamma_ref, beta_ref, out_ref,
                         patch_ref):
    """Fused 3x3 + 3x1 + 1x3 convs (one matmul) + per-branch BN + sum + ReLU."""
    # xpad_ref : (N, H+2, W+2, CIN)   zero-padded activations (NHWC)
    # wstk_ref : (OCH, TAPS)          stacked [square; ver; hor] weights
    # gamma_ref/beta_ref : (OCH, 1)   BN affine params, same branch stacking
    # out_ref  : (N, COUT, H*W)       NCHW-compatible, lane-dense output
    # patch_ref: (N, H, W, TAPS)      VMEM scratch for im2col patches

    # --- im2col: 9 tap windows, full CIN kept per tap (no per-channel loop) ---
    for kh in range(K):
        for kw in range(K):
            t = kh * K + kw
            patch_ref[:, :, :, t * CIN:(t + 1) * CIN] = (
                xpad_ref[:, kh:kh + H, kw:kw + W, :])

    patches = patch_ref[...].reshape(NPIX, TAPS)          # (512, 36)

    # --- one MXU matmul produces all three pre-BN branches: (24, 512) -------
    r = lax.dot_general(
        wstk_ref[...], patches,
        dimension_numbers=(((1,), (1,)), ((), ())),       # contract the 36 taps
        preferred_element_type=jnp.float32,
        precision=lax.Precision.HIGHEST,
    )

    # --- training-mode BatchNorm, single-pass stats (biased variance) -------
    mean = jnp.mean(r, axis=1, keepdims=True)             # (24, 1)
    msq = jnp.mean(r * r, axis=1, keepdims=True)          # (24, 1)
    var = msq - mean * mean
    scale = gamma_ref[...] * lax.rsqrt(var + EPS)         # (24, 1)
    shift = beta_ref[...] - mean * scale
    y = r * scale + shift                                 # (24, 512)

    # --- sum the three branches (sublane-aligned slices) + ReLU -------------
    y = y[0:COUT, :] + y[COUT:2 * COUT, :] + y[2 * COUT:3 * COUT, :]   # (8, 512)
    y = jnp.maximum(y, 0.0)

    # --- emit (N, COUT, H*W); lane-group-aligned unmasked stores -------------
    for n in range(N):
        out_ref[n, :, :] = y[:, n * HW:(n + 1) * HW]


def acblock_relu(x_nchw, wsq_oihw, wver_oihw, whor_oihw, gammas, betas):
    """x_nchw: (N, CIN, H, W) f32 -> (N, COUT, H, W) f32 (training-mode forward)."""
    # ---- one-off weight prep: stack all three branch kernels into (24, 36) ----
    # tap index inside a row = (kh*K + kw)*CIN + ci
    wsq_flat = jnp.transpose(wsq_oihw, (0, 2, 3, 1)).reshape(COUT, TAPS)
    wver_full = jnp.zeros((COUT, K, K, CIN), jnp.float32).at[:, :, PAD, :].set(
        jnp.transpose(wver_oihw[:, :, :, 0], (0, 2, 1)))      # ver lives at kw=1
    whor_full = jnp.zeros((COUT, K, K, CIN), jnp.float32).at[:, PAD, :, :].set(
        jnp.transpose(whor_oihw[:, :, 0, :], (0, 2, 1)))      # hor lives at kh=1
    wstk = jnp.concatenate(
        [wsq_flat,
         wver_full.reshape(COUT, TAPS),
         whor_full.reshape(COUT, TAPS)], axis=0)              # (24, 36)

    gamma_stk = gammas.reshape(OCH, 1)                        # [sq | ver | hor]
    beta_stk = betas.reshape(OCH, 1)

    # ---- activation prep: NCHW -> NHWC + shared zero pad (tiny XLA glue) ----
    xpad = jnp.pad(jnp.transpose(x_nchw, (0, 2, 3, 1)),
                   ((0, 0), (PAD, PAD), (PAD, PAD), (0, 0)))  # (2, 18, 18, 4)

    out = pl.pallas_call(
        _acblock_relu_kernel,
        out_shape=jax.ShapeDtypeStruct((N, COUT, HW), jnp.float32),
        grid=(1,),
        in_specs=[
            pl.BlockSpec(xpad.shape, lambda i: (0, 0, 0, 0)),
            pl.BlockSpec((OCH, TAPS), lambda i: (0, 0)),
            pl.BlockSpec((OCH, 1), lambda i: (0, 0)),
            pl.BlockSpec((OCH, 1), lambda i: (0, 0)),
        ],
        out_specs=pl.BlockSpec((N, COUT, HW), lambda i: (0, 0, 0)),
        scratch_shapes=[pltpu.VMEM((N, H, W, TAPS), jnp.float32)],
        compiler_params=pltpu.CompilerParams(
            dimension_semantics=("arbitrary",)),
    )(xpad, wstk, gamma_stk, beta_stk)

    # (N, COUT, H*W) -> (N, COUT, H, W): free reshape, no transpose.
    return out.reshape(N, COUT, H, W)


def reference(x_nchw, wsq_oihw, wver_oihw, whor_oihw, gammas, betas):
    """Pure-JAX reference matching the PyTorch forward in training mode."""
    dn = ('NCHW', 'OIHW', 'NCHW')
    hp = lax.Precision.HIGHEST
    sq = lax.conv_general_dilated(x_nchw, wsq_oihw, (1, 1), ((1, 1), (1, 1)),
                                  dimension_numbers=dn, precision=hp)
    ver = lax.conv_general_dilated(x_nchw, wver_oihw, (1, 1), ((1, 1), (0, 0)),
                                   dimension_numbers=dn, precision=hp)
    hor = lax.conv_general_dilated(x_nchw, whor_oihw, (1, 1), ((0, 0), (1, 1)),
                                   dimension_numbers=dn, precision=hp)

    def bn(y, g, b):
        mean = jnp.mean(y, axis=(0, 2, 3), keepdims=True)
        var = jnp.mean((y - mean) ** 2, axis=(0, 2, 3), keepdims=True)
        return ((y - mean) * lax.rsqrt(var + EPS) * g.reshape(1, -1, 1, 1)
                + b.reshape(1, -1, 1, 1))

    total = (bn(sq, gammas[0], betas[0]) + bn(ver, gammas[1], betas[1])
             + bn(hor, gammas[2], betas[2]))
    return jax.nn.relu(total)


if __name__ == "__main__":
    key = jax.random.PRNGKey(0)
    k1, k2, k3, k4, k5, k6 = jax.random.split(key, 6)

    x = jax.random.normal(k1, (N, CIN, H, W), jnp.float32)

    # Deterministic parameters (PyTorch-layout OIHW conv weights).
    wsq_oihw = 0.2 * jax.random.normal(k2, (COUT, CIN, K, K), jnp.float32)
    wver_oihw = 0.2 * jax.random.normal(k3, (COUT, CIN, K, 1), jnp.float32)
    whor_oihw = 0.2 * jax.random.normal(k4, (COUT, CIN, 1, K), jnp.float32)
    gammas = 1.0 + 0.1 * jax.random.normal(k5, (3, COUT), jnp.float32)  # [sq, ver, hor]
    betas = 0.1 * jax.random.normal(k6, (3, COUT), jnp.float32)

    out = acblock_relu(x, wsq_oihw, wver_oihw, whor_oihw, gammas, betas)
    out = jax.block_until_ready(out)

    ref = reference(x, wsq_oihw, wver_oihw, whor_oihw, gammas, betas)
    assert out.shape == (N, COUT, H, W), out.shape
    max_err = float(jnp.max(jnp.abs(out - ref)))
    assert jnp.allclose(out, ref, atol=1e-4, rtol=1e-4), max_err

    print("KERNEL_OK")
</pallas_src>

<mosaic_0001>
module attributes {stable_mosaic.version = 11 : i64} {
  func.func @_acblock_relu_kernel(%arg0: i32, %arg1: memref<2x18x18x4xf32, #tpu.memory_space<vmem>>, %arg2: memref<24x36xf32, #tpu.memory_space<vmem>>, %arg3: memref<24x1xf32, #tpu.memory_space<vmem>>, %arg4: memref<24x1xf32, #tpu.memory_space<vmem>>, %arg5: memref<2x8x256xf32, #tpu.memory_space<vmem>>, %arg6: memref<2x16x16x36xf32, #tpu.memory_space<vmem>>) attributes {dimension_semantics = [#tpu.dimension_semantics<arbitrary>], iteration_bounds = array<i64: 1>, scalar_prefetch = 0 : i64, scratch_operands = 1 : i64, tpu.core_type = #tpu.core_type<tc>, window_params = [{pipeline_mode = #tpu.pipeline_mode<synchronous>, transform_indices = @transform_0, window_bounds = array<i64: 2, 18, 18, 4>}, {pipeline_mode = #tpu.pipeline_mode<synchronous>, transform_indices = @transform_1, window_bounds = array<i64: 24, 36>}, {pipeline_mode = #tpu.pipeline_mode<synchronous>, transform_indices = @transform_2, window_bounds = array<i64: 24, 1>}, {pipeline_mode = #tpu.pipeline_mode<synchronous>, transform_indices = @transform_3, window_bounds = array<i64: 24, 1>}, {pipeline_mode = #tpu.pipeline_mode<synchronous>, transform_indices = @transform_4, window_bounds = array<i64: 2, 8, 256>}]} {
    %c0 = arith.constant 0 : index
    %c0_0 = arith.constant 0 : index
    %c0_1 = arith.constant 0 : index
    %c0_2 = arith.constant 0 : index
    %0 = vector.load %arg1[%c0, %c0_0, %c0_1, %c0_2] : memref<2x18x18x4xf32, #tpu.memory_space<vmem>>, vector<2x16x16x4xf32>
    %c0_3 = arith.constant 0 : index
    %c0_4 = arith.constant 0 : index
    %c0_5 = arith.constant 0 : index
    %c0_6 = arith.constant 0 : index
    %1 = vector.load %arg6[%c0_3, %c0_4, %c0_5, %c0_6] : memref<2x16x16x36xf32, #tpu.memory_space<vmem>>, vector<2x16x16x4xf32>
    tpu.vector_store %arg6[%c0_3, %c0_4, %c0_5, %c0_6], %0 {strides = array<i32>} : memref<2x16x16x36xf32, #tpu.memory_space<vmem>>, vector<2x16x16x4xf32>,
    %c0_7 = arith.constant 0 : index
    %c0_8 = arith.constant 0 : index
    %c1 = arith.constant 1 : index
    %c0_9 = arith.constant 0 : index
    %2 = vector.load %arg1[%c0_7, %c0_8, %c1, %c0_9] : memref<2x18x18x4xf32, #tpu.memory_space<vmem>>, vector<2x16x16x4xf32>
    %c0_10 = arith.constant 0 : index
    %c0_11 = arith.constant 0 : index
    %c0_12 = arith.constant 0 : index
    %c4 = arith.constant 4 : index
    %3 = vector.load %arg6[%c0_10, %c0_11, %c0_12, %c4] : memref<2x16x16x36xf32, #tpu.memory_space<vmem>>, vector<2x16x16x4xf32>
    tpu.vector_store %arg6[%c0_10, %c0_11, %c0_12, %c4], %2 {strides = array<i32>} : memref<2x16x16x36xf32, #tpu.memory_space<vmem>>, vector<2x16x16x4xf32>,
    %c0_13 = arith.constant 0 : index
    %c0_14 = arith.constant 0 : index
    %c2 = arith.constant 2 : index
    %c0_15 = arith.constant 0 : index
    %4 = vector.load %arg1[%c0_13, %c0_14, %c2, %c0_15] : memref<2x18x18x4xf32, #tpu.memory_space<vmem>>, vector<2x16x16x4xf32>
    %c0_16 = arith.constant 0 : index
    %c0_17 = arith.constant 0 : index
    %c0_18 = arith.constant 0 : index
    %c8 = arith.constant 8 : index
    %5 = vector.load %arg6[%c0_16, %c0_17, %c0_18, %c8] : memref<2x16x16x36xf32, #tpu.memory_space<vmem>>, vector<2x16x16x4xf32>
    tpu.vector_store %arg6[%c0_16, %c0_17, %c0_18, %c8], %4 {strides = array<i32>} : memref<2x16x16x36xf32, #tpu.memory_space<vmem>>, vector<2x16x16x4xf32>,
    %c0_19 = arith.constant 0 : index
    %c1_20 = arith.constant 1 : index
    %c0_21 = arith.constant 0 : index
    %c0_22 = arith.constant 0 : index
    %6 = vector.load %arg1[%c0_19, %c1_20, %c0_21, %c0_22] : memref<2x18x18x4xf32, #tpu.memory_space<vmem>>, vector<2x16x16x4xf32>
    %c0_23 = arith.constant 0 : index
    %c0_24 = arith.constant 0 : index
    %c0_25 = arith.constant 0 : index
    %c12 = arith.constant 12 : index
    %7 = vector.load %arg6[%c0_23, %c0_24, %c0_25, %c12] : memref<2x16x16x36xf32, #tpu.memory_space<vmem>>, vector<2x16x16x4xf32>
    tpu.vector_store %arg6[%c0_23, %c0_24, %c0_25, %c12], %6 {strides = array<i32>} : memref<2x16x16x36xf32, #tpu.memory_space<vmem>>, vector<2x16x16x4xf32>,
    %c0_26 = arith.constant 0 : index
    %c1_27 = arith.constant 1 : index
    %c1_28 = arith.constant 1 : index
    %c0_29 = arith.constant 0 : index
    %8 = vector.load %arg1[%c0_26, %c1_27, %c1_28, %c0_29] : memref<2x18x18x4xf32, #tpu.memory_space<vmem>>, vector<2x16x16x4xf32>
    %c0_30 = arith.constant 0 : index
    %c0_31 = arith.constant 0 : index
    %c0_32 = arith.constant 0 : index
    %c16 = arith.constant 16 : index
    %9 = vector.load %arg6[%c0_30, %c0_31, %c0_32, %c16] : memref<2x16x16x36xf32, #tpu.memory_space<vmem>>, vector<2x16x16x4xf32>
    tpu.vector_store %arg6[%c0_30, %c0_31, %c0_32, %c16], %8 {strides = array<i32>} : memref<2x16x16x36xf32, #tpu.memory_space<vmem>>, vector<2x16x16x4xf32>,
    %c0_33 = arith.constant 0 : index
    %c1_34 = arith.constant 1 : index
    %c2_35 = arith.constant 2 : index
    %c0_36 = arith.constant 0 : index
    %10 = vector.load %arg1[%c0_33, %c1_34, %c2_35, %c0_36] : memref<2x18x18x4xf32, #tpu.memory_space<vmem>>, vector<2x16x16x4xf32>
    %c0_37 = arith.constant 0 : index
    %c0_38 = arith.constant 0 : index
    %c0_39 = arith.constant 0 : index
    %c20 = arith.constant 20 : index
    %11 = vector.load %arg6[%c0_37, %c0_38, %c0_39, %c20] : memref<2x16x16x36xf32, #tpu.memory_space<vmem>>, vector<2x16x16x4xf32>
    tpu.vector_store %arg6[%c0_37, %c0_38, %c0_39, %c20], %10 {strides = array<i32>} : memref<2x16x16x36xf32, #tpu.memory_space<vmem>>, vector<2x16x16x4xf32>,
    %c0_40 = arith.constant 0 : index
    %c2_41 = arith.constant 2 : index
    %c0_42 = arith.constant 0 : index
    %c0_43 = arith.constant 0 : index
    %12 = vector.load %arg1[%c0_40, %c2_41, %c0_42, %c0_43] : memref<2x18x18x4xf32, #tpu.memory_space<vmem>>, vector<2x16x16x4xf32>
    %c0_44 = arith.constant 0 : index
    %c0_45 = arith.constant 0 : index
    %c0_46 = arith.constant 0 : index
    %c24 = arith.constant 24 : index
    %13 = vector.load %arg6[%c0_44, %c0_45, %c0_46, %c24] : memref<2x16x16x36xf32, #tpu.memory_space<vmem>>, vector<2x16x16x4xf32>
    tpu.vector_store %arg6[%c0_44, %c0_45, %c0_46, %c24], %12 {strides = array<i32>} : memref<2x16x16x36xf32, #tpu.memory_space<vmem>>, vector<2x16x16x4xf32>,
    %c0_47 = arith.constant 0 : index
    %c2_48 = arith.constant 2 : index
    %c1_49 = arith.constant 1 : index
    %c0_50 = arith.constant 0 : index
    %14 = vector.load %arg1[%c0_47, %c2_48, %c1_49, %c0_50] : memref<2x18x18x4xf32, #tpu.memory_space<vmem>>, vector<2x16x16x4xf32>
    %c0_51 = arith.constant 0 : index
    %c0_52 = arith.constant 0 : index
    %c0_53 = arith.constant 0 : index
    %c28 = arith.constant 28 : index
    %15 = vector.load %arg6[%c0_51, %c0_52, %c0_53, %c28] : memref<2x16x16x36xf32, #tpu.memory_space<vmem>>, vector<2x16x16x4xf32>
    tpu.vector_store %arg6[%c0_51, %c0_52, %c0_53, %c28], %14 {strides = array<i32>} : memref<2x16x16x36xf32, #tpu.memory_space<vmem>>, vector<2x16x16x4xf32>,
    %c0_54 = arith.constant 0 : index
    %c2_55 = arith.constant 2 : index
    %c2_56 = arith.constant 2 : index
    %c0_57 = arith.constant 0 : index
    %16 = vector.load %arg1[%c0_54, %c2_55, %c2_56, %c0_57] : memref<2x18x18x4xf32, #tpu.memory_space<vmem>>, vector<2x16x16x4xf32>
    %c0_58 = arith.constant 0 : index
    %c0_59 = arith.constant 0 : index
    %c0_60 = arith.constant 0 : index
    %c32 = arith.constant 32 : index
    %17 = vector.load %arg6[%c0_58, %c0_59, %c0_60, %c32] : memref<2x16x16x36xf32, #tpu.memory_space<vmem>>, vector<2x16x16x4xf32>
    tpu.vector_store %arg6[%c0_58, %c0_59, %c0_60, %c32], %16 {strides = array<i32>} : memref<2x16x16x36xf32, #tpu.memory_space<vmem>>, vector<2x16x16x4xf32>,
    %c0_61 = arith.constant 0 : index
    %c0_62 = arith.constant 0 : index
    %c0_63 = arith.constant 0 : index
    %c0_64 = arith.constant 0 : index
    %18 = vector.load %arg6[%c0_61, %c0_62, %c0_63, %c0_64] : memref<2x16x16x36xf32, #tpu.memory_space<vmem>>, vector<2x16x16x36xf32>
    %19 = vector.shape_cast %18 : vector<2x16x16x36xf32> to vector<512x36xf32>
    %c0_65 = arith.constant 0 : index
    %c0_66 = arith.constant 0 : index
    %20 = vector.load %arg2[%c0_65, %c0_66] : memref<24x36xf32, #tpu.memory_space<vmem>>, vector<24x36xf32>
    %cst = arith.constant dense<0.000000e+00> : vector<24x512xf32>
    %21 = tpu.matmul %20, %19, %cst {dimension_numbers = #tpu.dot_dimension_numbers<[1], [1], [0], [0], [0, 0, 1, 0], [], []>, precision = #tpu.contract_precision<fp32>} : vector<24x36xf32>, vector<512x36xf32>, vector<24x512xf32> -> vector<24x512xf32>
    %cst_67 = arith.constant dense<0.000000e+00> : vector<24xf32>
    %22 = vector.multi_reduction <add>, %21, %cst_67 [1] : vector<24x512xf32> to vector<24xf32>
    %23 = vector.shape_cast %22 : vector<24xf32> to vector<24x1xf32>
    %cst_68 = arith.constant 5.120000e+02 : f32
    %24 = vector.broadcast %cst_68 : f32 to vector<24x1xf32>
    %25 = arith.divf %23, %24 : vector<24x1xf32>
    %26 = arith.mulf %21, %21 : vector<24x512xf32>
    %cst_69 = arith.constant dense<0.000000e+00> : vector<24xf32>
    %27 = vector.multi_reduction <add>, %26, %cst_69 [1] : vector<24x512xf32> to vector<24xf32>
    %28 = vector.shape_cast %27 : vector<24xf32> to vector<24x1xf32>
    %cst_70 = arith.constant 5.120000e+02 : f32
    %29 = vector.broadcast %cst_70 : f32 to vector<24x1xf32>
    %30 = arith.divf %28, %29 : vector<24x1xf32>
    %31 = arith.mulf %25, %25 : vector<24x1xf32>
    %32 = arith.subf %30, %31 : vector<24x1xf32>
    %c0_71 = arith.constant 0 : index
    %c0_72 = arith.constant 0 : index
    %33 = vector.load %arg3[%c0_71, %c0_72] : memref<24x1xf32, #tpu.memory_space<vmem>>, vector<24x1xf32>
    %cst_73 = arith.constant 1.000000e-03 : f32
    %34 = vector.broadcast %cst_73 : f32 to vector<24x1xf32>
    %35 = arith.addf %32, %34 : vector<24x1xf32>
    %36 = math.rsqrt %35 : vector<24x1xf32>
    %37 = arith.mulf %33, %36 : vector<24x1xf32>
    %c0_74 = arith.constant 0 : index
    %c0_75 = arith.constant 0 : index
    %38 = vector.load %arg4[%c0_74, %c0_75] : memref<24x1xf32, #tpu.memory_space<vmem>>, vector<24x1xf32>
    %39 = arith.mulf %25, %37 : vector<24x1xf32>
    %40 = arith.subf %38, %39 : vector<24x1xf32>
    %41 = vector.broadcast %37 : vector<24x1xf32> to vector<24x512xf32>
    %42 = arith.mulf %21, %41 : vector<24x512xf32>
    %43 = vector.broadcast %40 : vector<24x1xf32> to vector<24x512xf32>
    %44 = arith.addf %42, %43 : vector<24x512xf32>
    %45 = vector.extract_strided_slice %44 {offsets = [0, 0], sizes = [8, 512], strides = [1, 1]} : vector<24x512xf32> to vector<8x512xf32>
    %46 = vector.extract_strided_slice %44 {offsets = [8, 0], sizes = [8, 512], strides = [1, 1]} : vector<24x512xf32> to vector<8x512xf32>
    %47 = arith.addf %45, %46 : vector<8x512xf32>
    %48 = vector.extract_strided_slice %44 {offsets = [16, 0], sizes = [8, 512], strides = [1, 1]} : vector<24x512xf32> to vector<8x512xf32>
    %49 = arith.addf %47, %48 : vector<8x512xf32>
    %cst_76 = arith.constant 0.000000e+00 : f32
    %50 = vector.broadcast %cst_76 : f32 to vector<8x512xf32>
    %51 = arith.maximumf %49, %50 : vector<8x512xf32>
    %52 = vector.extract_strided_slice %51 {offsets = [0, 0], sizes = [8, 256], strides = [1, 1]} : vector<8x512xf32> to vector<8x256xf32>
    %c0_77 = arith.constant 0 : index
    %c0_78 = arith.constant 0 : index
    %c0_79 = arith.constant 0 : index
    %53 = vector.load %arg5[%c0_77, %c0_78, %c0_79] : memref<2x8x256xf32, #tpu.memory_space<vmem>>, vector<1x8x256xf32>
    %54 = vector.shape_cast %53 : vector<1x8x256xf32> to vector<8x256xf32>
    %55 = vector.shape_cast %52 : vector<8x256xf32> to vector<1x8x256xf32>
    tpu.vector_store %arg5[%c0_77, %c0_78, %c0_79], %55 {strides = array<i32>} : memref<2x8x256xf32, #tpu.memory_space<vmem>>, vector<1x8x256xf32>,
    %56 = vector.extract_strided_slice %51 {offsets = [0, 256], sizes = [8, 256], strides = [1, 1]} : vector<8x512xf32> to vector<8x256xf32>
    %c1_80 = arith.constant 1 : index
    %c0_81 = arith.constant 0 : index
    %c0_82 = arith.constant 0 : index
    %57 = vector.load %arg5[%c1_80, %c0_81, %c0_82] : memref<2x8x256xf32, #tpu.memory_space<vmem>>, vector<1x8x256xf32>
    %58 = vector.shape_cast %57 : vector<1x8x256xf32> to vector<8x256xf32>
    %59 = vector.shape_cast %56 : vector<8x256xf32> to vector<1x8x256xf32>
    tpu.vector_store %arg5[%c1_80, %c0_81, %c0_82], %59 {strides = array<i32>} : memref<2x8x256xf32, #tpu.memory_space<vmem>>, vector<1x8x256xf32>,
    return
  }
  func.func @transform_0(%arg0: i32) -> (i32, i32, i32, i32) {
    %c0_i32 = arith.constant 0 : i32
    %c0_i32_0 = arith.constant 0 : i32
    %c0_i32_1 = arith.constant 0 : i32
    %c0_i32_2 = arith.constant 0 : i32
    %c0_i32_3 = arith.constant 0 : i32
    return %c0_i32, %c0_i32_0, %c0_i32_1, %c0_i32_2 : i32, i32, i32, i32
  }
  func.func @transform_1(%arg0: i32) -> (i32, i32) {
    %c0_i32 = arith.constant 0 : i32
    %c0_i32_0 = arith.constant 0 : i32
    %c0_i32_1 = arith.constant 0 : i32
    return %c0_i32, %c0_i32_0 : i32, i32
  }
  func.func @transform_2(%arg0: i32) -> (i32, i32) {
    %c0_i32 = arith.constant 0 : i32
    %c0_i32_0 = arith.constant 0 : i32
    %c0_i32_1 = arith.constant 0 : i32
    return %c0_i32, %c0_i32_0 : i32, i32
  }
  func.func @transform_3(%arg0: i32) -> (i32, i32) {
    %c0_i32 = arith.constant 0 : i32
    %c0_i32_0 = arith.constant 0 : i32
    %c0_i32_1 = arith.constant 0 : i32
    return %c0_i32, %c0_i32_0 : i32, i32
  }
  func.func @transform_4(%arg0: i32) -> (i32, i32, i32) {
    %c0_i32 = arith.constant 0 : i32
    %c0_i32_0 = arith.constant 0 : i32
    %c0_i32_1 = arith.constant 0 : i32
    %c0_i32_2 = arith.constant 0 : i32
    return %c0_i32, %c0_i32_0, %c0_i32_1 : i32, i32, i32
  }
}

</mosaic_0001>

<llo_original>
// kernel: tpu_custom_call.1
$region0: #{tpu_custom_call.1}
  #allocation0 [shape = 'u32[]', space=smem, size = 0x4, offset = 0x4, fixed_abs, tag = 'smem constant byte address 0x4 - core index']
  #allocation1 [shape = 'u32[72,128]{1,0:T(1,128)}', space=vmem, size = 0x9000, scoped, tag = 'internal scratch']
  #allocation2 [shape = 'f32[2,16,16,36]{3,2,1,0:T(8,128)}', space=vmem, size = 0x40000, scoped, tag = 'scratch operand']
  %s0 = inlined_call_operand.vmem [shape: f32[2,18,18,4], index: 0, kind: input, shape index: {}]
  %s1 = inlined_call_operand.vmem [shape: f32[24,36], index: 1, kind: input, shape index: {}]
  %s2 = inlined_call_operand.vmem [shape: f32[24,1], index: 2, kind: input, shape index: {}]
  %s3 = inlined_call_operand.vmem [shape: f32[24,1], index: 3, kind: input, shape index: {}]
  %s4 = inlined_call_operand.hbm [shape: f32[2,8,256], index: 4, kind: output, shape index: {}]
  %s5 = sld [smem:[#allocation0]]
  $region26: #{tpu_custom_call.1} parent=0
    _
  %s7 = ssub.s32 1, %s5
  %s8 = scalar_select 0, %s7, %s5
  $region1: #{tpu_custom_call.1} parent=0
    #allocation3 [shape = 'u8[16384]{0}', space=vmem, size = 0x4000, scoped, tag = 'output window, operand 0, single buffered']
    #allocation4 [shape = 's32[1]{0}', space=sflag, size = 0x4, scoped, tag = 'scoped memory for tpu_custom_call.1']
    %9 = vsyncpa [#allocation4], 0
    // Predicated region
    $region2: #{tpu_custom_call.1} parent=1 // pred_check
      _
    $region3: #{tpu_custom_call.1} parent=1 // pred_check_branch
      %11 = sbr.rel (0) target = $region5
    $region4: #{tpu_custom_call.1} parent=1 // pred_region
      _
    $region5: #{tpu_custom_call.1} parent=1 // pred_fallthru
      _
    // Predicated region
    $region6: #{tpu_custom_call.1} parent=1 // pred_check
      _
    $region7: #{tpu_custom_call.1} parent=1 // pred_check_branch
      %13 = sbr.rel (0) target = $region9
    $region8: #{tpu_custom_call.1} parent=1 // pred_region
      _
    $region9: #{tpu_custom_call.1} parent=1 // pred_fallthru
      _
    // Predicated region
    $region10: #{tpu_custom_call.1} parent=1 // pred_check
      _
    $region11: #{tpu_custom_call.1} parent=1 // pred_check_branch
      %15 = sbr.rel (0) target = $region13
    $region12: #{tpu_custom_call.1} parent=1 // pred_region
      _
    $region13: #{tpu_custom_call.1} parent=1 // pred_fallthru
      _
    // Predicated region
    $region14: #{tpu_custom_call.1} parent=1 // pred_check
      _
    $region15: #{tpu_custom_call.1} parent=1 // pred_check_branch
      %17 = sbr.rel (0) target = $region17
    $region16: #{tpu_custom_call.1} parent=1 // pred_region
      _
    $region17: #{tpu_custom_call.1} parent=1 // pred_fallthru
      _
    %v18 = vld [vmem:[%s0] sm:$0xff]
    %v19 = vld [vmem:[%s0 + $0x8] sm:$0xff]
    %v20 = vld [vmem:[%s0 + $0x18] sm:$0xff]
    %v21 = vld [vmem:[%s0 + $0x20] sm:$0xff]
    %v22 = vld [vmem:[%s0 + $0x30] sm:$0xff]
    %v23 = vld [vmem:[%s0 + $0x38] sm:$0xff]
    %v24 = vld [vmem:[%s0 + $0x48] sm:$0xff]
    %v25 = vld [vmem:[%s0 + $0x50] sm:$0xff]
    %v26 = vld [vmem:[%s0 + $0x60] sm:$0xff]
    %v27 = vld [vmem:[%s0 + $0x68] sm:$0xff]
    %v28 = vld [vmem:[%s0 + $0x78] sm:$0xff]
    %v29 = vld [vmem:[%s0 + $0x80] sm:$0xff]
    %v30 = vld [vmem:[%s0 + $0x90] sm:$0xff]
    %v31 = vld [vmem:[%s0 + $0x98] sm:$0xff]
    %v32 = vld [vmem:[%s0 + $0xa8] sm:$0xff]
    %v33 = vld [vmem:[%s0 + $0xb0] sm:$0xff]
    %v34 = vld [vmem:[%s0 + $0xc0] sm:$0xff]
    %v35 = vld [vmem:[%s0 + $0xc8] sm:$0xff]
    %v36 = vld [vmem:[%s0 + $0xd8] sm:$0xff]
    %v37 = vld [vmem:[%s0 + $0xe0] sm:$0xff]
    %v38 = vld [vmem:[%s0 + $0xf0] sm:$0xff]
    %v39 = vld [vmem:[%s0 + $0xf8] sm:$0xff]
    %v40 = vld [vmem:[%s0 + $0x108] sm:$0xff]
    %v41 = vld [vmem:[%s0 + $0x110] sm:$0xff]
    %v42 = vld [vmem:[%s0 + $0x120] sm:$0xff]
    %v43 = vld [vmem:[%s0 + $0x128] sm:$0xff]
    %v44 = vld [vmem:[%s0 + $0x138] sm:$0xff]
    %v45 = vld [vmem:[%s0 + $0x140] sm:$0xff]
    %v46 = vld [vmem:[%s0 + $0x150] sm:$0xff]
    %v47 = vld [vmem:[%s0 + $0x158] sm:$0xff]
    %v48 = vld [vmem:[%s0 + $0x168] sm:$0xff]
    %v49 = vld [vmem:[%s0 + $0x170] sm:$0xff]
    %v50 = vld [vmem:[%s0 + $0x1b0] sm:$0xff]
    %v51 = vld [vmem:[%s0 + $0x1b8] sm:$0xff]
    %v52 = vld [vmem:[%s0 + $0x1c8] sm:$0xff]
    %v53 = vld [vmem:[%s0 + $0x1d0] sm:$0xff]
    %v54 = vld [vmem:[%s0 + $0x1e0] sm:$0xff]
    %v55 = vld [vmem:[%s0 + $0x1e8] sm:$0xff]
    %v56 = vld [vmem:[%s0 + $0x1f8] sm:$0xff]
    %v57 = vld [vmem:[%s0 + $0x200] sm:$0xff]
    %v58 = vld [vmem:[%s0 + $0x210] sm:$0xff]
    %v59 = vld [vmem:[%s0 + $0x218] sm:$0xff]
    %v60 = vld [vmem:[%s0 + $0x228] sm:$0xff]
    %v61 = vld [vmem:[%s0 + $0x230] sm:$0xff]
    %v62 = vld [vmem:[%s0 + $0x240] sm:$0xff]
    %v63 = vld [vmem:[%s0 + $0x248] sm:$0xff]
    %v64 = vld [vmem:[%s0 + $0x258] sm:$0xff]
    %v65 = vld [vmem:[%s0 + $0x260] sm:$0xff]
    %v66 = vld [vmem:[%s0 + $0x270] sm:$0xff]
    %v67 = vld [vmem:[%s0 + $0x278] sm:$0xff]
    %v68 = vld [vmem:[%s0 + $0x288] sm:$0xff]
    %v69 = vld [vmem:[%s0 + $0x290] sm:$0xff]
    %v70 = vld [vmem:[%s0 + $0x2a0] sm:$0xff]
    %v71 = vld [vmem:[%s0 + $0x2a8] sm:$0xff]
    %v72 = vld [vmem:[%s0 + $0x2b8] sm:$0xff]
    %v73 = vld [vmem:[%s0 + $0x2c0] sm:$0xff]
    %v74 = vld [vmem:[%s0 + $0x2d0] sm:$0xff]
    %v75 = vld [vmem:[%s0 + $0x2d8] sm:$0xff]
    %v76 = vld [vmem:[%s0 + $0x2e8] sm:$0xff]
    %v77 = vld [vmem:[%s0 + $0x2f0] sm:$0xff]
    %v78 = vld [vmem:[%s0 + $0x300] sm:$0xff]
    %v79 = vld [vmem:[%s0 + $0x308] sm:$0xff]
    %v80 = vld [vmem:[%s0 + $0x318] sm:$0xff]
    %v81 = vld [vmem:[%s0 + $0x320] sm:$0xff]
    %vm82 = vcmask 31744
    %83 = vst.msk [vmem:[#allocation2] sm:$0xff] %vm82, %v18
    %84 = vst.msk [vmem:[#allocation2 + $0x8] sm:$0xff] %vm82, %v19
    %85 = vst.msk [vmem:[#allocation2 + $0x10] sm:$0xff] %vm82, %v20
    %86 = vst.msk [vmem:[#allocation2 + $0x18] sm:$0xff] %vm82, %v21
    %87 = vst.msk [vmem:[#allocation2 + $0x20] sm:$0xff] %vm82, %v22
    %88 = vst.msk [vmem:[#allocation2 + $0x28] sm:$0xff] %vm82, %v23
    %89 = vst.msk [vmem:[#allocation2 + $0x30] sm:$0xff] %vm82, %v24
    %90 = vst.msk [vmem:[#allocation2 + $0x38] sm:$0xff] %vm82, %v25
    %91 = vst.msk [vmem:[#allocation2 + $0x40] sm:$0xff] %vm82, %v26
    %92 = vst.msk [vmem:[#allocation2 + $0x48] sm:$0xff] %vm82, %v27
    %93 = vst.msk [vmem:[#allocation2 + $0x50] sm:$0xff] %vm82, %v28
    %94 = vst.msk [vmem:[#allocation2 + $0x58] sm:$0xff] %vm82, %v29
    %95 = vst.msk [vmem:[#allocation2 + $0x60] sm:$0xff] %vm82, %v30
    %96 = vst.msk [vmem:[#allocation2 + $0x68] sm:$0xff] %vm82, %v31
    %97 = vst.msk [vmem:[#allocation2 + $0x70] sm:$0xff] %vm82, %v32
    %98 = vst.msk [vmem:[#allocation2 + $0x78] sm:$0xff] %vm82, %v33
    %99 = vst.msk [vmem:[#allocation2 + $0x80] sm:$0xff] %vm82, %v34
    %100 = vst.msk [vmem:[#allocation2 + $0x88] sm:$0xff] %vm82, %v35
    %101 = vst.msk [vmem:[#allocation2 + $0x90] sm:$0xff] %vm82, %v36
    %102 = vst.msk [vmem:[#allocation2 + $0x98] sm:$0xff] %vm82, %v37
    %103 = vst.msk [vmem:[#allocation2 + $0xa0] sm:$0xff] %vm82, %v38
    %104 = vst.msk [vmem:[#allocation2 + $0xa8] sm:$0xff] %vm82, %v39
    %105 = vst.msk [vmem:[#allocation2 + $0xb0] sm:$0xff] %vm82, %v40
    %106 = vst.msk [vmem:[#allocation2 + $0xb8] sm:$0xff] %vm82, %v41
    %107 = vst.msk [vmem:[#allocation2 + $0xc0] sm:$0xff] %vm82, %v42
    %108 = vst.msk [vmem:[#allocation2 + $0xc8] sm:$0xff] %vm82, %v43
    %109 = vst.msk [vmem:[#allocation2 + $0xd0] sm:$0xff] %vm82, %v44
    %110 = vst.msk [vmem:[#allocation2 + $0xd8] sm:$0xff] %vm82, %v45
    %111 = vst.msk [vmem:[#allocation2 + $0xe0] sm:$0xff] %vm82, %v46
    %112 = vst.msk [vmem:[#allocation2 + $0xe8] sm:$0xff] %vm82, %v47
    %113 = vst.msk [vmem:[#allocation2 + $0xf0] sm:$0xff] %vm82, %v48
    %114 = vst.msk [vmem:[#allocation2 + $0xf8] sm:$0xff] %vm82, %v49
    %115 = vst.msk [vmem:[#allocation2 + $0x100] sm:$0xff] %vm82, %v50
    %116 = vst.msk [vmem:[#allocation2 + $0x108] sm:$0xff] %vm82, %v51
    %117 = vst.msk [vmem:[#allocation2 + $0x110] sm:$0xff] %vm82, %v52
    %118 = vst.msk [vmem:[#allocation2 + $0x118] sm:$0xff] %vm82, %v53
    %119 = vst.msk [vmem:[#allocation2 + $0x120] sm:$0xff] %vm82, %v54
    %120 = vst.msk [vmem:[#allocation2 + $0x128] sm:$0xff] %vm82, %v55
    %121 = vst.msk [vmem:[#allocation2 + $0x130] sm:$0xff] %vm82, %v56
    %122 = vst.msk [vmem:[#allocation2 + $0x138] sm:$0xff] %vm82, %v57
    %123 = vst.msk [vmem:[#allocation2 + $0x140] sm:$0xff] %vm82, %v58
    %124 = vst.msk [vmem:[#allocation2 + $0x148] sm:$0xff] %vm82, %v59
    %125 = vst.msk [vmem:[#allocation2 + $0x150] sm:$0xff] %vm82, %v60
    %126 = vst.msk [vmem:[#allocation2 + $0x158] sm:$0xff] %vm82, %v61
    %127 = vst.msk [vmem:[#allocation2 + $0x160] sm:$0xff] %vm82, %v62
    %128 = vst.msk [vmem:[#allocation2 + $0x168] sm:$0xff] %vm82, %v63
    %129 = vst.msk [vmem:[#allocation2 + $0x170] sm:$0xff] %vm82, %v64
    %130 = vst.msk [vmem:[#allocation2 + $0x178] sm:$0xff] %vm82, %v65
    %131 = vst.msk [vmem:[#allocation2 + $0x180] sm:$0xff] %vm82, %v66
    %132 = vst.msk [vmem:[#allocation2 + $0x188] sm:$0xff] %vm82, %v67
    %133 = vst.msk [vmem:[#allocation2 + $0x190] sm:$0xff] %vm82, %v68
    %134 = vst.msk [vmem:[#allocation2 + $0x198] sm:$0xff] %vm82, %v69
    %135 = vst.msk [vmem:[#allocation2 + $0x1a0] sm:$0xff] %vm82, %v70
    %136 = vst.msk [vmem:[#allocation2 + $0x1a8] sm:$0xff] %vm82, %v71
    %137 = vst.msk [vmem:[#allocation2 + $0x1b0] sm:$0xff] %vm82, %v72
    %138 = vst.msk [vmem:[#allocation2 + $0x1b8] sm:$0xff] %vm82, %v73
    %139 = vst.msk [vmem:[#allocation2 + $0x1c0] sm:$0xff] %vm82, %v74
    %140 = vst.msk [vmem:[#allocation2 + $0x1c8] sm:$0xff] %vm82, %v75
    %141 = vst.msk [vmem:[#allocation2 + $0x1d0] sm:$0xff] %vm82, %v76
    %142 = vst.msk [vmem:[#allocation2 + $0x1d8] sm:$0xff] %vm82, %v77
    %143 = vst.msk [vmem:[#allocation2 + $0x1e0] sm:$0xff] %vm82, %v78
    %144 = vst.msk [vmem:[#allocation2 + $0x1e8] sm:$0xff] %vm82, %v79
    %145 = vst.msk [vmem:[#allocation2 + $0x1f0] sm:$0xff] %vm82, %v80
    %146 = vst.msk [vmem:[#allocation2 + $0x1f8] sm:$0xff] %vm82, %v81
    %v147 = vld [vmem:[%s0 + $0x1] sm:$0xff]
    %v148 = vld [vmem:[%s0 + $0x9] sm:$0xff]
    %v149 = vld [vmem:[%s0 + $0x19] sm:$0xff]
    %v150 = vld [vmem:[%s0 + $0x21] sm:$0xff]
    %v151 = vld [vmem:[%s0 + $0x31] sm:$0xff]
    %v152 = vld [vmem:[%s0 + $0x39] sm:$0xff]
    %v153 = vld [vmem:[%s0 + $0x49] sm:$0xff]
    %v154 = vld [vmem:[%s0 + $0x51] sm:$0xff]
    %v155 = vld [vmem:[%s0 + $0x61] sm:$0xff]
    %v156 = vld [vmem:[%s0 + $0x69] sm:$0xff]
    %v157 = vld [vmem:[%s0 + $0x79] sm:$0xff]
    %v158 = vld [vmem:[%s0 + $0x81] sm:$0xff]
    %v159 = vld [vmem:[%s0 + $0x91] sm:$0xff]
    %v160 = vld [vmem:[%s0 + $0x99] sm:$0xff]
    %v161 = vld [vmem:[%s0 + $0xa9] sm:$0xff]
    %v162 = vld [vmem:[%s0 + $0xb1] sm:$0xff]
    %v163 = vld [vmem:[%s0 + $0xc1] sm:$0xff]
    %v164 = vld [vmem:[%s0 + $0xc9] sm:$0xff]
    %v165 = vld [vmem:[%s0 + $0xd9] sm:$0xff]
    %v166 = vld [vmem:[%s0 + $0xe1] sm:$0xff]
    %v167 = vld [vmem:[%s0 + $0xf1] sm:$0xff]
    %v168 = vld [vmem:[%s0 + $0xf9] sm:$0xff]
    %v169 = vld [vmem:[%s0 + $0x109] sm:$0xff]
    %v170 = vld [vmem:[%s0 + $0x111] sm:$0xff]
    %v171 = vld [vmem:[%s0 + $0x121] sm:$0xff]
    %v172 = vld [vmem:[%s0 + $0x129] sm:$0xff]
    %v173 = vld [vmem:[%s0 + $0x139] sm:$0xff]
    %v174 = vld [vmem:[%s0 + $0x141] sm:$0xff]
    %v175 = vld [vmem:[%s0 + $0x151] sm:$0xff]
    %v176 = vld [vmem:[%s0 + $0x159] sm:$0xff]
    %v177 = vld [vmem:[%s0 + $0x169] sm:$0xff]
    %v178 = vld [vmem:[%s0 + $0x171] sm:$0xff]
    %v179 = vld [vmem:[%s0 + $0x1b1] sm:$0xff]
    %v180 = vld [vmem:[%s0 + $0x1b9] sm:$0xff]
    %v181 = vld [vmem:[%s0 + $0x1c9] sm:$0xff]
    %v182 = vld [vmem:[%s0 + $0x1d1] sm:$0xff]
    %v183 = vld [vmem:[%s0 + $0x1e1] sm:$0xff]
    %v184 = vld [vmem:[%s0 + $0x1e9] sm:$0xff]
    %v185 = vld [vmem:[%s0 + $0x1f9] sm:$0xff]
    %v186 = vld [vmem:[%s0 + $0x201] sm:$0xff]
    %v187 = vld [vmem:[%s0 + $0x211] sm:$0xff]
    %v188 = vld [vmem:[%s0 + $0x219] sm:$0xff]
    %v189 = vld [vmem:[%s0 + $0x229] sm:$0xff]
    %v190 = vld [vmem:[%s0 + $0x231] sm:$0xff]
    %v191 = vld [vmem:[%s0 + $0x241] sm:$0xff]
    %v192 = vld [vmem:[%s0 + $0x249] sm:$0xff]
    %v193 = vld [vmem:[%s0 + $0x259] sm:$0xff]
    %v194 = vld [vmem:[%s0 + $0x261] sm:$0xff]
    %v195 = vld [vmem:[%s0 + $0x271] sm:$0xff]
    %v196 = vld [vmem:[%s0 + $0x279] sm:$0xff]
    %v197 = vld [vmem:[%s0 + $0x289] sm:$0xff]
    %v198 = vld [vmem:[%s0 + $0x291] sm:$0xff]
    %v199 = vld [vmem:[%s0 + $0x2a1] sm:$0xff]
    %v200 = vld [vmem:[%s0 + $0x2a9] sm:$0xff]
    %v201 = vld [vmem:[%s0 + $0x2b9] sm:$0xff]
    %v202 = vld [vmem:[%s0 + $0x2c1] sm:$0xff]
    %v203 = vld [vmem:[%s0 + $0x2d1] sm:$0xff]
    %v204 = vld [vmem:[%s0 + $0x2d9] sm:$0xff]
    %v205 = vld [vmem:[%s0 + $0x2e9] sm:$0xff]
    %v206 = vld [vmem:[%s0 + $0x2f1] sm:$0xff]
    %v207 = vld [vmem:[%s0 + $0x301] sm:$0xff]
    %v208 = vld [vmem:[%s0 + $0x309] sm:$0xff]
    %v209 = vld [vmem:[%s0 + $0x319] sm:$0xff]
    %v210 = vld [vmem:[%s0 + $0x321] sm:$0xff]
    %275 = vrot.lane.b32.xlu0 %v147, 4
    %v276 = vpop.permute.xlu0 %275
    %277 = vrot.lane.b32.xlu0 %v148, 4
    %v278 = vpop.permute.xlu0 %277
    %279 = vrot.lane.b32.xlu0 %v149, 4
    %v280 = vpop.permute.xlu0 %279
    %281 = vrot.lane.b32.xlu0 %v150, 4
    %v282 = vpop.permute.xlu0 %281
    %283 = vrot.lane.b32.xlu0 %v151, 4
    %v284 = vpop.permute.xlu0 %283
    %285 = vrot.lane.b32.xlu0 %v152, 4
    %v286 = vpop.permute.xlu0 %285
    %287 = vrot.lane.b32.xlu0 %v153, 4
    %v288 = vpop.permute.xlu0 %287
    %289 = vrot.lane.b32.xlu0 %v154, 4
    %v290 = vpop.permute.xlu0 %289
    %291 = vrot.lane.b32.xlu0 %v155, 4
    %v292 = vpop.permute.xlu0 %291
    %293 = vrot.lane.b32.xlu0 %v156, 4
    %v294 = vpop.permute.xlu0 %293
    %295 = vrot.lane.b32.xlu0 %v157, 4
    %v296 = vpop.permute.xlu0 %295
    %297 = vrot.lane.b32.xlu0 %v158, 4
    %v298 = vpop.permute.xlu0 %297
    %299 = vrot.lane.b32.xlu0 %v159, 4
    %v300 = vpop.permute.xlu0 %299
    %301 = vrot.lane.b32.xlu0 %v160, 4
    %v302 = vpop.permute.xlu0 %301
    %303 = vrot.lane.b32.xlu0 %v161, 4
    %v304 = vpop.permute.xlu0 %303
    %305 = vrot.lane.b32.xlu0 %v162, 4
    %v306 = vpop.permute.xlu0 %305
    %307 = vrot.lane.b32.xlu0 %v163, 4
    %v308 = vpop.permute.xlu0 %307
    %309 = vrot.lane.b32.xlu0 %v164, 4
    %v310 = vpop.permute.xlu0 %309
    %311 = vrot.lane.b32.xlu0 %v165, 4
    %v312 = vpop.permute.xlu0 %311
    %313 = vrot.lane.b32.xlu0 %v166, 4
    %v314 = vpop.permute.xlu0 %313
    %315 = vrot.lane.b32.xlu0 %v167, 4
    %v316 = vpop.permute.xlu0 %315
    %317 = vrot.lane.b32.xlu0 %v168, 4
    %v318 = vpop.permute.xlu0 %317
    %319 = vrot.lane.b32.xlu0 %v169, 4
    %v320 = vpop.permute.xlu0 %319
    %321 = vrot.lane.b32.xlu0 %v170, 4
    %v322 = vpop.permute.xlu0 %321
    %323 = vrot.lane.b32.xlu0 %v171, 4
    %v324 = vpop.permute.xlu0 %323
    %325 = vrot.lane.b32.xlu0 %v172, 4
    %v326 = vpop.permute.xlu0 %325
    %327 = vrot.lane.b32.xlu0 %v173, 4
    %v328 = vpop.permute.xlu0 %327
    %329 = vrot.lane.b32.xlu0 %v174, 4
    %v330 = vpop.permute.xlu0 %329
    %331 = vrot.lane.b32.xlu0 %v175, 4
    %v332 = vpop.permute.xlu0 %331
    %333 = vrot.lane.b32.xlu0 %v176, 4
    %v334 = vpop.permute.xlu0 %333
    %335 = vrot.lane.b32.xlu0 %v177, 4
    %v336 = vpop.permute.xlu0 %335
    %337 = vrot.lane.b32.xlu0 %v178, 4
    %v338 = vpop.permute.xlu0 %337
    %339 = vrot.lane.b32.xlu0 %v179, 4
    %v340 = vpop.permute.xlu0 %339
    %341 = vrot.lane.b32.xlu0 %v180, 4
    %v342 = vpop.permute.xlu0 %341
    %343 = vrot.lane.b32.xlu0 %v181, 4
    %v344 = vpop.permute.xlu0 %343
    %345 = vrot.lane.b32.xlu0 %v182, 4
    %v346 = vpop.permute.xlu0 %345
    %347 = vrot.lane.b32.xlu0 %v183, 4
    %v348 = vpop.permute.xlu0 %347
    %349 = vrot.lane.b32.xlu0 %v184, 4
    %v350 = vpop.permute.xlu0 %349
    %351 = vrot.lane.b32.xlu0 %v185, 4
    %v352 = vpop.permute.xlu0 %351
    %353 = vrot.lane.b32.xlu0 %v186, 4
    %v354 = vpop.permute.xlu0 %353
    %355 = vrot.lane.b32.xlu0 %v187, 4
    %v356 = vpop.permute.xlu0 %355
    %357 = vrot.lane.b32.xlu0 %v188, 4
    %v358 = vpop.permute.xlu0 %357
    %359 = vrot.lane.b32.xlu0 %v189, 4
    %v360 = vpop.permute.xlu0 %359
    %361 = vrot.lane.b32.xlu0 %v190, 4
    %v362 = vpop.permute.xlu0 %361
    %363 = vrot.lane.b32.xlu0 %v191, 4
    %v364 = vpop.permute.xlu0 %363
    %365 = vrot.lane.b32.xlu0 %v192, 4
    %v366 = vpop.permute.xlu0 %365
    %367 = vrot.lane.b32.xlu0 %v193, 4
    %v368 = vpop.permute.xlu0 %367
    %369 = vrot.lane.b32.xlu0 %v194, 4
    %v370 = vpop.permute.xlu0 %369
    %371 = vrot.lane.b32.xlu0 %v195, 4
    %v372 = vpop.permute.xlu0 %371
    %373 = vrot.lane.b32.xlu0 %v196, 4
    %v374 = vpop.permute.xlu0 %373
    %375 = vrot.lane.b32.xlu0 %v197, 4
    %v376 = vpop.permute.xlu0 %375
    %377 = vrot.lane.b32.xlu0 %v198, 4
    %v378 = vpop.permute.xlu0 %377
    %379 = vrot.lane.b32.xlu0 %v199, 4
    %v380 = vpop.permute.xlu0 %379
    %381 = vrot.lane.b32.xlu0 %v200, 4
    %v382 = vpop.permute.xlu0 %381
    %383 = vrot.lane.b32.xlu0 %v201, 4
    %v384 = vpop.permute.xlu0 %383
    %385 = vrot.lane.b32.xlu0 %v202, 4
    %v386 = vpop.permute.xlu0 %385
    %387 = vrot.lane.b32.xlu0 %v203, 4
    %v388 = vpop.permute.xlu0 %387
    %389 = vrot.lane.b32.xlu0 %v204, 4
    %v390 = vpop.permute.xlu0 %389
    %391 = vrot.lane.b32.xlu0 %v205, 4
    %v392 = vpop.permute.xlu0 %391
    %393 = vrot.lane.b32.xlu0 %v206, 4
    %v394 = vpop.permute.xlu0 %393
    %395 = vrot.lane.b32.xlu0 %v207, 4
    %v396 = vpop.permute.xlu0 %395
    %397 = vrot.lane.b32.xlu0 %v208, 4
    %v398 = vpop.permute.xlu0 %397
    %399 = vrot.lane.b32.xlu0 %v209, 4
    %v400 = vpop.permute.xlu0 %399
    %401 = vrot.lane.b32.xlu0 %v210, 4
    %v402 = vpop.permute.xlu0 %401
    %vm467 = vcmask 64544
    %468 = vst.msk [vmem:[#allocation2] sm:$0xff] %vm467, %v276
    %469 = vst.msk [vmem:[#allocation2 + $0x8] sm:$0xff] %vm467, %v278
    %470 = vst.msk [vmem:[#allocation2 + $0x10] sm:$0xff] %vm467, %v280
    %471 = vst.msk [vmem:[#allocation2 + $0x18] sm:$0xff] %vm467, %v282
    %472 = vst.msk [vmem:[#allocation2 + $0x20] sm:$0xff] %vm467, %v284
    %473 = vst.msk [vmem:[#allocation2 + $0x28] sm:$0xff] %vm467, %v286
    %474 = vst.msk [vmem:[#allocation2 + $0x30] sm:$0xff] %vm467, %v288
    %475 = vst.msk [vmem:[#allocation2 + $0x38] sm:$0xff] %vm467, %v290
    %476 = vst.msk [vmem:[#allocation2 + $0x40] sm:$0xff] %vm467, %v292
    %477 = vst.msk [vmem:[#allocation2 + $0x48] sm:$0xff] %vm467, %v294
    %478 = vst.msk [vmem:[#allocation2 + $0x50] sm:$0xff] %vm467, %v296
    %479 = vst.msk [vmem:[#allocation2 + $0x58] sm:$0xff] %vm467, %v298
    %480 = vst.msk [vmem:[#allocation2 + $0x60] sm:$0xff] %vm467, %v300
    %481 = vst.msk [vmem:[#allocation2 + $0x68] sm:$0xff] %vm467, %v302
    %482 = vst.msk [vmem:[#allocation2 + $0x70] sm:$0xff] %vm467, %v304
    %483 = vst.msk [vmem:[#allocation2 + $0x78] sm:$0xff] %vm467, %v306
    %484 = vst.msk [vmem:[#allocation2 + $0x80] sm:$0xff] %vm467, %v308
    %485 = vst.msk [vmem:[#allocation2 + $0x88] sm:$0xff] %vm467, %v310
    %486 = vst.msk [vmem:[#allocation2 + $0x90] sm:$0xff] %vm467, %v312
    %487 = vst.msk [vmem:[#allocation2 + $0x98] sm:$0xff] %vm467, %v314
    %488 = vst.msk [vmem:[#allocation2 + $0xa0] sm:$0xff] %vm467, %v316
    %489 = vst.msk [vmem:[#allocation2 + $0xa8] sm:$0xff] %vm467, %v318
    %490 = vst.msk [vmem:[#allocation2 + $0xb0] sm:$0xff] %vm467, %v320
    %491 = vst.msk [vmem:[#allocation2 + $0xb8] sm:$0xff] %vm467, %v322
    %492 = vst.msk [vmem:[#allocation2 + $0xc0] sm:$0xff] %vm467, %v324
    %493 = vst.msk [vmem:[#allocation2 + $0xc8] sm:$0xff] %vm467, %v326
    %494 = vst.msk [vmem:[#allocation2 + $0xd0] sm:$0xff] %vm467, %v328
    %495 = vst.msk [vmem:[#allocation2 + $0xd8] sm:$0xff] %vm467, %v330
    %496 = vst.msk [vmem:[#allocation2 + $0xe0] sm:$0xff] %vm467, %v332
    %497 = vst.msk [vmem:[#allocation2 + $0xe8] sm:$0xff] %vm467, %v334
    %498 = vst.msk [vmem:[#allocation2 + $0xf0] sm:$0xff] %vm467, %v336
    %499 = vst.msk [vmem:[#allocation2 + $0xf8] sm:$0xff] %vm467, %v338
    %500 = vst.msk [vmem:[#allocation2 + $0x100] sm:$0xff] %vm467, %v340
    %501 = vst.msk [vmem:[#allocation2 + $0x108] sm:$0xff] %vm467, %v342
    %502 = vst.msk [vmem:[#allocation2 + $0x110] sm:$0xff] %vm467, %v344
    %503 = vst.msk [vmem:[#allocation2 + $0x118] sm:$0xff] %vm467, %v346
    %504 = vst.msk [vmem:[#allocation2 + $0x120] sm:$0xff] %vm467, %v348
    %505 = vst.msk [vmem:[#allocation2 + $0x128] sm:$0xff] %vm467, %v350
    %506 = vst.msk [vmem:[#allocation2 + $0x130] sm:$0xff] %vm467, %v352
    %507 = vst.msk [vmem:[#allocation2 + $0x138] sm:$0xff] %vm467, %v354
    %508 = vst.msk [vmem:[#allocation2 + $0x140] sm:$0xff] %vm467, %v356
    %509 = vst.msk [vmem:[#allocation2 + $0x148] sm:$0xff] %vm467, %v358
    %510 = vst.msk [vmem:[#allocation2 + $0x150] sm:$0xff] %vm467, %v360
    %511 = vst.msk [vmem:[#allocation2 + $0x158] sm:$0xff] %vm467, %v362
    %512 = vst.msk [vmem:[#allocation2 + $0x160] sm:$0xff] %vm467, %v364
    %513 = vst.msk [vmem:[#allocation2 + $0x168] sm:$0xff] %vm467, %v366
    %514 = vst.msk [vmem:[#allocation2 + $0x170] sm:$0xff] %vm467, %v368
    %515 = vst.msk [vmem:[#allocation2 + $0x178] sm:$0xff] %vm467, %v370
    %516 = vst.msk [vmem:[#allocation2 + $0x180] sm:$0xff] %vm467, %v372
    %517 = vst.msk [vmem:[#allocation2 + $0x188] sm:$0xff] %vm467, %v374
    %518 = vst.msk [vmem:[#allocation2 + $0x190] sm:$0xff] %vm467, %v376
    %519 = vst.msk [vmem:[#allocation2 + $0x198] sm:$0xff] %vm467, %v378
    %520 = vst.msk [vmem:[#allocation2 + $0x1a0] sm:$0xff] %vm467, %v380
    %521 = vst.msk [vmem:[#allocation2 + $0x1a8] sm:$0xff] %vm467, %v382
    %522 = vst.msk [vmem:[#allocation2 + $0x1b0] sm:$0xff] %vm467, %v384
    %523 = vst.msk [vmem:[#allocation2 + $0x1b8] sm:$0xff] %vm467, %v386
    %524 = vst.msk [vmem:[#allocation2 + $0x1c0] sm:$0xff] %vm467, %v388
    %525 = vst.msk [vmem:[#allocation2 + $0x1c8] sm:$0xff] %vm467, %v390
    %526 = vst.msk [vmem:[#allocation2 + $0x1d0] sm:$0xff] %vm467, %v392
    %527 = vst.msk [vmem:[#allocation2 + $0x1d8] sm:$0xff] %vm467, %v394
    %528 = vst.msk [vmem:[#allocation2 + $0x1e0] sm:$0xff] %vm467, %v396
    %529 = vst.msk [vmem:[#allocation2 + $0x1e8] sm:$0xff] %vm467, %v398
    %530 = vst.msk [vmem:[#allocation2 + $0x1f0] sm:$0xff] %vm467, %v400
    %531 = vst.msk [vmem:[#allocation2 + $0x1f8] sm:$0xff] %vm467, %v402
    %v532 = vld [vmem:[%s0 + $0x2] sm:$0xff]
    %v533 = vld [vmem:[%s0 + $0xa] sm:$0xff]
    %v534 = vld [vmem:[%s0 + $0x1a] sm:$0xff]
    %v535 = vld [vmem:[%s0 + $0x22] sm:$0xff]
    %v536 = vld [vmem:[%s0 + $0x32] sm:$0xff]
    %v537 = vld [vmem:[%s0 + $0x3a] sm:$0xff]
    %v538 = vld [vmem:[%s0 + $0x4a] sm:$0xff]
    %v539 = vld [vmem:[%s0 + $0x52] sm:$0xff]
    %v540 = vld [vmem:[%s0 + $0x62] sm:$0xff]
    %v541 = vld [vmem:[%s0 + $0x6a] sm:$0xff]
    %v542 = vld [vmem:[%s0 + $0x7a] sm:$0xff]
    %v543 = vld [vmem:[%s0 + $0x82] sm:$0xff]
    %v544 = vld [vmem:[%s0 + $0x92] sm:$0xff]
    %v545 = vld [vmem:[%s0 + $0x9a] sm:$0xff]
    %v546 = vld [vmem:[%s0 + $0xaa] sm:$0xff]
    %v547 = vld [vmem:[%s0 + $0xb2] sm:$0xff]
    %v548 = vld [vmem:[%s0 + $0xc2] sm:$0xff]
    %v549 = vld [vmem:[%s0 + $0xca] sm:$0xff]
    %v550 = vld [vmem:[%s0 + $0xda] sm:$0xff]
    %v551 = vld [vmem:[%s0 + $0xe2] sm:$0xff]
    %v552 = vld [vmem:[%s0 + $0xf2] sm:$0xff]
    %v553 = vld [vmem:[%s0 + $0xfa] sm:$0xff]
    %v554 = vld [vmem:[%s0 + $0x10a] sm:$0xff]
    %v555 = vld [vmem:[%s0 + $0x112] sm:$0xff]
    %v556 = vld [vmem:[%s0 + $0x122] sm:$0xff]
    %v557 = vld [vmem:[%s0 + $0x12a] sm:$0xff]
    %v558 = vld [vmem:[%s0 + $0x13a] sm:$0xff]
    %v559 = vld [vmem:[%s0 + $0x142] sm:$0xff]
    %v560 = vld [vmem:[%s0 + $0x152] sm:$0xff]
    %v561 = vld [vmem:[%s0 + $0x15a] sm:$0xff]
    %v562 = vld [vmem:[%s0 + $0x16a] sm:$0xff]
    %v563 = vld [vmem:[%s0 + $0x172] sm:$0xff]
    %v564 = vld [vmem:[%s0 + $0x1b2] sm:$0xff]
    %v565 = vld [vmem:[%s0 + $0x1ba] sm:$0xff]
    %v566 = vld [vmem:[%s0 + $0x1ca] sm:$0xff]
    %v567 = vld [vmem:[%s0 + $0x1d2] sm:$0xff]
    %v568 = vld [vmem:[%s0 + $0x1e2] sm:$0xff]
    %v569 = vld [vmem:[%s0 + $0x1ea] sm:$0xff]
    %v570 = vld [vmem:[%s0 + $0x1fa] sm:$0xff]
    %v571 = vld [vmem:[%s0 + $0x202] sm:$0xff]
    %v572 = vld [vmem:[%s0 + $0x212] sm:$0xff]
    %v573 = vld [vmem:[%s0 + $0x21a] sm:$0xff]
    %v574 = vld [vmem:[%s0 + $0x22a] sm:$0xff]
    %v575 = vld [vmem:[%s0 + $0x232] sm:$0xff]
    %v576 = vld [vmem:[%s0 + $0x242] sm:$0xff]
    %v577 = vld [vmem:[%s0 + $0x24a] sm:$0xff]
    %v578 = vld [vmem:[%s0 + $0x25a] sm:$0xff]
    %v579 = vld [vmem:[%s0 + $0x262] sm:$0xff]
    %v580 = vld [vmem:[%s0 + $0x272] sm:$0xff]
    %v581 = vld [vmem:[%s0 + $0x27a] sm:$0xff]
    %v582 = vld [vmem:[%s0 + $0x28a] sm:$0xff]
    %v583 = vld [vmem:[%s0 + $0x292] sm:$0xff]
    %v584 = vld [vmem:[%s0 + $0x2a2] sm:$0xff]
    %v585 = vld [vmem:[%s0 + $0x2aa] sm:$0xff]
    %v586 = vld [vmem:[%s0 + $0x2ba] sm:$0xff]
    %v587 = vld [vmem:[%s0 + $0x2c2] sm:$0xff]
    %v588 = vld [vmem:[%s0 + $0x2d2] sm:$0xff]
    %v589 = vld [vmem:[%s0 + $0x2da] sm:$0xff]
    %v590 = vld [vmem:[%s0 + $0x2ea] sm:$0xff]
    %v591 = vld [vmem:[%s0 + $0x2f2] sm:$0xff]
    %v592 = vld [vmem:[%s0 + $0x302] sm:$0xff]
    %v593 = vld [vmem:[%s0 + $0x30a] sm:$0xff]
    %v594 = vld [vmem:[%s0 + $0x31a] sm:$0xff]
    %v595 = vld [vmem:[%s0 + $0x322] sm:$0xff]
    %660 = vrot.lane.b32.xlu0 %v532, 8
    %v661 = vpop.permute.xlu0 %660
    %662 = vrot.lane.b32.xlu0 %v533, 8
    %v663 = vpop.permute.xlu0 %662
    %664 = vrot.lane.b32.xlu0 %v534, 8
    %v665 = vpop.permute.xlu0 %664
    %666 = vrot.lane.b32.xlu0 %v535, 8
    %v667 = vpop.permute.xlu0 %666
    %668 = vrot.lane.b32.xlu0 %v536, 8
    %v669 = vpop.permute.xlu0 %668
    %670 = vrot.lane.b32.xlu0 %v537, 8
    %v671 = vpop.permute.xlu0 %670
    %672 = vrot.lane.b32.xlu0 %v538, 8
    %v673 = vpop.permute.xlu0 %672
    %674 = vrot.lane.b32.xlu0 %v539, 8
    %v675 = vpop.permute.xlu0 %674
    %676 = vrot.lane.b32.xlu0 %v540, 8
    %v677 = vpop.permute.xlu0 %676
    %678 = vrot.lane.b32.xlu0 %v541, 8
    %v679 = vpop.permute.xlu0 %678
    %680 = vrot.lane.b32.xlu0 %v542, 8
    %v681 = vpop.permute.xlu0 %680
    %682 = vrot.lane.b32.xlu0 %v543, 8
    %v683 = vpop.permute.xlu0 %682
    %684 = vrot.lane.b32.xlu0 %v544, 8
    %v685 = vpop.permute.xlu0 %684
    %686 = vrot.lane.b32.xlu0 %v545, 8
    %v687 = vpop.permute.xlu0 %686
    %688 = vrot.lane.b32.xlu0 %v546, 8
    %v689 = vpop.permute.xlu0 %688
    %690 = vrot.lane.b32.xlu0 %v547, 8
    %v691 = vpop.permute.xlu0 %690
    %692 = vrot.lane.b32.xlu0 %v548, 8
    %v693 = vpop.permute.xlu0 %692
    %694 = vrot.lane.b32.xlu0 %v549, 8
    %v695 = vpop.permute.xlu0 %694
    %696 = vrot.lane.b32.xlu0 %v550, 8
    %v697 = vpop.permute.xlu0 %696
    %698 = vrot.lane.b32.xlu0 %v551, 8
    %v699 = vpop.permute.xlu0 %698
    %700 = vrot.lane.b32.xlu0 %v552, 8
    %v701 = vpop.permute.xlu0 %700
    %702 = vrot.lane.b32.xlu0 %v553, 8
    %v703 = vpop.permute.xlu0 %702
    %704 = vrot.lane.b32.xlu0 %v554, 8
    %v705 = vpop.permute.xlu0 %704
    %706 = vrot.lane.b32.xlu0 %v555, 8
    %v707 = vpop.permute.xlu0 %706
    %708 = vrot.lane.b32.xlu0 %v556, 8
    %v709 = vpop.permute.xlu0 %708
    %710 = vrot.lane.b32.xlu0 %v557, 8
    %v711 = vpop.permute.xlu0 %710
    %712 = vrot.lane.b32.xlu0 %v558, 8
    %v713 = vpop.permute.xlu0 %712
    %714 = vrot.lane.b32.xlu0 %v559, 8
    %v715 = vpop.permute.xlu0 %714
    %716 = vrot.lane.b32.xlu0 %v560, 8
    %v717 = vpop.permute.xlu0 %716
    %718 = vrot.lane.b32.xlu0 %v561, 8
    %v719 = vpop.permute.xlu0 %718
    %720 = vrot.lane.b32.xlu0 %v562, 8
    %v721 = vpop.permute.xlu0 %720
    %722 = vrot.lane.b32.xlu0 %v563, 8
    %v723 = vpop.permute.xlu0 %722
    %724 = vrot.lane.b32.xlu0 %v564, 8
    %v725 = vpop.permute.xlu0 %724
    %726 = vrot.lane.b32.xlu0 %v565, 8
    %v727 = vpop.permute.xlu0 %726
    %728 = vrot.lane.b32.xlu0 %v566, 8
    %v729 = vpop.permute.xlu0 %728
    %730 = vrot.lane.b32.xlu0 %v567, 8
    %v731 = vpop.permute.xlu0 %730
    %732 = vrot.lane.b32.xlu0 %v568, 8
    %v733 = vpop.permute.xlu0 %732
    %734 = vrot.lane.b32.xlu0 %v569, 8
    %v735 = vpop.permute.xlu0 %734
    %736 = vrot.lane.b32.xlu0 %v570, 8
    %v737 = vpop.permute.xlu0 %736
    %738 = vrot.lane.b32.xlu0 %v571, 8
    %v739 = vpop.permute.xlu0 %738
    %740 = vrot.lane.b32.xlu0 %v572, 8
    %v741 = vpop.permute.xlu0 %740
    %742 = vrot.lane.b32.xlu0 %v573, 8
    %v743 = vpop.permute.xlu0 %742
    %744 = vrot.lane.b32.xlu0 %v574, 8
    %v745 = vpop.permute.xlu0 %744
    %746 = vrot.lane.b32.xlu0 %v575, 8
    %v747 = vpop.permute.xlu0 %746
    %748 = vrot.lane.b32.xlu0 %v576, 8
    %v749 = vpop.permute.xlu0 %748
    %750 = vrot.lane.b32.xlu0 %v577, 8
    %v751 = vpop.permute.xlu0 %750
    %752 = vrot.lane.b32.xlu0 %v578, 8
    %v753 = vpop.permute.xlu0 %752
    %754 = vrot.lane.b32.xlu0 %v579, 8
    %v755 = vpop.permute.xlu0 %754
    %756 = vrot.lane.b32.xlu0 %v580, 8
    %v757 = vpop.permute.xlu0 %756
    %758 = vrot.lane.b32.xlu0 %v581, 8
    %v759 = vpop.permute.xlu0 %758
    %760 = vrot.lane.b32.xlu0 %v582, 8
    %v761 = vpop.permute.xlu0 %760
    %762 = vrot.lane.b32.xlu0 %v583, 8
    %v763 = vpop.permute.xlu0 %762
    %764 = vrot.lane.b32.xlu0 %v584, 8
    %v765 = vpop.permute.xlu0 %764
    %766 = vrot.lane.b32.xlu0 %v585, 8
    %v767 = vpop.permute.xlu0 %766
    %768 = vrot.lane.b32.xlu0 %v586, 8
    %v769 = vpop.permute.xlu0 %768
    %770 = vrot.lane.b32.xlu0 %v587, 8
    %v771 = vpop.permute.xlu0 %770
    %772 = vrot.lane.b32.xlu0 %v588, 8
    %v773 = vpop.permute.xlu0 %772
    %774 = vrot.lane.b32.xlu0 %v589, 8
    %v775 = vpop.permute.xlu0 %774
    %776 = vrot.lane.b32.xlu0 %v590, 8
    %v777 = vpop.permute.xlu0 %776
    %778 = vrot.lane.b32.xlu0 %v591, 8
    %v779 = vpop.permute.xlu0 %778
    %780 = vrot.lane.b32.xlu0 %v592, 8
    %v781 = vpop.permute.xlu0 %780
    %782 = vrot.lane.b32.xlu0 %v593, 8
    %v783 = vpop.permute.xlu0 %782
    %784 = vrot.lane.b32.xlu0 %v594, 8
    %v785 = vpop.permute.xlu0 %784
    %786 = vrot.lane.b32.xlu0 %v595, 8
    %v787 = vpop.permute.xlu0 %786
    %vm852 = vcmask 97344
    %853 = vst.msk [vmem:[#allocation2] sm:$0xff] %vm852, %v661
    %854 = vst.msk [vmem:[#allocation2 + $0x8] sm:$0xff] %vm852, %v663
    %855 = vst.msk [vmem:[#allocation2 + $0x10] sm:$0xff] %vm852, %v665
    %856 = vst.msk [vmem:[#allocation2 + $0x18] sm:$0xff] %vm852, %v667
    %857 = vst.msk [vmem:[#allocation2 + $0x20] sm:$0xff] %vm852, %v669
    %858 = vst.msk [vmem:[#allocation2 + $0x28] sm:$0xff] %vm852, %v671
    %859 = vst.msk [vmem:[#allocation2 + $0x30] sm:$0xff] %vm852, %v673
    %860 = vst.msk [vmem:[#allocation2 + $0x38] sm:$0xff] %vm852, %v675
    %861 = vst.msk [vmem:[#allocation2 + $0x40] sm:$0xff] %vm852, %v677
    %862 = vst.msk [vmem:[#allocation2 + $0x48] sm:$0xff] %vm852, %v679
    %863 = vst.msk [vmem:[#allocation2 + $0x50] sm:$0xff] %vm852, %v681
    %864 = vst.msk [vmem:[#allocation2 + $0x58] sm:$0xff] %vm852, %v683
    %865 = vst.msk [vmem:[#allocation2 + $0x60] sm:$0xff] %vm852, %v685
    %866 = vst.msk [vmem:[#allocation2 + $0x68] sm:$0xff] %vm852, %v687
    %867 = vst.msk [vmem:[#allocation2 + $0x70] sm:$0xff] %vm852, %v689
    %868 = vst.msk [vmem:[#allocation2 + $0x78] sm:$0xff] %vm852, %v691
    %869 = vst.msk [vmem:[#allocation2 + $0x80] sm:$0xff] %vm852, %v693
    %870 = vst.msk [vmem:[#allocation2 + $0x88] sm:$0xff] %vm852, %v695
    %871 = vst.msk [vmem:[#allocation2 + $0x90] sm:$0xff] %vm852, %v697
    %872 = vst.msk [vmem:[#allocation2 + $0x98] sm:$0xff] %vm852, %v699
    %873 = vst.msk [vmem:[#allocation2 + $0xa0] sm:$0xff] %vm852, %v701
    %874 = vst.msk [vmem:[#allocation2 + $0xa8] sm:$0xff] %vm852, %v703
    %875 = vst.msk [vmem:[#allocation2 + $0xb0] sm:$0xff] %vm852, %v705
    %876 = vst.msk [vmem:[#allocation2 + $0xb8] sm:$0xff] %vm852, %v707
    %877 = vst.msk [vmem:[#allocation2 + $0xc0] sm:$0xff] %vm852, %v709
    %878 = vst.msk [vmem:[#allocation2 + $0xc8] sm:$0xff] %vm852, %v711
    %879 = vst.msk [vmem:[#allocation2 + $0xd0] sm:$0xff] %vm852, %v713
    %880 = vst.msk [vmem:[#allocation2 + $0xd8] sm:$0xff] %vm852, %v715
    %881 = vst.msk [vmem:[#allocation2 + $0xe0] sm:$0xff] %vm852, %v717
    %882 = vst.msk [vmem:[#allocation2 + $0xe8] sm:$0xff] %vm852, %v719
    %883 = vst.msk [vmem:[#allocation2 + $0xf0] sm:$0xff] %vm852, %v721
    %884 = vst.msk [vmem:[#allocation2 + $0xf8] sm:$0xff] %vm852, %v723
    %885 = vst.msk [vmem:[#allocation2 + $0x100] sm:$0xff] %vm852, %v725
    %886 = vst.msk [vmem:[#allocation2 + $0x108] sm:$0xff] %vm852, %v727
    %887 = vst.msk [vmem:[#allocation2 + $0x110] sm:$0xff] %vm852, %v729
    %888 = vst.msk [vmem:[#allocation2 + $0x118] sm:$0xff] %vm852, %v731
    %889 = vst.msk [vmem:[#allocation2 + $0x120] sm:$0xff] %vm852, %v733
    %890 = vst.msk [vmem:[#allocation2 + $0x128] sm:$0xff] %vm852, %v735
    %891 = vst.msk [vmem:[#allocation2 + $0x130] sm:$0xff] %vm852, %v737
    %892 = vst.msk [vmem:[#allocation2 + $0x138] sm:$0xff] %vm852, %v739
    %893 = vst.msk [vmem:[#allocation2 + $0x140] sm:$0xff] %vm852, %v741
    %894 = vst.msk [vmem:[#allocation2 + $0x148] sm:$0xff] %vm852, %v743
    %895 = vst.msk [vmem:[#allocation2 + $0x150] sm:$0xff] %vm852, %v745
    %896 = vst.msk [vmem:[#allocation2 + $0x158] sm:$0xff] %vm852, %v747
    %897 = vst.msk [vmem:[#allocation2 + $0x160] sm:$0xff] %vm852, %v749
    %898 = vst.msk [vmem:[#allocation2 + $0x168] sm:$0xff] %vm852, %v751
    %899 = vst.msk [vmem:[#allocation2 + $0x170] sm:$0xff] %vm852, %v753
    %900 = vst.msk [vmem:[#allocation2 + $0x178] sm:$0xff] %vm852, %v755
    %901 = vst.msk [vmem:[#allocation2 + $0x180] sm:$0xff] %vm852, %v757
    %902 = vst.msk [vmem:[#allocation2 + $0x188] sm:$0xff] %vm852, %v759
    %903 = vst.msk [vmem:[#allocation2 + $0x190] sm:$0xff] %vm852, %v761
    %904 = vst.msk [vmem:[#allocation2 + $0x198] sm:$0xff] %vm852, %v763
    %905 = vst.msk [vmem:[#allocation2 + $0x1a0] sm:$0xff] %vm852, %v765
    %906 = vst.msk [vmem:[#allocation2 + $0x1a8] sm:$0xff] %vm852, %v767
    %907 = vst.msk [vmem:[#allocation2 + $0x1b0] sm:$0xff] %vm852, %v769
    %908 = vst.msk [vmem:[#allocation2 + $0x1b8] sm:$0xff] %vm852, %v771
    %909 = vst.msk [vmem:[#allocation2 + $0x1c0] sm:$0xff] %vm852, %v773
    %910 = vst.msk [vmem:[#allocation2 + $0x1c8] sm:$0xff] %vm852, %v775
    %911 = vst.msk [vmem:[#allocation2 + $0x1d0] sm:$0xff] %vm852, %v777
    %912 = vst.msk [vmem:[#allocation2 + $0x1d8] sm:$0xff] %vm852, %v779
    %913 = vst.msk [vmem:[#allocation2 + $0x1e0] sm:$0xff] %vm852, %v781
    %914 = vst.msk [vmem:[#allocation2 + $0x1e8] sm:$0xff] %vm852, %v783
    %915 = vst.msk [vmem:[#allocation2 + $0x1f0] sm:$0xff] %vm852, %v785
    %916 = vst.msk [vmem:[#allocation2 + $0x1f8] sm:$0xff] %vm852, %v787
    %s917 = scalar_lea.vmem %s0, 24
    %v918 = vld [vmem:[%s917] sm:$0xff]
    %v919 = vld [vmem:[%s917 + $0x8] sm:$0xff]
    %v920 = vld [vmem:[%s917 + $0x18] sm:$0xff]
    %v921 = vld [vmem:[%s917 + $0x20] sm:$0xff]
    %v922 = vld [vmem:[%s917 + $0x30] sm:$0xff]
    %v923 = vld [vmem:[%s917 + $0x38] sm:$0xff]
    %v924 = vld [vmem:[%s917 + $0x48] sm:$0xff]
    %v925 = vld [vmem:[%s917 + $0x50] sm:$0xff]
    %v926 = vld [vmem:[%s917 + $0x60] sm:$0xff]
    %v927 = vld [vmem:[%s917 + $0x68] sm:$0xff]
    %v928 = vld [vmem:[%s917 + $0x78] sm:$0xff]
    %v929 = vld [vmem:[%s917 + $0x80] sm:$0xff]
    %v930 = vld [vmem:[%s917 + $0x90] sm:$0xff]
    %v931 = vld [vmem:[%s917 + $0x98] sm:$0xff]
    %v932 = vld [vmem:[%s917 + $0xa8] sm:$0xff]
    %v933 = vld [vmem:[%s917 + $0xb0] sm:$0xff]
    %v934 = vld [vmem:[%s917 + $0xc0] sm:$0xff]
    %v935 = vld [vmem:[%s917 + $0xc8] sm:$0xff]
    %v936 = vld [vmem:[%s917 + $0xd8] sm:$0xff]
    %v937 = vld [vmem:[%s917 + $0xe0] sm:$0xff]
    %v938 = vld [vmem:[%s917 + $0xf0] sm:$0xff]
    %v939 = vld [vmem:[%s917 + $0xf8] sm:$0xff]
    %v940 = vld [vmem:[%s917 + $0x108] sm:$0xff]
    %v941 = vld [vmem:[%s917 + $0x110] sm:$0xff]
    %v942 = vld [vmem:[%s917 + $0x120] sm:$0xff]
    %v943 = vld [vmem:[%s917 + $0x128] sm:$0xff]
    %v944 = vld [vmem:[%s917 + $0x138] sm:$0xff]
    %v945 = vld [vmem:[%s917 + $0x140] sm:$0xff]
    %v946 = vld [vmem:[%s917 + $0x150] sm:$0xff]
    %v947 = vld [vmem:[%s917 + $0x158] sm:$0xff]
    %v948 = vld [vmem:[%s917 + $0x168] sm:$0xff]
    %v949 = vld [vmem:[%s917 + $0x170] sm:$0xff]
    %v950 = vld [vmem:[%s917 + $0x1b0] sm:$0xff]
    %v951 = vld [vmem:[%s917 + $0x1b8] sm:$0xff]
    %v952 = vld [vmem:[%s917 + $0x1c8] sm:$0xff]
    %v953 = vld [vmem:[%s917 + $0x1d0] sm:$0xff]
    %v954 = vld [vmem:[%s917 + $0x1e0] sm:$0xff]
    %v955 = vld [vmem:[%s917 + $0x1e8] sm:$0xff]
    %v956 = vld [vmem:[%s917 + $0x1f8] sm:$0xff]
    %v957 = vld [vmem:[%s917 + $0x200] sm:$0xff]
    %v958 = vld [vmem:[%s917 + $0x210] sm:$0xff]
    %v959 = vld [vmem:[%s917 + $0x218] sm:$0xff]
    %v960 = vld [vmem:[%s917 + $0x228] sm:$0xff]
    %v961 = vld [vmem:[%s917 + $0x230] sm:$0xff]
    %v962 = vld [vmem:[%s917 + $0x240] sm:$0xff]
    %v963 = vld [vmem:[%s917 + $0x248] sm:$0xff]
    %v964 = vld [vmem:[%s917 + $0x258] sm:$0xff]
    %v965 = vld [vmem:[%s917 + $0x260] sm:$0xff]
    %v966 = vld [vmem:[%s917 + $0x270] sm:$0xff]
    %v967 = vld [vmem:[%s917 + $0x278] sm:$0xff]
    %v968 = vld [vmem:[%s917 + $0x288] sm:$0xff]
    %v969 = vld [vmem:[%s917 + $0x290] sm:$0xff]
    %v970 = vld [vmem:[%s917 + $0x2a0] sm:$0xff]
    %v971 = vld [vmem:[%s917 + $0x2a8] sm:$0xff]
    %v972 = vld [vmem:[%s917 + $0x2b8] sm:$0xff]
    %v973 = vld [vmem:[%s917 + $0x2c0] sm:$0xff]
    %v974 = vld [vmem:[%s917 + $0x2d0] sm:$0xff]
    %v975 = vld [vmem:[%s917 + $0x2d8] sm:$0xff]
    %v976 = vld [vmem:[%s917 + $0x2e8] sm:$0xff]
    %v977 = vld [vmem:[%s917 + $0x2f0] sm:$0xff]
    %v978 = vld [vmem:[%s917 + $0x300] sm:$0xff]
    %v979 = vld [vmem:[%s917 + $0x308] sm:$0xff]
    %v980 = vld [vmem:[%s917 + $0x318] sm:$0xff]
    %v981 = vld [vmem:[%s917 + $0x320] sm:$0xff]
    %1046 = vrot.lane.b32.xlu0 %v918, 12
    %v1047 = vpop.permute.xlu0 %1046
    %1048 = vrot.lane.b32.xlu0 %v919, 12
    %v1049 = vpop.permute.xlu0 %1048
    %1050 = vrot.lane.b32.xlu0 %v920, 12
    %v1051 = vpop.permute.xlu0 %1050
    %1052 = vrot.lane.b32.xlu0 %v921, 12
    %v1053 = vpop.permute.xlu0 %1052
    %1054 = vrot.lane.b32.xlu0 %v922, 12
    %v1055 = vpop.permute.xlu0 %1054
    %1056 = vrot.lane.b32.xlu0 %v923, 12
    %v1057 = vpop.permute.xlu0 %1056
    %1058 = vrot.lane.b32.xlu0 %v924, 12
    %v1059 = vpop.permute.xlu0 %1058
    %1060 = vrot.lane.b32.xlu0 %v925, 12
    %v1061 = vpop.permute.xlu0 %1060
    %1062 = vrot.lane.b32.xlu0 %v926, 12
    %v1063 = vpop.permute.xlu0 %1062
    %1064 = vrot.lane.b32.xlu0 %v927, 12
    %v1065 = vpop.permute.xlu0 %1064
    %1066 = vrot.lane.b32.xlu0 %v928, 12
    %v1067 = vpop.permute.xlu0 %1066
    %1068 = vrot.lane.b32.xlu0 %v929, 12
    %v1069 = vpop.permute.xlu0 %1068
    %1070 = vrot.lane.b32.xlu0 %v930, 12
    %v1071 = vpop.permute.xlu0 %1070
    %1072 = vrot.lane.b32.xlu0 %v931, 12
    %v1073 = vpop.permute.xlu0 %1072
    %1074 = vrot.lane.b32.xlu0 %v932, 12
    %v1075 = vpop.permute.xlu0 %1074
    %1076 = vrot.lane.b32.xlu0 %v933, 12
    %v1077 = vpop.permute.xlu0 %1076
    %1078 = vrot.lane.b32.xlu0 %v934, 12
    %v1079 = vpop.permute.xlu0 %1078
    %1080 = vrot.lane.b32.xlu0 %v935, 12
    %v1081 = vpop.permute.xlu0 %1080
    %1082 = vrot.lane.b32.xlu0 %v936, 12
    %v1083 = vpop.permute.xlu0 %1082
    %1084 = vrot.lane.b32.xlu0 %v937, 12
    %v1085 = vpop.permute.xlu0 %1084
    %1086 = vrot.lane.b32.xlu0 %v938, 12
    %v1087 = vpop.permute.xlu0 %1086
    %1088 = vrot.lane.b32.xlu0 %v939, 12
    %v1089 = vpop.permute.xlu0 %1088
    %1090 = vrot.lane.b32.xlu0 %v940, 12
    %v1091 = vpop.permute.xlu0 %1090
    %1092 = vrot.lane.b32.xlu0 %v941, 12
    %v1093 = vpop.permute.xlu0 %1092
    %1094 = vrot.lane.b32.xlu0 %v942, 12
    %v1095 = vpop.permute.xlu0 %1094
    %1096 = vrot.lane.b32.xlu0 %v943, 12
    %v1097 = vpop.permute.xlu0 %1096
    %1098 = vrot.lane.b32.xlu0 %v944, 12
    %v1099 = vpop.permute.xlu0 %1098
    %1100 = vrot.lane.b32.xlu0 %v945, 12
    %v1101 = vpop.permute.xlu0 %1100
    %1102 = vrot.lane.b32.xlu0 %v946, 12
    %v1103 = vpop.permute.xlu0 %1102
    %1104 = vrot.lane.b32.xlu0 %v947, 12
    %v1105 = vpop.permute.xlu0 %1104
    %1106 = vrot.lane.b32.xlu0 %v948, 12
    %v1107 = vpop.permute.xlu0 %1106
    %1108 = vrot.lane.b32.xlu0 %v949, 12
    %v1109 = vpop.permute.xlu0 %1108
    %1110 = vrot.lane.b32.xlu0 %v950, 12
    %v1111 = vpop.permute.xlu0 %1110
    %1112 = vrot.lane.b32.xlu0 %v951, 12
    %v1113 = vpop.permute.xlu0 %1112
    %1114 = vrot.lane.b32.xlu0 %v952, 12
    %v1115 = vpop.permute.xlu0 %1114
    %1116 = vrot.lane.b32.xlu0 %v953, 12
    %v1117 = vpop.permute.xlu0 %1116
    %1118 = vrot.lane.b32.xlu0 %v954, 12
    %v1119 = vpop.permute.xlu0 %1118
    %1120 = vrot.lane.b32.xlu0 %v955, 12
    %v1121 = vpop.permute.xlu0 %1120
    %1122 = vrot.lane.b32.xlu0 %v956, 12
    %v1123 = vpop.permute.xlu0 %1122
    %1124 = vrot.lane.b32.xlu0 %v957, 12
    %v1125 = vpop.permute.xlu0 %1124
    %1126 = vrot.lane.b32.xlu0 %v958, 12
    %v1127 = vpop.permute.xlu0 %1126
    %1128 = vrot.lane.b32.xlu0 %v959, 12
    %v1129 = vpop.permute.xlu0 %1128
    %1130 = vrot.lane.b32.xlu0 %v960, 12
    %v1131 = vpop.permute.xlu0 %1130
    %1132 = vrot.lane.b32.xlu0 %v961, 12
    %v1133 = vpop.permute.xlu0 %1132
    %1134 = vrot.lane.b32.xlu0 %v962, 12
    %v1135 = vpop.permute.xlu0 %1134
    %1136 = vrot.lane.b32.xlu0 %v963, 12
    %v1137 = vpop.permute.xlu0 %1136
    %1138 = vrot.lane.b32.xlu0 %v964, 12
    %v1139 = vpop.permute.xlu0 %1138
    %1140 = vrot.lane.b32.xlu0 %v965, 12
    %v1141 = vpop.permute.xlu0 %1140
    %1142 = vrot.lane.b32.xlu0 %v966, 12
    %v1143 = vpop.permute.xlu0 %1142
    %1144 = vrot.lane.b32.xlu0 %v967, 12
    %v1145 = vpop.permute.xlu0 %1144
    %1146 = vrot.lane.b32.xlu0 %v968, 12
    %v1147 = vpop.permute.xlu0 %1146
    %1148 = vrot.lane.b32.xlu0 %v969, 12
    %v1149 = vpop.permute.xlu0 %1148
    %1150 = vrot.lane.b32.xlu0 %v970, 12
    %v1151 = vpop.permute.xlu0 %1150
    %1152 = vrot.lane.b32.xlu0 %v971, 12
    %v1153 = vpop.permute.xlu0 %1152
    %1154 = vrot.lane.b32.xlu0 %v972, 12
    %v1155 = vpop.permute.xlu0 %1154
    %1156 = vrot.lane.b32.xlu0 %v973, 12
    %v1157 = vpop.permute.xlu0 %1156
    %1158 = vrot.lane.b32.xlu0 %v974, 12
    %v1159 = vpop.permute.xlu0 %1158
    %1160 = vrot.lane.b32.xlu0 %v975, 12
    %v1161 = vpop.permute.xlu0 %1160
    %1162 = vrot.lane.b32.xlu0 %v976, 12
    %v1163 = vpop.permute.xlu0 %1162
    %1164 = vrot.lane.b32.xlu0 %v977, 12
    %v1165 = vpop.permute.xlu0 %1164
    %1166 = vrot.lane.b32.xlu0 %v978, 12
    %v1167 = vpop.permute.xlu0 %1166
    %1168 = vrot.lane.b32.xlu0 %v979, 12
    %v1169 = vpop.permute.xlu0 %1168
    %1170 = vrot.lane.b32.xlu0 %v980, 12
    %v1171 = vpop.permute.xlu0 %1170
    %1172 = vrot.lane.b32.xlu0 %v981, 12
    %v1173 = vpop.permute.xlu0 %1172
    %vm1238 = vcmask 130144
    %1239 = vst.msk [vmem:[#allocation2] sm:$0xff] %vm1238, %v1047
    %1240 = vst.msk [vmem:[#allocation2 + $0x8] sm:$0xff] %vm1238, %v1049
    %1241 = vst.msk [vmem:[#allocation2 + $0x10] sm:$0xff] %vm1238, %v1051
    %1242 = vst.msk [vmem:[#allocation2 + $0x18] sm:$0xff] %vm1238, %v1053
    %1243 = vst.msk [vmem:[#allocation2 + $0x20] sm:$0xff] %vm1238, %v1055
    %1244 = vst.msk [vmem:[#allocation2 + $0x28] sm:$0xff] %vm1238, %v1057
    %1245 = vst.msk [vmem:[#allocation2 + $0x30] sm:$0xff] %vm1238, %v1059
    %1246 = vst.msk [vmem:[#allocation2 + $0x38] sm:$0xff] %vm1238, %v1061
    %1247 = vst.msk [vmem:[#allocation2 + $0x40] sm:$0xff] %vm1238, %v1063
    %1248 = vst.msk [vmem:[#allocation2 + $0x48] sm:$0xff] %vm1238, %v1065
    %1249 = vst.msk [vmem:[#allocation2 + $0x50] sm:$0xff] %vm1238, %v1067
    %1250 = vst.msk [vmem:[#allocation2 + $0x58] sm:$0xff] %vm1238, %v1069
    %1251 = vst.msk [vmem:[#allocation2 + $0x60] sm:$0xff] %vm1238, %v1071
    %1252 = vst.msk [vmem:[#allocation2 + $0x68] sm:$0xff] %vm1238, %v1073
    %1253 = vst.msk [vmem:[#allocation2 + $0x70] sm:$0xff] %vm1238, %v1075
    %1254 = vst.msk [vmem:[#allocation2 + $0x78] sm:$0xff] %vm1238, %v1077
    %1255 = vst.msk [vmem:[#allocation2 + $0x80] sm:$0xff] %vm1238, %v1079
    %1256 = vst.msk [vmem:[#allocation2 + $0x88] sm:$0xff] %vm1238, %v1081
    %1257 = vst.msk [vmem:[#allocation2 + $0x90] sm:$0xff] %vm1238, %v1083
    %1258 = vst.msk [vmem:[#allocation2 + $0x98] sm:$0xff] %vm1238, %v1085
    %1259 = vst.msk [vmem:[#allocation2 + $0xa0] sm:$0xff] %vm1238, %v1087
    %1260 = vst.msk [vmem:[#allocation2 + $0xa8] sm:$0xff] %vm1238, %v1089
    %1261 = vst.msk [vmem:[#allocation2 + $0xb0] sm:$0xff] %vm1238, %v1091
    %1262 = vst.msk [vmem:[#allocation2 + $0xb8] sm:$0xff] %vm1238, %v1093
    %1263 = vst.msk [vmem:[#allocation2 + $0xc0] sm:$0xff] %vm1238, %v1095
    %1264 = vst.msk [vmem:[#allocation2 + $0xc8] sm:$0xff] %vm1238, %v1097
    %1265 = vst.msk [vmem:[#allocation2 + $0xd0] sm:$0xff] %vm1238, %v1099
    %1266 = vst.msk [vmem:[#allocation2 + $0xd8] sm:$0xff] %vm1238, %v1101
    %1267 = vst.msk [vmem:[#allocation2 + $0xe0] sm:$0xff] %vm1238, %v1103
    %1268 = vst.msk [vmem:[#allocation2 + $0xe8] sm:$0xff] %vm1238, %v1105
    %1269 = vst.msk [vmem:[#allocation2 + $0xf0] sm:$0xff] %vm1238, %v1107
    %1270 = vst.msk [vmem:[#allocation2 + $0xf8] sm:$0xff] %vm1238, %v1109
    %1271 = vst.msk [vmem:[#allocation2 + $0x100] sm:$0xff] %vm1238, %v1111
    %1272 = vst.msk [vmem:[#allocation2 + $0x108] sm:$0xff] %vm1238, %v1113
    %1273 = vst.msk [vmem:[#allocation2 + $0x110] sm:$0xff] %vm1238, %v1115
    %1274 = vst.msk [vmem:[#allocation2 + $0x118] sm:$0xff] %vm1238, %v1117
    %1275 = vst.msk [vmem:[#allocation2 + $0x120] sm:$0xff] %vm1238, %v1119
    %1276 = vst.msk [vmem:[#allocation2 + $0x128] sm:$0xff] %vm1238, %v1121
    %1277 = vst.msk [vmem:[#allocation2 + $0x130] sm:$0xff] %vm1238, %v1123
    %1278 = vst.msk [vmem:[#allocation2 + $0x138] sm:$0xff] %vm1238, %v1125
    %1279 = vst.msk [vmem:[#allocation2 + $0x140] sm:$0xff] %vm1238, %v1127
    %1280 = vst.msk [vmem:[#allocation2 + $0x148] sm:$0xff] %vm1238, %v1129
    %1281 = vst.msk [vmem:[#allocation2 + $0x150] sm:$0xff] %vm1238, %v1131
    %1282 = vst.msk [vmem:[#allocation2 + $0x158] sm:$0xff] %vm1238, %v1133
    %1283 = vst.msk [vmem:[#allocation2 + $0x160] sm:$0xff] %vm1238, %v1135
    %1284 = vst.msk [vmem:[#allocation2 + $0x168] sm:$0xff] %vm1238, %v1137
    %1285 = vst.msk [vmem:[#allocation2 + $0x170] sm:$0xff] %vm1238, %v1139
    %1286 = vst.msk [vmem:[#allocation2 + $0x178] sm:$0xff] %vm1238, %v1141
    %1287 = vst.msk [vmem:[#allocation2 + $0x180] sm:$0xff] %vm1238, %v1143
    %1288 = vst.msk [vmem:[#allocation2 + $0x188] sm:$0xff] %vm1238, %v1145
    %1289 = vst.msk [vmem:[#allocation2 + $0x190] sm:$0xff] %vm1238, %v1147
    %1290 = vst.msk [vmem:[#allocation2 + $0x198] sm:$0xff] %vm1238, %v1149
    %1291 = vst.msk [vmem:[#allocation2 + $0x1a0] sm:$0xff] %vm1238, %v1151
    %1292 = vst.msk [vmem:[#allocation2 + $0x1a8] sm:$0xff] %vm1238, %v1153
    %1293 = vst.msk [vmem:[#allocation2 + $0x1b0] sm:$0xff] %vm1238, %v1155
    %1294 = vst.msk [vmem:[#allocation2 + $0x1b8] sm:$0xff] %vm1238, %v1157
    %1295 = vst.msk [vmem:[#allocation2 + $0x1c0] sm:$0xff] %vm1238, %v1159
    %1296 = vst.msk [vmem:[#allocation2 + $0x1c8] sm:$0xff] %vm1238, %v1161
    %1297 = vst.msk [vmem:[#allocation2 + $0x1d0] sm:$0xff] %vm1238, %v1163
    %1298 = vst.msk [vmem:[#allocation2 + $0x1d8] sm:$0xff] %vm1238, %v1165
    %1299 = vst.msk [vmem:[#allocation2 + $0x1e0] sm:$0xff] %vm1238, %v1167
    %1300 = vst.msk [vmem:[#allocation2 + $0x1e8] sm:$0xff] %vm1238, %v1169
    %1301 = vst.msk [vmem:[#allocation2 + $0x1f0] sm:$0xff] %vm1238, %v1171
    %1302 = vst.msk [vmem:[#allocation2 + $0x1f8] sm:$0xff] %vm1238, %v1173
    %v1303 = vld [vmem:[%s917 + $0x1] sm:$0xff]
    %v1304 = vld [vmem:[%s917 + $0x9] sm:$0xff]
    %v1305 = vld [vmem:[%s917 + $0x19] sm:$0xff]
    %v1306 = vld [vmem:[%s917 + $0x21] sm:$0xff]
    %v1307 = vld [vmem:[%s917 + $0x31] sm:$0xff]
    %v1308 = vld [vmem:[%s917 + $0x39] sm:$0xff]
    %v1309 = vld [vmem:[%s917 + $0x49] sm:$0xff]
    %v1310 = vld [vmem:[%s917 + $0x51] sm:$0xff]
    %v1311 = vld [vmem:[%s917 + $0x61] sm:$0xff]
    %v1312 = vld [vmem:[%s917 + $0x69] sm:$0xff]
    %v1313 = vld [vmem:[%s917 + $0x79] sm:$0xff]
    %v1314 = vld [vmem:[%s917 + $0x81] sm:$0xff]
    %v1315 = vld [vmem:[%s917 + $0x91] sm:$0xff]
    %v1316 = vld [vmem:[%s917 + $0x99] sm:$0xff]
    %v1317 = vld [vmem:[%s917 + $0xa9] sm:$0xff]
    %v1318 = vld [vmem:[%s917 + $0xb1] sm:$0xff]
    %v1319 = vld [vmem:[%s917 + $0xc1] sm:$0xff]
    %v1320 = vld [vmem:[%s917 + $0xc9] sm:$0xff]
    %v1321 = vld [vmem:[%s917 + $0xd9] sm:$0xff]
    %v1322 = vld [vmem:[%s917 + $0xe1] sm:$0xff]
    %v1323 = vld [vmem:[%s917 + $0xf1] sm:$0xff]
    %v1324 = vld [vmem:[%s917 + $0xf9] sm:$0xff]
    %v1325 = vld [vmem:[%s917 + $0x109] sm:$0xff]
    %v1326 = vld [vmem:[%s917 + $0x111] sm:$0xff]
    %v1327 = vld [vmem:[%s917 + $0x121] sm:$0xff]
    %v1328 = vld [vmem:[%s917 + $0x129] sm:$0xff]
    %v1329 = vld [vmem:[%s917 + $0x139] sm:$0xff]
    %v1330 = vld [vmem:[%s917 + $0x141] sm:$0xff]
    %v1331 = vld [vmem:[%s917 + $0x151] sm:$0xff]
    %v1332 = vld [vmem:[%s917 + $0x159] sm:$0xff]
    %v1333 = vld [vmem:[%s917 + $0x169] sm:$0xff]
    %v1334 = vld [vmem:[%s917 + $0x171] sm:$0xff]
    %v1335 = vld [vmem:[%s917 + $0x1b1] sm:$0xff]
    %v1336 = vld [vmem:[%s917 + $0x1b9] sm:$0xff]
    %v1337 = vld [vmem:[%s917 + $0x1c9] sm:$0xff]
    %v1338 = vld [vmem:[%s917 + $0x1d1] sm:$0xff]
    %v1339 = vld [vmem:[%s917 + $0x1e1] sm:$0xff]
    %v1340 = vld [vmem:[%s917 + $0x1e9] sm:$0xff]
    %v1341 = vld [vmem:[%s917 + $0x1f9] sm:$0xff]
    %v1342 = vld [vmem:[%s917 + $0x201] sm:$0xff]
    %v1343 = vld [vmem:[%s917 + $0x211] sm:$0xff]
    %v1344 = vld [vmem:[%s917 + $0x219] sm:$0xff]
    %v1345 = vld [vmem:[%s917 + $0x229] sm:$0xff]
    %v1346 = vld [vmem:[%s917 + $0x231] sm:$0xff]
    %v1347 = vld [vmem:[%s917 + $0x241] sm:$0xff]
    %v1348 = vld [vmem:[%s917 + $0x249] sm:$0xff]
    %v1349 = vld [vmem:[%s917 + $0x259] sm:$0xff]
    %v1350 = vld [vmem:[%s917 + $0x261] sm:$0xff]
    %v1351 = vld [vmem:[%s917 + $0x271] sm:$0xff]
    %v1352 = vld [vmem:[%s917 + $0x279] sm:$0xff]
    %v1353 = vld [vmem:[%s917 + $0x289] sm:$0xff]
    %v1354 = vld [vmem:[%s917 + $0x291] sm:$0xff]
    %v1355 = vld [vmem:[%s917 + $0x2a1] sm:$0xff]
    %v1356 = vld [vmem:[%s917 + $0x2a9] sm:$0xff]
    %v1357 = vld [vmem:[%s917 + $0x2b9] sm:$0xff]
    %v1358 = vld [vmem:[%s917 + $0x2c1] sm:$0xff]
    %v1359 = vld [vmem:[%s917 + $0x2d1] sm:$0xff]
    %v1360 = vld [vmem:[%s917 + $0x2d9] sm:$0xff]
    %v1361 = vld [vmem:[%s917 + $0x2e9] sm:$0xff]
    %v1362 = vld [vmem:[%s917 + $0x2f1] sm:$0xff]
    %v1363 = vld [vmem:[%s917 + $0x301] sm:$0xff]
    %v1364 = vld [vmem:[%s917 + $0x309] sm:$0xff]
    %v1365 = vld [vmem:[%s917 + $0x319] sm:$0xff]
    %v1366 = vld [vmem:[%s917 + $0x321] sm:$0xff]
    %1431 = vrot.lane.b32.xlu0 %v1303, 16
    %v1432 = vpop.permute.xlu0 %1431
    %1433 = vrot.lane.b32.xlu0 %v1304, 16
    %v1434 = vpop.permute.xlu0 %1433
    %1435 = vrot.lane.b32.xlu0 %v1305, 16
    %v1436 = vpop.permute.xlu0 %1435
    %1437 = vrot.lane.b32.xlu0 %v1306, 16
    %v1438 = vpop.permute.xlu0 %1437
    %1439 = vrot.lane.b32.xlu0 %v1307, 16
    %v1440 = vpop.permute.xlu0 %1439
    %1441 = vrot.lane.b32.xlu0 %v1308, 16
    %v1442 = vpop.permute.xlu0 %1441
    %1443 = vrot.lane.b32.xlu0 %v1309, 16
    %v1444 = vpop.permute.xlu0 %1443
    %1445 = vrot.lane.b32.xlu0 %v1310, 16
    %v1446 = vpop.permute.xlu0 %1445
    %1447 = vrot.lane.b32.xlu0 %v1311, 16
    %v1448 = vpop.permute.xlu0 %1447
    %1449 = vrot.lane.b32.xlu0 %v1312, 16
    %v1450 = vpop.permute.xlu0 %1449
    %1451 = vrot.lane.b32.xlu0 %v1313, 16
    %v1452 = vpop.permute.xlu0 %1451
    %1453 = vrot.lane.b32.xlu0 %v1314, 16
    %v1454 = vpop.permute.xlu0 %1453
    %1455 = vrot.lane.b32.xlu0 %v1315, 16
    %v1456 = vpop.permute.xlu0 %1455
    %1457 = vrot.lane.b32.xlu0 %v1316, 16
    %v1458 = vpop.permute.xlu0 %1457
    %1459 = vrot.lane.b32.xlu0 %v1317, 16
    %v1460 = vpop.permute.xlu0 %1459
    %1461 = vrot.lane.b32.xlu0 %v1318, 16
    %v1462 = vpop.permute.xlu0 %1461
    %1463 = vrot.lane.b32.xlu0 %v1319, 16
    %v1464 = vpop.permute.xlu0 %1463
    %1465 = vrot.lane.b32.xlu0 %v1320, 16
    %v1466 = vpop.permute.xlu0 %1465
    %1467 = vrot.lane.b32.xlu0 %v1321, 16
    %v1468 = vpop.permute.xlu0 %1467
    %1469 = vrot.lane.b32.xlu0 %v1322, 16
    %v1470 = vpop.permute.xlu0 %1469
    %1471 = vrot.lane.b32.xlu0 %v1323, 16
    %v1472 = vpop.permute.xlu0 %1471
    %1473 = vrot.lane.b32.xlu0 %v1324, 16
    %v1474 = vpop.permute.xlu0 %1473
    %1475 = vrot.lane.b32.xlu0 %v1325, 16
    %v1476 = vpop.permute.xlu0 %1475
    %1477 = vrot.lane.b32.xlu0 %v1326, 16
    %v1478 = vpop.permute.xlu0 %1477
    %1479 = vrot.lane.b32.xlu0 %v1327, 16
    %v1480 = vpop.permute.xlu0 %1479
    %1481 = vrot.lane.b32.xlu0 %v1328, 16
    %v1482 = vpop.permute.xlu0 %1481
    %1483 = vrot.lane.b32.xlu0 %v1329, 16
    %v1484 = vpop.permute.xlu0 %1483
    %1485 = vrot.lane.b32.xlu0 %v1330, 16
    %v1486 = vpop.permute.xlu0 %1485
    %1487 = vrot.lane.b32.xlu0 %v1331, 16
    %v1488 = vpop.permute.xlu0 %1487
    %1489 = vrot.lane.b32.xlu0 %v1332, 16
    %v1490 = vpop.permute.xlu0 %1489
    %1491 = vrot.lane.b32.xlu0 %v1333, 16
    %v1492 = vpop.permute.xlu0 %1491
    %1493 = vrot.lane.b32.xlu0 %v1334, 16
    %v1494 = vpop.permute.xlu0 %1493
    %1495 = vrot.lane.b32.xlu0 %v1335, 16
    %v1496 = vpop.permute.xlu0 %1495
    %1497 = vrot.lane.b32.xlu0 %v1336, 16
    %v1498 = vpop.permute.xlu0 %1497
    %1499 = vrot.lane.b32.xlu0 %v1337, 16
    %v1500 = vpop.permute.xlu0 %1499
    %1501 = vrot.lane.b32.xlu0 %v1338, 16
    %v1502 = vpop.permute.xlu0 %1501
    %1503 = vrot.lane.b32.xlu0 %v1339, 16
    %v1504 = vpop.permute.xlu0 %1503
    %1505 = vrot.lane.b32.xlu0 %v1340, 16
    %v1506 = vpop.permute.xlu0 %1505
    %1507 = vrot.lane.b32.xlu0 %v1341, 16
    %v1508 = vpop.permute.xlu0 %1507
    %1509 = vrot.lane.b32.xlu0 %v1342, 16
    %v1510 = vpop.permute.xlu0 %1509
    %1511 = vrot.lane.b32.xlu0 %v1343, 16
    %v1512 = vpop.permute.xlu0 %1511
    %1513 = vrot.lane.b32.xlu0 %v1344, 16
    %v1514 = vpop.permute.xlu0 %1513
    %1515 = vrot.lane.b32.xlu0 %v1345, 16
    %v1516 = vpop.permute.xlu0 %1515
    %1517 = vrot.lane.b32.xlu0 %v1346, 16
    %v1518 = vpop.permute.xlu0 %1517
    %1519 = vrot.lane.b32.xlu0 %v1347, 16
    %v1520 = vpop.permute.xlu0 %1519
    %1521 = vrot.lane.b32.xlu0 %v1348, 16
    %v1522 = vpop.permute.xlu0 %1521
    %1523 = vrot.lane.b32.xlu0 %v1349, 16
    %v1524 = vpop.permute.xlu0 %1523
    %1525 = vrot.lane.b32.xlu0 %v1350, 16
    %v1526 = vpop.permute.xlu0 %1525
    %1527 = vrot.lane.b32.xlu0 %v1351, 16
    %v1528 = vpop.permute.xlu0 %1527
    %1529 = vrot.lane.b32.xlu0 %v1352, 16
    %v1530 = vpop.permute.xlu0 %1529
    %1531 = vrot.lane.b32.xlu0 %v1353, 16
    %v1532 = vpop.permute.xlu0 %1531
    %1533 = vrot.lane.b32.xlu0 %v1354, 16
    %v1534 = vpop.permute.xlu0 %1533
    %1535 = vrot.lane.b32.xlu0 %v1355, 16
    %v1536 = vpop.permute.xlu0 %1535
    %1537 = vrot.lane.b32.xlu0 %v1356, 16
    %v1538 = vpop.permute.xlu0 %1537
    %1539 = vrot.lane.b32.xlu0 %v1357, 16
    %v1540 = vpop.permute.xlu0 %1539
    %1541 = vrot.lane.b32.xlu0 %v1358, 16
    %v1542 = vpop.permute.xlu0 %1541
    %1543 = vrot.lane.b32.xlu0 %v1359, 16
    %v1544 = vpop.permute.xlu0 %1543
    %1545 = vrot.lane.b32.xlu0 %v1360, 16
    %v1546 = vpop.permute.xlu0 %1545
    %1547 = vrot.lane.b32.xlu0 %v1361, 16
    %v1548 = vpop.permute.xlu0 %1547
    %1549 = vrot.lane.b32.xlu0 %v1362, 16
    %v1550 = vpop.permute.xlu0 %1549
    %1551 = vrot.lane.b32.xlu0 %v1363, 16
    %v1552 = vpop.permute.xlu0 %1551
    %1553 = vrot.lane.b32.xlu0 %v1364, 16
    %v1554 = vpop.permute.xlu0 %1553
    %1555 = vrot.lane.b32.xlu0 %v1365, 16
    %v1556 = vpop.permute.xlu0 %1555
    %1557 = vrot.lane.b32.xlu0 %v1366, 16
    %v1558 = vpop.permute.xlu0 %1557
    %vm1623 = vcmask 162944
    %1624 = vst.msk [vmem:[#allocation2] sm:$0xff] %vm1623, %v1432
    %1625 = vst.msk [vmem:[#allocation2 + $0x8] sm:$0xff] %vm1623, %v1434
    %1626 = vst.msk [vmem:[#allocation2 + $0x10] sm:$0xff] %vm1623, %v1436
    %1627 = vst.msk [vmem:[#allocation2 + $0x18] sm:$0xff] %vm1623, %v1438
    %1628 = vst.msk [vmem:[#allocation2 + $0x20] sm:$0xff] %vm1623, %v1440
    %1629 = vst.msk [vmem:[#allocation2 + $0x28] sm:$0xff] %vm1623, %v1442
    %1630 = vst.msk [vmem:[#allocation2 + $0x30] sm:$0xff] %vm1623, %v1444
    %1631 = vst.msk [vmem:[#allocation2 + $0x38] sm:$0xff] %vm1623, %v1446
    %1632 = vst.msk [vmem:[#allocation2 + $0x40] sm:$0xff] %vm1623, %v1448
    %1633 = vst.msk [vmem:[#allocation2 + $0x48] sm:$0xff] %vm1623, %v1450
    %1634 = vst.msk [vmem:[#allocation2 + $0x50] sm:$0xff] %vm1623, %v1452
    %1635 = vst.msk [vmem:[#allocation2 + $0x58] sm:$0xff] %vm1623, %v1454
    %1636 = vst.msk [vmem:[#allocation2 + $0x60] sm:$0xff] %vm1623, %v1456
    %1637 = vst.msk [vmem:[#allocation2 + $0x68] sm:$0xff] %vm1623, %v1458
    %1638 = vst.msk [vmem:[#allocation2 + $0x70] sm:$0xff] %vm1623, %v1460
    %1639 = vst.msk [vmem:[#allocation2 + $0x78] sm:$0xff] %vm1623, %v1462
    %1640 = vst.msk [vmem:[#allocation2 + $0x80] sm:$0xff] %vm1623, %v1464
    %1641 = vst.msk [vmem:[#allocation2 + $0x88] sm:$0xff] %vm1623, %v1466
    %1642 = vst.msk [vmem:[#allocation2 + $0x90] sm:$0xff] %vm1623, %v1468
    %1643 = vst.msk [vmem:[#allocation2 + $0x98] sm:$0xff] %vm1623, %v1470
    %1644 = vst.msk [vmem:[#allocation2 + $0xa0] sm:$0xff] %vm1623, %v1472
    %1645 = vst.msk [vmem:[#allocation2 + $0xa8] sm:$0xff] %vm1623, %v1474
    %1646 = vst.msk [vmem:[#allocation2 + $0xb0] sm:$0xff] %vm1623, %v1476
    %1647 = vst.msk [vmem:[#allocation2 + $0xb8] sm:$0xff] %vm1623, %v1478
    %1648 = vst.msk [vmem:[#allocation2 + $0xc0] sm:$0xff] %vm1623, %v1480
    %1649 = vst.msk [vmem:[#allocation2 + $0xc8] sm:$0xff] %vm1623, %v1482
    %1650 = vst.msk [vmem:[#allocation2 + $0xd0] sm:$0xff] %vm1623, %v1484
    %1651 = vst.msk [vmem:[#allocation2 + $0xd8] sm:$0xff] %vm1623, %v1486
    %1652 = vst.msk [vmem:[#allocation2 + $0xe0] sm:$0xff] %vm1623, %v1488
    %1653 = vst.msk [vmem:[#allocation2 + $0xe8] sm:$0xff] %vm1623, %v1490
    %1654 = vst.msk [vmem:[#allocation2 + $0xf0] sm:$0xff] %vm1623, %v1492
    %1655 = vst.msk [vmem:[#allocation2 + $0xf8] sm:$0xff] %vm1623, %v1494
    %1656 = vst.msk [vmem:[#allocation2 + $0x100] sm:$0xff] %vm1623, %v1496
    %1657 = vst.msk [vmem:[#allocation2 + $0x108] sm:$0xff] %vm1623, %v1498
    %1658 = vst.msk [vmem:[#allocation2 + $0x110] sm:$0xff] %vm1623, %v1500
    %1659 = vst.msk [vmem:[#allocation2 + $0x118] sm:$0xff] %vm1623, %v1502
    %1660 = vst.msk [vmem:[#allocation2 + $0x120] sm:$0xff] %vm1623, %v1504
    %1661 = vst.msk [vmem:[#allocation2 + $0x128] sm:$0xff] %vm1623, %v1506
    %1662 = vst.msk [vmem:[#allocation2 + $0x130] sm:$0xff] %vm1623, %v1508
    %1663 = vst.msk [vmem:[#allocation2 + $0x138] sm:$0xff] %vm1623, %v1510
    %1664 = vst.msk [vmem:[#allocation2 + $0x140] sm:$0xff] %vm1623, %v1512
    %1665 = vst.msk [vmem:[#allocation2 + $0x148] sm:$0xff] %vm1623, %v1514
    %1666 = vst.msk [vmem:[#allocation2 + $0x150] sm:$0xff] %vm1623, %v1516
    %1667 = vst.msk [vmem:[#allocation2 + $0x158] sm:$0xff] %vm1623, %v1518
    %1668 = vst.msk [vmem:[#allocation2 + $0x160] sm:$0xff] %vm1623, %v1520
    %1669 = vst.msk [vmem:[#allocation2 + $0x168] sm:$0xff] %vm1623, %v1522
    %1670 = vst.msk [vmem:[#allocation2 + $0x170] sm:$0xff] %vm1623, %v1524
    %1671 = vst.msk [vmem:[#allocation2 + $0x178] sm:$0xff] %vm1623, %v1526
    %1672 = vst.msk [vmem:[#allocation2 + $0x180] sm:$0xff] %vm1623, %v1528
    %1673 = vst.msk [vmem:[#allocation2 + $0x188] sm:$0xff] %vm1623, %v1530
    %1674 = vst.msk [vmem:[#allocation2 + $0x190] sm:$0xff] %vm1623, %v1532
    %1675 = vst.msk [vmem:[#allocation2 + $0x198] sm:$0xff] %vm1623, %v1534
    %1676 = vst.msk [vmem:[#allocation2 + $0x1a0] sm:$0xff] %vm1623, %v1536
    %1677 = vst.msk [vmem:[#allocation2 + $0x1a8] sm:$0xff] %vm1623, %v1538
    %1678 = vst.msk [vmem:[#allocation2 + $0x1b0] sm:$0xff] %vm1623, %v1540
    %1679 = vst.msk [vmem:[#allocation2 + $0x1b8] sm:$0xff] %vm1623, %v1542
    %1680 = vst.msk [vmem:[#allocation2 + $0x1c0] sm:$0xff] %vm1623, %v1544
    %1681 = vst.msk [vmem:[#allocation2 + $0x1c8] sm:$0xff] %vm1623, %v1546
    %1682 = vst.msk [vmem:[#allocation2 + $0x1d0] sm:$0xff] %vm1623, %v1548
    %1683 = vst.msk [vmem:[#allocation2 + $0x1d8] sm:$0xff] %vm1623, %v1550
    %1684 = vst.msk [vmem:[#allocation2 + $0x1e0] sm:$0xff] %vm1623, %v1552
    %1685 = vst.msk [vmem:[#allocation2 + $0x1e8] sm:$0xff] %vm1623, %v1554
    %1686 = vst.msk [vmem:[#allocation2 + $0x1f0] sm:$0xff] %vm1623, %v1556
    %1687 = vst.msk [vmem:[#allocation2 + $0x1f8] sm:$0xff] %vm1623, %v1558
    %v1688 = vld [vmem:[%s917 + $0x2] sm:$0xff]
    %v1689 = vld [vmem:[%s917 + $0xa] sm:$0xff]
    %v1690 = vld [vmem:[%s917 + $0x1a] sm:$0xff]
    %v1691 = vld [vmem:[%s917 + $0x22] sm:$0xff]
    %v1692 = vld [vmem:[%s917 + $0x32] sm:$0xff]
    %v1693 = vld [vmem:[%s917 + $0x3a] sm:$0xff]
    %v1694 = vld [vmem:[%s917 + $0x4a] sm:$0xff]
    %v1695 = vld [vmem:[%s917 + $0x52] sm:$0xff]
    %v1696 = vld [vmem:[%s917 + $0x62] sm:$0xff]
    %v1697 = vld [vmem:[%s917 + $0x6a] sm:$0xff]
    %v1698 = vld [vmem:[%s917 + $0x7a] sm:$0xff]
    %v1699 = vld [vmem:[%s917 + $0x82] sm:$0xff]
    %v1700 = vld [vmem:[%s917 + $0x92] sm:$0xff]
    %v1701 = vld [vmem:[%s917 + $0x9a] sm:$0xff]
    %v1702 = vld [vmem:[%s917 + $0xaa] sm:$0xff]
    %v1703 = vld [vmem:[%s917 + $0xb2] sm:$0xff]
    %v1704 = vld [vmem:[%s917 + $0xc2] sm:$0xff]
    %v1705 = vld [vmem:[%s917 + $0xca] sm:$0xff]
    %v1706 = vld [vmem:[%s917 + $0xda] sm:$0xff]
    %v1707 = vld [vmem:[%s917 + $0xe2] sm:$0xff]
    %v1708 = vld [vmem:[%s917 + $0xf2] sm:$0xff]
    %v1709 = vld [vmem:[%s917 + $0xfa] sm:$0xff]
    %v1710 = vld [vmem:[%s917 + $0x10a] sm:$0xff]
    %v1711 = vld [vmem:[%s917 + $0x112] sm:$0xff]
    %v1712 = vld [vmem:[%s917 + $0x122] sm:$0xff]
    %v1713 = vld [vmem:[%s917 + $0x12a] sm:$0xff]
    %v1714 = vld [vmem:[%s917 + $0x13a] sm:$0xff]
    %v1715 = vld [vmem:[%s917 + $0x142] sm:$0xff]
    %v1716 = vld [vmem:[%s917 + $0x152] sm:$0xff]
    %v1717 = vld [vmem:[%s917 + $0x15a] sm:$0xff]
    %v1718 = vld [vmem:[%s917 + $0x16a] sm:$0xff]
    %v1719 = vld [vmem:[%s917 + $0x172] sm:$0xff]
    %v1720 = vld [vmem:[%s917 + $0x1b2] sm:$0xff]
    %v1721 = vld [vmem:[%s917 + $0x1ba] sm:$0xff]
    %v1722 = vld [vmem:[%s917 + $0x1ca] sm:$0xff]
    %v1723 = vld [vmem:[%s917 + $0x1d2] sm:$0xff]
    %v1724 = vld [vmem:[%s917 + $0x1e2] sm:$0xff]
    %v1725 = vld [vmem:[%s917 + $0x1ea] sm:$0xff]
    %v1726 = vld [vmem:[%s917 + $0x1fa] sm:$0xff]
    %v1727 = vld [vmem:[%s917 + $0x202] sm:$0xff]
    %v1728 = vld [vmem:[%s917 + $0x212] sm:$0xff]
    %v1729 = vld [vmem:[%s917 + $0x21a] sm:$0xff]
    %v1730 = vld [vmem:[%s917 + $0x22a] sm:$0xff]
    %v1731 = vld [vmem:[%s917 + $0x232] sm:$0xff]
    %v1732 = vld [vmem:[%s917 + $0x242] sm:$0xff]
    %v1733 = vld [vmem:[%s917 + $0x24a] sm:$0xff]
    %v1734 = vld [vmem:[%s917 + $0x25a] sm:$0xff]
    %v1735 = vld [vmem:[%s917 + $0x262] sm:$0xff]
    %v1736 = vld [vmem:[%s917 + $0x272] sm:$0xff]
    %v1737 = vld [vmem:[%s917 + $0x27a] sm:$0xff]
    %v1738 = vld [vmem:[%s917 + $0x28a] sm:$0xff]
    %v1739 = vld [vmem:[%s917 + $0x292] sm:$0xff]
    %v1740 = vld [vmem:[%s917 + $0x2a2] sm:$0xff]
    %v1741 = vld [vmem:[%s917 + $0x2aa] sm:$0xff]
    %v1742 = vld [vmem:[%s917 + $0x2ba] sm:$0xff]
    %v1743 = vld [vmem:[%s917 + $0x2c2] sm:$0xff]
    %v1744 = vld [vmem:[%s917 + $0x2d2] sm:$0xff]
    %v1745 = vld [vmem:[%s917 + $0x2da] sm:$0xff]
    %v1746 = vld [vmem:[%s917 + $0x2ea] sm:$0xff]
    %v1747 = vld [vmem:[%s917 + $0x2f2] sm:$0xff]
    %v1748 = vld [vmem:[%s917 + $0x302] sm:$0xff]
    %v1749 = vld [vmem:[%s917 + $0x30a] sm:$0xff]
    %v1750 = vld [vmem:[%s917 + $0x31a] sm:$0xff]
    %v1751 = vld [vmem:[%s917 + $0x322] sm:$0xff]
    %1816 = vrot.lane.b32.xlu0 %v1688, 20
    %v1817 = vpop.permute.xlu0 %1816
    %1818 = vrot.lane.b32.xlu0 %v1689, 20
    %v1819 = vpop.permute.xlu0 %1818
    %1820 = vrot.lane.b32.xlu0 %v1690, 20
    %v1821 = vpop.permute.xlu0 %1820
    %1822 = vrot.lane.b32.xlu0 %v1691, 20
    %v1823 = vpop.permute.xlu0 %1822
    %1824 = vrot.lane.b32.xlu0 %v1692, 20
    %v1825 = vpop.permute.xlu0 %1824
    %1826 = vrot.lane.b32.xlu0 %v1693, 20
    %v1827 = vpop.permute.xlu0 %1826
    %1828 = vrot.lane.b32.xlu0 %v1694, 20
    %v1829 = vpop.permute.xlu0 %1828
    %1830 = vrot.lane.b32.xlu0 %v1695, 20
    %v1831 = vpop.permute.xlu0 %1830
    %1832 = vrot.lane.b32.xlu0 %v1696, 20
    %v1833 = vpop.permute.xlu0 %1832
    %1834 = vrot.lane.b32.xlu0 %v1697, 20
    %v1835 = vpop.permute.xlu0 %1834
    %1836 = vrot.lane.b32.xlu0 %v1698, 20
    %v1837 = vpop.permute.xlu0 %1836
    %1838 = vrot.lane.b32.xlu0 %v1699, 20
    %v1839 = vpop.permute.xlu0 %1838
    %1840 = vrot.lane.b32.xlu0 %v1700, 20
    %v1841 = vpop.permute.xlu0 %1840
    %1842 = vrot.lane.b32.xlu0 %v1701, 20
    %v1843 = vpop.permute.xlu0 %1842
    %1844 = vrot.lane.b32.xlu0 %v1702, 20
    %v1845 = vpop.permute.xlu0 %1844
    %1846 = vrot.lane.b32.xlu0 %v1703, 20
    %v1847 = vpop.permute.xlu0 %1846
    %1848 = vrot.lane.b32.xlu0 %v1704, 20
    %v1849 = vpop.permute.xlu0 %1848
    %1850 = vrot.lane.b32.xlu0 %v1705, 20
    %v1851 = vpop.permute.xlu0 %1850
    %1852 = vrot.lane.b32.xlu0 %v1706, 20
    %v1853 = vpop.permute.xlu0 %1852
    %1854 = vrot.lane.b32.xlu0 %v1707, 20
    %v1855 = vpop.permute.xlu0 %1854
    %1856 = vrot.lane.b32.xlu0 %v1708, 20
    %v1857 = vpop.permute.xlu0 %1856
    %1858 = vrot.lane.b32.xlu0 %v1709, 20
    %v1859 = vpop.permute.xlu0 %1858
    %1860 = vrot.lane.b32.xlu0 %v1710, 20
    %v1861 = vpop.permute.xlu0 %1860
    %1862 = vrot.lane.b32.xlu0 %v1711, 20
    %v1863 = vpop.permute.xlu0 %1862
    %1864 = vrot.lane.b32.xlu0 %v1712, 20
    %v1865 = vpop.permute.xlu0 %1864
    %1866 = vrot.lane.b32.xlu0 %v1713, 20
    %v1867 = vpop.permute.xlu0 %1866
    %1868 = vrot.lane.b32.xlu0 %v1714, 20
    %v1869 = vpop.permute.xlu0 %1868
    %1870 = vrot.lane.b32.xlu0 %v1715, 20
    %v1871 = vpop.permute.xlu0 %1870
    %1872 = vrot.lane.b32.xlu0 %v1716, 20
    %v1873 = vpop.permute.xlu0 %1872
    %1874 = vrot.lane.b32.xlu0 %v1717, 20
    %v1875 = vpop.permute.xlu0 %1874
    %1876 = vrot.lane.b32.xlu0 %v1718, 20
    %v1877 = vpop.permute.xlu0 %1876
    %1878 = vrot.lane.b32.xlu0 %v1719, 20
    %v1879 = vpop.permute.xlu0 %1878
    %1880 = vrot.lane.b32.xlu0 %v1720, 20
    %v1881 = vpop.permute.xlu0 %1880
    %1882 = vrot.lane.b32.xlu0 %v1721, 20
    %v1883 = vpop.permute.xlu0 %1882
    %1884 = vrot.lane.b32.xlu0 %v1722, 20
    %v1885 = vpop.permute.xlu0 %1884
    %1886 = vrot.lane.b32.xlu0 %v1723, 20
    %v1887 = vpop.permute.xlu0 %1886
    %1888 = vrot.lane.b32.xlu0 %v1724, 20
    %v1889 = vpop.permute.xlu0 %1888
    %1890 = vrot.lane.b32.xlu0 %v1725, 20
    %v1891 = vpop.permute.xlu0 %1890
    %1892 = vrot.lane.b32.xlu0 %v1726, 20
    %v1893 = vpop.permute.xlu0 %1892
    %1894 = vrot.lane.b32.xlu0 %v1727, 20
    %v1895 = vpop.permute.xlu0 %1894
    %1896 = vrot.lane.b32.xlu0 %v1728, 20
    %v1897 = vpop.permute.xlu0 %1896
    %1898 = vrot.lane.b32.xlu0 %v1729, 20
    %v1899 = vpop.permute.xlu0 %1898
    %1900 = vrot.lane.b32.xlu0 %v1730, 20
    %v1901 = vpop.permute.xlu0 %1900
    %1902 = vrot.lane.b32.xlu0 %v1731, 20
    %v1903 = vpop.permute.xlu0 %1902
    %1904 = vrot.lane.b32.xlu0 %v1732, 20
    %v1905 = vpop.permute.xlu0 %1904
    %1906 = vrot.lane.b32.xlu0 %v1733, 20
    %v1907 = vpop.permute.xlu0 %1906
    %1908 = vrot.lane.b32.xlu0 %v1734, 20
    %v1909 = vpop.permute.xlu0 %1908
    %1910 = vrot.lane.b32.xlu0 %v1735, 20
    %v1911 = vpop.permute.xlu0 %1910
    %1912 = vrot.lane.b32.xlu0 %v1736, 20
    %v1913 = vpop.permute.xlu0 %1912
    %1914 = vrot.lane.b32.xlu0 %v1737, 20
    %v1915 = vpop.permute.xlu0 %1914
    %1916 = vrot.lane.b32.xlu0 %v1738, 20
    %v1917 = vpop.permute.xlu0 %1916
    %1918 = vrot.lane.b32.xlu0 %v1739, 20
    %v1919 = vpop.permute.xlu0 %1918
    %1920 = vrot.lane.b32.xlu0 %v1740, 20
    %v1921 = vpop.permute.xlu0 %1920
    %1922 = vrot.lane.b32.xlu0 %v1741, 20
    %v1923 = vpop.permute.xlu0 %1922
    %1924 = vrot.lane.b32.xlu0 %v1742, 20
    %v1925 = vpop.permute.xlu0 %1924
    %1926 = vrot.lane.b32.xlu0 %v1743, 20
    %v1927 = vpop.permute.xlu0 %1926
    %1928 = vrot.lane.b32.xlu0 %v1744, 20
    %v1929 = vpop.permute.xlu0 %1928
    %1930 = vrot.lane.b32.xlu0 %v1745, 20
    %v1931 = vpop.permute.xlu0 %1930
    %1932 = vrot.lane.b32.xlu0 %v1746, 20
    %v1933 = vpop.permute.xlu0 %1932
    %1934 = vrot.lane.b32.xlu0 %v1747, 20
    %v1935 = vpop.permute.xlu0 %1934
    %1936 = vrot.lane.b32.xlu0 %v1748, 20
    %v1937 = vpop.permute.xlu0 %1936
    %1938 = vrot.lane.b32.xlu0 %v1749, 20
    %v1939 = vpop.permute.xlu0 %1938
    %1940 = vrot.lane.b32.xlu0 %v1750, 20
    %v1941 = vpop.permute.xlu0 %1940
    %1942 = vrot.lane.b32.xlu0 %v1751, 20
    %v1943 = vpop.permute.xlu0 %1942
    %vm2008 = vcmask 195744
    %2009 = vst.msk [vmem:[#allocation2] sm:$0xff] %vm2008, %v1817
    %2010 = vst.msk [vmem:[#allocation2 + $0x8] sm:$0xff] %vm2008, %v1819
    %2011 = vst.msk [vmem:[#allocation2 + $0x10] sm:$0xff] %vm2008, %v1821
    %2012 = vst.msk [vmem:[#allocation2 + $0x18] sm:$0xff] %vm2008, %v1823
    %2013 = vst.msk [vmem:[#allocation2 + $0x20] sm:$0xff] %vm2008, %v1825
    %2014 = vst.msk [vmem:[#allocation2 + $0x28] sm:$0xff] %vm2008, %v1827
    %2015 = vst.msk [vmem:[#allocation2 + $0x30] sm:$0xff] %vm2008, %v1829
    %2016 = vst.msk [vmem:[#allocation2 + $0x38] sm:$0xff] %vm2008, %v1831
    %2017 = vst.msk [vmem:[#allocation2 + $0x40] sm:$0xff] %vm2008, %v1833
    %2018 = vst.msk [vmem:[#allocation2 + $0x48] sm:$0xff] %vm2008, %v1835
    %2019 = vst.msk [vmem:[#allocation2 + $0x50] sm:$0xff] %vm2008, %v1837
    %2020 = vst.msk [vmem:[#allocation2 + $0x58] sm:$0xff] %vm2008, %v1839
    %2021 = vst.msk [vmem:[#allocation2 + $0x60] sm:$0xff] %vm2008, %v1841
    %2022 = vst.msk [vmem:[#allocation2 + $0x68] sm:$0xff] %vm2008, %v1843
    %2023 = vst.msk [vmem:[#allocation2 + $0x70] sm:$0xff] %vm2008, %v1845
    %2024 = vst.msk [vmem:[#allocation2 + $0x78] sm:$0xff] %vm2008, %v1847
    %2025 = vst.msk [vmem:[#allocation2 + $0x80] sm:$0xff] %vm2008, %v1849
    %2026 = vst.msk [vmem:[#allocation2 + $0x88] sm:$0xff] %vm2008, %v1851
    %2027 = vst.msk [vmem:[#allocation2 + $0x90] sm:$0xff] %vm2008, %v1853
    %2028 = vst.msk [vmem:[#allocation2 + $0x98] sm:$0xff] %vm2008, %v1855
    %2029 = vst.msk [vmem:[#allocation2 + $0xa0] sm:$0xff] %vm2008, %v1857
    %2030 = vst.msk [vmem:[#allocation2 + $0xa8] sm:$0xff] %vm2008, %v1859
    %2031 = vst.msk [vmem:[#allocation2 + $0xb0] sm:$0xff] %vm2008, %v1861
    %2032 = vst.msk [vmem:[#allocation2 + $0xb8] sm:$0xff] %vm2008, %v1863
    %2033 = vst.msk [vmem:[#allocation2 + $0xc0] sm:$0xff] %vm2008, %v1865
    %2034 = vst.msk [vmem:[#allocation2 + $0xc8] sm:$0xff] %vm2008, %v1867
    %2035 = vst.msk [vmem:[#allocation2 + $0xd0] sm:$0xff] %vm2008, %v1869
    %2036 = vst.msk [vmem:[#allocation2 + $0xd8] sm:$0xff] %vm2008, %v1871
    %2037 = vst.msk [vmem:[#allocation2 + $0xe0] sm:$0xff] %vm2008, %v1873
    %2038 = vst.msk [vmem:[#allocation2 + $0xe8] sm:$0xff] %vm2008, %v1875
    %2039 = vst.msk [vmem:[#allocation2 + $0xf0] sm:$0xff] %vm2008, %v1877
    %2040 = vst.msk [vmem:[#allocation2 + $0xf8] sm:$0xff] %vm2008, %v1879
    %2041 = vst.msk [vmem:[#allocation2 + $0x100] sm:$0xff] %vm2008, %v1881
    %2042 = vst.msk [vmem:[#allocation2 + $0x108] sm:$0xff] %vm2008, %v1883
    %2043 = vst.msk [vmem:[#allocation2 + $0x110] sm:$0xff] %vm2008, %v1885
    %2044 = vst.msk [vmem:[#allocation2 + $0x118] sm:$0xff] %vm2008, %v1887
    %2045 = vst.msk [vmem:[#allocation2 + $0x120] sm:$0xff] %vm2008, %v1889
    %2046 = vst.msk [vmem:[#allocation2 + $0x128] sm:$0xff] %vm2008, %v1891
    %2047 = vst.msk [vmem:[#allocation2 + $0x130] sm:$0xff] %vm2008, %v1893
    %2048 = vst.msk [vmem:[#allocation2 + $0x138] sm:$0xff] %vm2008, %v1895
    %2049 = vst.msk [vmem:[#allocation2 + $0x140] sm:$0xff] %vm2008, %v1897
    %2050 = vst.msk [vmem:[#allocation2 + $0x148] sm:$0xff] %vm2008, %v1899
    %2051 = vst.msk [vmem:[#allocation2 + $0x150] sm:$0xff] %vm2008, %v1901
    %2052 = vst.msk [vmem:[#allocation2 + $0x158] sm:$0xff] %vm2008, %v1903
    %2053 = vst.msk [vmem:[#allocation2 + $0x160] sm:$0xff] %vm2008, %v1905
    %2054 = vst.msk [vmem:[#allocation2 + $0x168] sm:$0xff] %vm2008, %v1907
    %2055 = vst.msk [vmem:[#allocation2 + $0x170] sm:$0xff] %vm2008, %v1909
    %2056 = vst.msk [vmem:[#allocation2 + $0x178] sm:$0xff] %vm2008, %v1911
    %2057 = vst.msk [vmem:[#allocation2 + $0x180] sm:$0xff] %vm2008, %v1913
    %2058 = vst.msk [vmem:[#allocation2 + $0x188] sm:$0xff] %vm2008, %v1915
    %2059 = vst.msk [vmem:[#allocation2 + $0x190] sm:$0xff] %vm2008, %v1917
    %2060 = vst.msk [vmem:[#allocation2 + $0x198] sm:$0xff] %vm2008, %v1919
    %2061 = vst.msk [vmem:[#allocation2 + $0x1a0] sm:$0xff] %vm2008, %v1921
    %2062 = vst.msk [vmem:[#allocation2 + $0x1a8] sm:$0xff] %vm2008, %v1923
    %2063 = vst.msk [vmem:[#allocation2 + $0x1b0] sm:$0xff] %vm2008, %v1925
    %2064 = vst.msk [vmem:[#allocation2 + $0x1b8] sm:$0xff] %vm2008, %v1927
    %2065 = vst.msk [vmem:[#allocation2 + $0x1c0] sm:$0xff] %vm2008, %v1929
    %2066 = vst.msk [vmem:[#allocation2 + $0x1c8] sm:$0xff] %vm2008, %v1931
    %2067 = vst.msk [vmem:[#allocation2 + $0x1d0] sm:$0xff] %vm2008, %v1933
    %2068 = vst.msk [vmem:[#allocation2 + $0x1d8] sm:$0xff] %vm2008, %v1935
    %2069 = vst.msk [vmem:[#allocation2 + $0x1e0] sm:$0xff] %vm2008, %v1937
    %2070 = vst.msk [vmem:[#allocation2 + $0x1e8] sm:$0xff] %vm2008, %v1939
    %2071 = vst.msk [vmem:[#allocation2 + $0x1f0] sm:$0xff] %vm2008, %v1941
    %2072 = vst.msk [vmem:[#allocation2 + $0x1f8] sm:$0xff] %vm2008, %v1943
    %s2073 = scalar_lea.vmem %s0, 48
    %v2074 = vld [vmem:[%s2073] sm:$0xff]
    %v2075 = vld [vmem:[%s2073 + $0x8] sm:$0xff]
    %v2076 = vld [vmem:[%s2073 + $0x18] sm:$0xff]
    %v2077 = vld [vmem:[%s2073 + $0x20] sm:$0xff]
    %v2078 = vld [vmem:[%s2073 + $0x30] sm:$0xff]
    %v2079 = vld [vmem:[%s2073 + $0x38] sm:$0xff]
    %v2080 = vld [vmem:[%s2073 + $0x48] sm:$0xff]
    %v2081 = vld [vmem:[%s2073 + $0x50] sm:$0xff]
    %v2082 = vld [vmem:[%s2073 + $0x60] sm:$0xff]
    %v2083 = vld [vmem:[%s2073 + $0x68] sm:$0xff]
    %v2084 = vld [vmem:[%s2073 + $0x78] sm:$0xff]
    %v2085 = vld [vmem:[%s2073 + $0x80] sm:$0xff]
    %v2086 = vld [vmem:[%s2073 + $0x90] sm:$0xff]
    %v2087 = vld [vmem:[%s2073 + $0x98] sm:$0xff]
    %v2088 = vld [vmem:[%s2073 + $0xa8] sm:$0xff]
    %v2089 = vld [vmem:[%s2073 + $0xb0] sm:$0xff]
    %v2090 = vld [vmem:[%s2073 + $0xc0] sm:$0xff]
    %v2091 = vld [vmem:[%s2073 + $0xc8] sm:$0xff]
    %v2092 = vld [vmem:[%s2073 + $0xd8] sm:$0xff]
    %v2093 = vld [vmem:[%s2073 + $0xe0] sm:$0xff]
    %v2094 = vld [vmem:[%s2073 + $0xf0] sm:$0xff]
    %v2095 = vld [vmem:[%s2073 + $0xf8] sm:$0xff]
    %v2096 = vld [vmem:[%s2073 + $0x108] sm:$0xff]
    %v2097 = vld [vmem:[%s2073 + $0x110] sm:$0xff]
    %v2098 = vld [vmem:[%s2073 + $0x120] sm:$0xff]
    %v2099 = vld [vmem:[%s2073 + $0x128] sm:$0xff]
    %v2100 = vld [vmem:[%s2073 + $0x138] sm:$0xff]
    %v2101 = vld [vmem:[%s2073 + $0x140] sm:$0xff]
    %v2102 = vld [vmem:[%s2073 + $0x150] sm:$0xff]
    %v2103 = vld [vmem:[%s2073 + $0x158] sm:$0xff]
    %v2104 = vld [vmem:[%s2073 + $0x168] sm:$0xff]
    %v2105 = vld [vmem:[%s2073 + $0x170] sm:$0xff]
    %v2106 = vld [vmem:[%s2073 + $0x1b0] sm:$0xff]
    %v2107 = vld [vmem:[%s2073 + $0x1b8] sm:$0xff]
    %v2108 = vld [vmem:[%s2073 + $0x1c8] sm:$0xff]
    %v2109 = vld [vmem:[%s2073 + $0x1d0] sm:$0xff]
    %v2110 = vld [vmem:[%s2073 + $0x1e0] sm:$0xff]
    %v2111 = vld [vmem:[%s2073 + $0x1e8] sm:$0xff]
    %v2112 = vld [vmem:[%s2073 + $0x1f8] sm:$0xff]
    %v2113 = vld [vmem:[%s2073 + $0x200] sm:$0xff]
    %v2114 = vld [vmem:[%s2073 + $0x210] sm:$0xff]
    %v2115 = vld [vmem:[%s2073 + $0x218] sm:$0xff]
    %v2116 = vld [vmem:[%s2073 + $0x228] sm:$0xff]
    %v2117 = vld [vmem:[%s2073 + $0x230] sm:$0xff]
    %v2118 = vld [vmem:[%s2073 + $0x240] sm:$0xff]
    %v2119 = vld [vmem:[%s2073 + $0x248] sm:$0xff]
    %v2120 = vld [vmem:[%s2073 + $0x258] sm:$0xff]
    %v2121 = vld [vmem:[%s2073 + $0x260] sm:$0xff]
    %v2122 = vld [vmem:[%s2073 + $0x270] sm:$0xff]
    %v2123 = vld [vmem:[%s2073 + $0x278] sm:$0xff]
    %v2124 = vld [vmem:[%s2073 + $0x288] sm:$0xff]
    %v2125 = vld [vmem:[%s2073 + $0x290] sm:$0xff]
    %v2126 = vld [vmem:[%s2073 + $0x2a0] sm:$0xff]
    %v2127 = vld [vmem:[%s2073 + $0x2a8] sm:$0xff]
    %v2128 = vld [vmem:[%s2073 + $0x2b8] sm:$0xff]
    %v2129 = vld [vmem:[%s2073 + $0x2c0] sm:$0xff]
    %v2130 = vld [vmem:[%s2073 + $0x2d0] sm:$0xff]
    %v2131 = vld [vmem:[%s2073 + $0x2d8] sm:$0xff]
    %v2132 = vld [vmem:[%s2073 + $0x2e8] sm:$0xff]
    %v2133 = vld [vmem:[%s2073 + $0x2f0] sm:$0xff]
    %v2134 = vld [vmem:[%s2073 + $0x300] sm:$0xff]
    %v2135 = vld [vmem:[%s2073 + $0x308] sm:$0xff]
    %v2136 = vld [vmem:[%s2073 + $0x318] sm:$0xff]
    %v2137 = vld [vmem:[%s2073 + $0x320] sm:$0xff]
    %2202 = vrot.lane.b32.xlu0 %v2074, 24
    %v2203 = vpop.permute.xlu0 %2202
    %2204 = vrot.lane.b32.xlu0 %v2075, 24
    %v2205 = vpop.permute.xlu0 %2204
    %2206 = vrot.lane.b32.xlu0 %v2076, 24
    %v2207 = vpop.permute.xlu0 %2206
    %2208 = vrot.lane.b32.xlu0 %v2077, 24
    %v2209 = vpop.permute.xlu0 %2208
    %2210 = vrot.lane.b32.xlu0 %v2078, 24
    %v2211 = vpop.permute.xlu0 %2210
    %2212 = vrot.lane.b32.xlu0 %v2079, 24
    %v2213 = vpop.permute.xlu0 %2212
    %2214 = vrot.lane.b32.xlu0 %v2080, 24
    %v2215 = vpop.permute.xlu0 %2214
    %2216 = vrot.lane.b32.xlu0 %v2081, 24
    %v2217 = vpop.permute.xlu0 %2216
    %2218 = vrot.lane.b32.xlu0 %v2082, 24
    %v2219 = vpop.permute.xlu0 %2218
    %2220 = vrot.lane.b32.xlu0 %v2083, 24
    %v2221 = vpop.permute.xlu0 %2220
    %2222 = vrot.lane.b32.xlu0 %v2084, 24
    %v2223 = vpop.permute.xlu0 %2222
    %2224 = vrot.lane.b32.xlu0 %v2085, 24
    %v2225 = vpop.permute.xlu0 %2224
    %2226 = vrot.lane.b32.xlu0 %v2086, 24
    %v2227 = vpop.permute.xlu0 %2226
    %2228 = vrot.lane.b32.xlu0 %v2087, 24
    %v2229 = vpop.permute.xlu0 %2228
    %2230 = vrot.lane.b32.xlu0 %v2088, 24
    %v2231 = vpop.permute.xlu0 %2230
    %2232 = vrot.lane.b32.xlu0 %v2089, 24
    %v2233 = vpop.permute.xlu0 %2232
    %2234 = vrot.lane.b32.xlu0 %v2090, 24
    %v2235 = vpop.permute.xlu0 %2234
    %2236 = vrot.lane.b32.xlu0 %v2091, 24
    %v2237 = vpop.permute.xlu0 %2236
    %2238 = vrot.lane.b32.xlu0 %v2092, 24
    %v2239 = vpop.permute.xlu0 %2238
    %2240 = vrot.lane.b32.xlu0 %v2093, 24
    %v2241 = vpop.permute.xlu0 %2240
    %2242 = vrot.lane.b32.xlu0 %v2094, 24
    %v2243 = vpop.permute.xlu0 %2242
    %2244 = vrot.lane.b32.xlu0 %v2095, 24
    %v2245 = vpop.permute.xlu0 %2244
    %2246 = vrot.lane.b32.xlu0 %v2096, 24
    %v2247 = vpop.permute.xlu0 %2246
    %2248 = vrot.lane.b32.xlu0 %v2097, 24
    %v2249 = vpop.permute.xlu0 %2248
    %2250 = vrot.lane.b32.xlu0 %v2098, 24
    %v2251 = vpop.permute.xlu0 %2250
    %2252 = vrot.lane.b32.xlu0 %v2099, 24
    %v2253 = vpop.permute.xlu0 %2252
    %2254 = vrot.lane.b32.xlu0 %v2100, 24
    %v2255 = vpop.permute.xlu0 %2254
    %2256 = vrot.lane.b32.xlu0 %v2101, 24
    %v2257 = vpop.permute.xlu0 %2256
    %2258 = vrot.lane.b32.xlu0 %v2102, 24
    %v2259 = vpop.permute.xlu0 %2258
    %2260 = vrot.lane.b32.xlu0 %v2103, 24
    %v2261 = vpop.permute.xlu0 %2260
    %2262 = vrot.lane.b32.xlu0 %v2104, 24
    %v2263 = vpop.permute.xlu0 %2262
    %2264 = vrot.lane.b32.xlu0 %v2105, 24
    %v2265 = vpop.permute.xlu0 %2264
    %2266 = vrot.lane.b32.xlu0 %v2106, 24
    %v2267 = vpop.permute.xlu0 %2266
    %2268 = vrot.lane.b32.xlu0 %v2107, 24
    %v2269 = vpop.permute.xlu0 %2268
    %2270 = vrot.lane.b32.xlu0 %v2108, 24
    %v2271 = vpop.permute.xlu0 %2270
    %2272 = vrot.lane.b32.xlu0 %v2109, 24
    %v2273 = vpop.permute.xlu0 %2272
    %2274 = vrot.lane.b32.xlu0 %v2110, 24
    %v2275 = vpop.permute.xlu0 %2274
    %2276 = vrot.lane.b32.xlu0 %v2111, 24
    %v2277 = vpop.permute.xlu0 %2276
    %2278 = vrot.lane.b32.xlu0 %v2112, 24
    %v2279 = vpop.permute.xlu0 %2278
    %2280 = vrot.lane.b32.xlu0 %v2113, 24
    %v2281 = vpop.permute.xlu0 %2280
    %2282 = vrot.lane.b32.xlu0 %v2114, 24
    %v2283 = vpop.permute.xlu0 %2282
    %2284 = vrot.lane.b32.xlu0 %v2115, 24
    %v2285 = vpop.permute.xlu0 %2284
    %2286 = vrot.lane.b32.xlu0 %v2116, 24
    %v2287 = vpop.permute.xlu0 %2286
    %2288 = vrot.lane.b32.xlu0 %v2117, 24
    %v2289 = vpop.permute.xlu0 %2288
    %2290 = vrot.lane.b32.xlu0 %v2118, 24
    %v2291 = vpop.permute.xlu0 %2290
    %2292 = vrot.lane.b32.xlu0 %v2119, 24
    %v2293 = vpop.permute.xlu0 %2292
    %2294 = vrot.lane.b32.xlu0 %v2120, 24
    %v2295 = vpop.permute.xlu0 %2294
    %2296 = vrot.lane.b32.xlu0 %v2121, 24
    %v2297 = vpop.permute.xlu0 %2296
    %2298 = vrot.lane.b32.xlu0 %v2122, 24
    %v2299 = vpop.permute.xlu0 %2298
    %2300 = vrot.lane.b32.xlu0 %v2123, 24
    %v2301 = vpop.permute.xlu0 %2300
    %2302 = vrot.lane.b32.xlu0 %v2124, 24
    %v2303 = vpop.permute.xlu0 %2302
    %2304 = vrot.lane.b32.xlu0 %v2125, 24
    %v2305 = vpop.permute.xlu0 %2304
    %2306 = vrot.lane.b32.xlu0 %v2126, 24
    %v2307 = vpop.permute.xlu0 %2306
    %2308 = vrot.lane.b32.xlu0 %v2127, 24
    %v2309 = vpop.permute.xlu0 %2308
    %2310 = vrot.lane.b32.xlu0 %v2128, 24
    %v2311 = vpop.permute.xlu0 %2310
    %2312 = vrot.lane.b32.xlu0 %v2129, 24
    %v2313 = vpop.permute.xlu0 %2312
    %2314 = vrot.lane.b32.xlu0 %v2130, 24
    %v2315 = vpop.permute.xlu0 %2314
    %2316 = vrot.lane.b32.xlu0 %v2131, 24
    %v2317 = vpop.permute.xlu0 %2316
    %2318 = vrot.lane.b32.xlu0 %v2132, 24
    %v2319 = vpop.permute.xlu0 %2318
    %2320 = vrot.lane.b32.xlu0 %v2133, 24
    %v2321 = vpop.permute.xlu0 %2320
    %2322 = vrot.lane.b32.xlu0 %v2134, 24
    %v2323 = vpop.permute.xlu0 %2322
    %2324 = vrot.lane.b32.xlu0 %v2135, 24
    %v2325 = vpop.permute.xlu0 %2324
    %2326 = vrot.lane.b32.xlu0 %v2136, 24
    %v2327 = vpop.permute.xlu0 %2326
    %2328 = vrot.lane.b32.xlu0 %v2137, 24
    %v2329 = vpop.permute.xlu0 %2328
    %vm2394 = vcmask 228544
    %2395 = vst.msk [vmem:[#allocation2] sm:$0xff] %vm2394, %v2203
    %2396 = vst.msk [vmem:[#allocation2 + $0x8] sm:$0xff] %vm2394, %v2205
    %2397 = vst.msk [vmem:[#allocation2 + $0x10] sm:$0xff] %vm2394, %v2207
    %2398 = vst.msk [vmem:[#allocation2 + $0x18] sm:$0xff] %vm2394, %v2209
    %2399 = vst.msk [vmem:[#allocation2 + $0x20] sm:$0xff] %vm2394, %v2211
    %2400 = vst.msk [vmem:[#allocation2 + $0x28] sm:$0xff] %vm2394, %v2213
    %2401 = vst.msk [vmem:[#allocation2 + $0x30] sm:$0xff] %vm2394, %v2215
    %2402 = vst.msk [vmem:[#allocation2 + $0x38] sm:$0xff] %vm2394, %v2217
    %2403 = vst.msk [vmem:[#allocation2 + $0x40] sm:$0xff] %vm2394, %v2219
    %2404 = vst.msk [vmem:[#allocation2 + $0x48] sm:$0xff] %vm2394, %v2221
    %2405 = vst.msk [vmem:[#allocation2 + $0x50] sm:$0xff] %vm2394, %v2223
    %2406 = vst.msk [vmem:[#allocation2 + $0x58] sm:$0xff] %vm2394, %v2225
    %2407 = vst.msk [vmem:[#allocation2 + $0x60] sm:$0xff] %vm2394, %v2227
    %2408 = vst.msk [vmem:[#allocation2 + $0x68] sm:$0xff] %vm2394, %v2229
    %2409 = vst.msk [vmem:[#allocation2 + $0x70] sm:$0xff] %vm2394, %v2231
    %2410 = vst.msk [vmem:[#allocation2 + $0x78] sm:$0xff] %vm2394, %v2233
    %2411 = vst.msk [vmem:[#allocation2 + $0x80] sm:$0xff] %vm2394, %v2235
    %2412 = vst.msk [vmem:[#allocation2 + $0x88] sm:$0xff] %vm2394, %v2237
    %2413 = vst.msk [vmem:[#allocation2 + $0x90] sm:$0xff] %vm2394, %v2239
    %2414 = vst.msk [vmem:[#allocation2 + $0x98] sm:$0xff] %vm2394, %v2241
    %2415 = vst.msk [vmem:[#allocation2 + $0xa0] sm:$0xff] %vm2394, %v2243
    %2416 = vst.msk [vmem:[#allocation2 + $0xa8] sm:$0xff] %vm2394, %v2245
    %2417 = vst.msk [vmem:[#allocation2 + $0xb0] sm:$0xff] %vm2394, %v2247
    %2418 = vst.msk [vmem:[#allocation2 + $0xb8] sm:$0xff] %vm2394, %v2249
    %2419 = vst.msk [vmem:[#allocation2 + $0xc0] sm:$0xff] %vm2394, %v2251
    %2420 = vst.msk [vmem:[#allocation2 + $0xc8] sm:$0xff] %vm2394, %v2253
    %2421 = vst.msk [vmem:[#allocation2 + $0xd0] sm:$0xff] %vm2394, %v2255
    %2422 = vst.msk [vmem:[#allocation2 + $0xd8] sm:$0xff] %vm2394, %v2257
    %2423 = vst.msk [vmem:[#allocation2 + $0xe0] sm:$0xff] %vm2394, %v2259
    %2424 = vst.msk [vmem:[#allocation2 + $0xe8] sm:$0xff] %vm2394, %v2261
    %2425 = vst.msk [vmem:[#allocation2 + $0xf0] sm:$0xff] %vm2394, %v2263
    %2426 = vst.msk [vmem:[#allocation2 + $0xf8] sm:$0xff] %vm2394, %v2265
    %2427 = vst.msk [vmem:[#allocation2 + $0x100] sm:$0xff] %vm2394, %v2267
    %2428 = vst.msk [vmem:[#allocation2 + $0x108] sm:$0xff] %vm2394, %v2269
    %2429 = vst.msk [vmem:[#allocation2 + $0x110] sm:$0xff] %vm2394, %v2271
    %2430 = vst.msk [vmem:[#allocation2 + $0x118] sm:$0xff] %vm2394, %v2273
    %2431 = vst.msk [vmem:[#allocation2 + $0x120] sm:$0xff] %vm2394, %v2275
    %2432 = vst.msk [vmem:[#allocation2 + $0x128] sm:$0xff] %vm2394, %v2277
    %2433 = vst.msk [vmem:[#allocation2 + $0x130] sm:$0xff] %vm2394, %v2279
    %2434 = vst.msk [vmem:[#allocation2 + $0x138] sm:$0xff] %vm2394, %v2281
    %2435 = vst.msk [vmem:[#allocation2 + $0x140] sm:$0xff] %vm2394, %v2283
    %2436 = vst.msk [vmem:[#allocation2 + $0x148] sm:$0xff] %vm2394, %v2285
    %2437 = vst.msk [vmem:[#allocation2 + $0x150] sm:$0xff] %vm2394, %v2287
    %2438 = vst.msk [vmem:[#allocation2 + $0x158] sm:$0xff] %vm2394, %v2289
    %2439 = vst.msk [vmem:[#allocation2 + $0x160] sm:$0xff] %vm2394, %v2291
    %2440 = vst.msk [vmem:[#allocation2 + $0x168] sm:$0xff] %vm2394, %v2293
    %2441 = vst.msk [vmem:[#allocation2 + $0x170] sm:$0xff] %vm2394, %v2295
    %2442 = vst.msk [vmem:[#allocation2 + $0x178] sm:$0xff] %vm2394, %v2297
    %2443 = vst.msk [vmem:[#allocation2 + $0x180] sm:$0xff] %vm2394, %v2299
    %2444 = vst.msk [vmem:[#allocation2 + $0x188] sm:$0xff] %vm2394, %v2301
    %2445 = vst.msk [vmem:[#allocation2 + $0x190] sm:$0xff] %vm2394, %v2303
    %2446 = vst.msk [vmem:[#allocation2 + $0x198] sm:$0xff] %vm2394, %v2305
    %2447 = vst.msk [vmem:[#allocation2 + $0x1a0] sm:$0xff] %vm2394, %v2307
    %2448 = vst.msk [vmem:[#allocation2 + $0x1a8] sm:$0xff] %vm2394, %v2309
    %2449 = vst.msk [vmem:[#allocation2 + $0x1b0] sm:$0xff] %vm2394, %v2311
    %2450 = vst.msk [vmem:[#allocation2 + $0x1b8] sm:$0xff] %vm2394, %v2313
    %2451 = vst.msk [vmem:[#allocation2 + $0x1c0] sm:$0xff] %vm2394, %v2315
    %2452 = vst.msk [vmem:[#allocation2 + $0x1c8] sm:$0xff] %vm2394, %v2317
    %2453 = vst.msk [vmem:[#allocation2 + $0x1d0] sm:$0xff] %vm2394, %v2319
    %2454 = vst.msk [vmem:[#allocation2 + $0x1d8] sm:$0xff] %vm2394, %v2321
    %2455 = vst.msk [vmem:[#allocation2 + $0x1e0] sm:$0xff] %vm2394, %v2323
    %2456 = vst.msk [vmem:[#allocation2 + $0x1e8] sm:$0xff] %vm2394, %v2325
    %2457 = vst.msk [vmem:[#allocation2 + $0x1f0] sm:$0xff] %vm2394, %v2327
    %2458 = vst.msk [vmem:[#allocation2 + $0x1f8] sm:$0xff] %vm2394, %v2329
    %v2459 = vld [vmem:[%s2073 + $0x1] sm:$0xff]
    %v2460 = vld [vmem:[%s2073 + $0x9] sm:$0xff]
    %v2461 = vld [vmem:[%s2073 + $0x19] sm:$0xff]
    %v2462 = vld [vmem:[%s2073 + $0x21] sm:$0xff]
    %v2463 = vld [vmem:[%s2073 + $0x31] sm:$0xff]
    %v2464 = vld [vmem:[%s2073 + $0x39] sm:$0xff]
    %v2465 = vld [vmem:[%s2073 + $0x49] sm:$0xff]
    %v2466 = vld [vmem:[%s2073 + $0x51] sm:$0xff]
    %v2467 = vld [vmem:[%s2073 + $0x61] sm:$0xff]
    %v2468 = vld [vmem:[%s2073 + $0x69] sm:$0xff]
    %v2469 = vld [vmem:[%s2073 + $0x79] sm:$0xff]
    %v2470 = vld [vmem:[%s2073 + $0x81] sm:$0xff]
    %v2471 = vld [vmem:[%s2073 + $0x91] sm:$0xff]
    %v2472 = vld [vmem:[%s2073 + $0x99] sm:$0xff]
    %v2473 = vld [vmem:[%s2073 + $0xa9] sm:$0xff]
    %v2474 = vld [vmem:[%s2073 + $0xb1] sm:$0xff]
    %v2475 = vld [vmem:[%s2073 + $0xc1] sm:$0xff]
    %v2476 = vld [vmem:[%s2073 + $0xc9] sm:$0xff]
    %v2477 = vld [vmem:[%s2073 + $0xd9] sm:$0xff]
    %v2478 = vld [vmem:[%s2073 + $0xe1] sm:$0xff]
    %v2479 = vld [vmem:[%s2073 + $0xf1] sm:$0xff]
    %v2480 = vld [vmem:[%s2073 + $0xf9] sm:$0xff]
    %v2481 = vld [vmem:[%s2073 + $0x109] sm:$0xff]
    %v2482 = vld [vmem:[%s2073 + $0x111] sm:$0xff]
    %v2483 = vld [vmem:[%s2073 + $0x121] sm:$0xff]
    %v2484 = vld [vmem:[%s2073 + $0x129] sm:$0xff]
    %v2485 = vld [vmem:[%s2073 + $0x139] sm:$0xff]
    %v2486 = vld [vmem:[%s2073 + $0x141] sm:$0xff]
    %v2487 = vld [vmem:[%s2073 + $0x151] sm:$0xff]
    %v2488 = vld [vmem:[%s2073 + $0x159] sm:$0xff]
    %v2489 = vld [vmem:[%s2073 + $0x169] sm:$0xff]
    %v2490 = vld [vmem:[%s2073 + $0x171] sm:$0xff]
    %v2491 = vld [vmem:[%s2073 + $0x1b1] sm:$0xff]
    %v2492 = vld [vmem:[%s2073 + $0x1b9] sm:$0xff]
    %v2493 = vld [vmem:[%s2073 + $0x1c9] sm:$0xff]
    %v2494 = vld [vmem:[%s2073 + $0x1d1] sm:$0xff]
    %v2495 = vld [vmem:[%s2073 + $0x1e1] sm:$0xff]
    %v2496 = vld [vmem:[%s2073 + $0x1e9] sm:$0xff]
    %v2497 = vld [vmem:[%s2073 + $0x1f9] sm:$0xff]
    %v2498 = vld [vmem:[%s2073 + $0x201] sm:$0xff]
    %v2499 = vld [vmem:[%s2073 + $0x211] sm:$0xff]
    %v2500 = vld [vmem:[%s2073 + $0x219] sm:$0xff]
    %v2501 = vld [vmem:[%s2073 + $0x229] sm:$0xff]
    %v2502 = vld [vmem:[%s2073 + $0x231] sm:$0xff]
    %v2503 = vld [vmem:[%s2073 + $0x241] sm:$0xff]
    %v2504 = vld [vmem:[%s2073 + $0x249] sm:$0xff]
    %v2505 = vld [vmem:[%s2073 + $0x259] sm:$0xff]
    %v2506 = vld [vmem:[%s2073 + $0x261] sm:$0xff]
    %v2507 = vld [vmem:[%s2073 + $0x271] sm:$0xff]
    %v2508 = vld [vmem:[%s2073 + $0x279] sm:$0xff]
    %v2509 = vld [vmem:[%s2073 + $0x289] sm:$0xff]
    %v2510 = vld [vmem:[%s2073 + $0x291] sm:$0xff]
    %v2511 = vld [vmem:[%s2073 + $0x2a1] sm:$0xff]
    %v2512 = vld [vmem:[%s2073 + $0x2a9] sm:$0xff]
    %v2513 = vld [vmem:[%s2073 + $0x2b9] sm:$0xff]
    %v2514 = vld [vmem:[%s2073 + $0x2c1] sm:$0xff]
    %v2515 = vld [vmem:[%s2073 + $0x2d1] sm:$0xff]
    %v2516 = vld [vmem:[%s2073 + $0x2d9] sm:$0xff]
    %v2517 = vld [vmem:[%s2073 + $0x2e9] sm:$0xff]
    %v2518 = vld [vmem:[%s2073 + $0x2f1] sm:$0xff]
    %v2519 = vld [vmem:[%s2073 + $0x301] sm:$0xff]
    %v2520 = vld [vmem:[%s2073 + $0x309] sm:$0xff]
    %v2521 = vld [vmem:[%s2073 + $0x319] sm:$0xff]
    %v2522 = vld [vmem:[%s2073 + $0x321] sm:$0xff]
    %2587 = vrot.lane.b32.xlu0 %v2459, 28
    %v2588 = vpop.permute.xlu0 %2587
    %2589 = vrot.lane.b32.xlu0 %v2460, 28
    %v2590 = vpop.permute.xlu0 %2589
    %2591 = vrot.lane.b32.xlu0 %v2461, 28
    %v2592 = vpop.permute.xlu0 %2591
    %2593 = vrot.lane.b32.xlu0 %v2462, 28
    %v2594 = vpop.permute.xlu0 %2593
    %2595 = vrot.lane.b32.xlu0 %v2463, 28
    %v2596 = vpop.permute.xlu0 %2595
    %2597 = vrot.lane.b32.xlu0 %v2464, 28
    %v2598 = vpop.permute.xlu0 %2597
    %2599 = vrot.lane.b32.xlu0 %v2465, 28
    %v2600 = vpop.permute.xlu0 %2599
    %2601 = vrot.lane.b32.xlu0 %v2466, 28
    %v2602 = vpop.permute.xlu0 %2601
    %2603 = vrot.lane.b32.xlu0 %v2467, 28
    %v2604 = vpop.permute.xlu0 %2603
    %2605 = vrot.lane.b32.xlu0 %v2468, 28
    %v2606 = vpop.permute.xlu0 %2605
    %2607 = vrot.lane.b32.xlu0 %v2469, 28
    %v2608 = vpop.permute.xlu0 %2607
    %2609 = vrot.lane.b32.xlu0 %v2470, 28
    %v2610 = vpop.permute.xlu0 %2609
    %2611 = vrot.lane.b32.xlu0 %v2471, 28
    %v2612 = vpop.permute.xlu0 %2611
    %2613 = vrot.lane.b32.xlu0 %v2472, 28
    %v2614 = vpop.permute.xlu0 %2613
    %2615 = vrot.lane.b32.xlu0 %v2473, 28
    %v2616 = vpop.permute.xlu0 %2615
    %2617 = vrot.lane.b32.xlu0 %v2474, 28
    %v2618 = vpop.permute.xlu0 %2617
    %2619 = vrot.lane.b32.xlu0 %v2475, 28
    %v2620 = vpop.permute.xlu0 %2619
    %2621 = vrot.lane.b32.xlu0 %v2476, 28
    %v2622 = vpop.permute.xlu0 %2621
    %2623 = vrot.lane.b32.xlu0 %v2477, 28
    %v2624 = vpop.permute.xlu0 %2623
    %2625 = vrot.lane.b32.xlu0 %v2478, 28
    %v2626 = vpop.permute.xlu0 %2625
    %2627 = vrot.lane.b32.xlu0 %v2479, 28
    %v2628 = vpop.permute.xlu0 %2627
    %2629 = vrot.lane.b32.xlu0 %v2480, 28
    %v2630 = vpop.permute.xlu0 %2629
    %2631 = vrot.lane.b32.xlu0 %v2481, 28
    %v2632 = vpop.permute.xlu0 %2631
    %2633 = vrot.lane.b32.xlu0 %v2482, 28
    %v2634 = vpop.permute.xlu0 %2633
    %2635 = vrot.lane.b32.xlu0 %v2483, 28
    %v2636 = vpop.permute.xlu0 %2635
    %2637 = vrot.lane.b32.xlu0 %v2484, 28
    %v2638 = vpop.permute.xlu0 %2637
    %2639 = vrot.lane.b32.xlu0 %v2485, 28
    %v2640 = vpop.permute.xlu0 %2639
    %2641 = vrot.lane.b32.xlu0 %v2486, 28
    %v2642 = vpop.permute.xlu0 %2641
    %2643 = vrot.lane.b32.xlu0 %v2487, 28
    %v2644 = vpop.permute.xlu0 %2643
    %2645 = vrot.lane.b32.xlu0 %v2488, 28
    %v2646 = vpop.permute.xlu0 %2645
    %2647 = vrot.lane.b32.xlu0 %v2489, 28
    %v2648 = vpop.permute.xlu0 %2647
    %2649 = vrot.lane.b32.xlu0 %v2490, 28
    %v2650 = vpop.permute.xlu0 %2649
    %2651 = vrot.lane.b32.xlu0 %v2491, 28
    %v2652 = vpop.permute.xlu0 %2651
    %2653 = vrot.lane.b32.xlu0 %v2492, 28
    %v2654 = vpop.permute.xlu0 %2653
    %2655 = vrot.lane.b32.xlu0 %v2493, 28
    %v2656 = vpop.permute.xlu0 %2655
    %2657 = vrot.lane.b32.xlu0 %v2494, 28
    %v2658 = vpop.permute.xlu0 %2657
    %2659 = vrot.lane.b32.xlu0 %v2495, 28
    %v2660 = vpop.permute.xlu0 %2659
    %2661 = vrot.lane.b32.xlu0 %v2496, 28
    %v2662 = vpop.permute.xlu0 %2661
    %2663 = vrot.lane.b32.xlu0 %v2497, 28
    %v2664 = vpop.permute.xlu0 %2663
    %2665 = vrot.lane.b32.xlu0 %v2498, 28
    %v2666 = vpop.permute.xlu0 %2665
    %2667 = vrot.lane.b32.xlu0 %v2499, 28
    %v2668 = vpop.permute.xlu0 %2667
    %2669 = vrot.lane.b32.xlu0 %v2500, 28
    %v2670 = vpop.permute.xlu0 %2669
    %2671 = vrot.lane.b32.xlu0 %v2501, 28
    %v2672 = vpop.permute.xlu0 %2671
    %2673 = vrot.lane.b32.xlu0 %v2502, 28
    %v2674 = vpop.permute.xlu0 %2673
    %2675 = vrot.lane.b32.xlu0 %v2503, 28
    %v2676 = vpop.permute.xlu0 %2675
    %2677 = vrot.lane.b32.xlu0 %v2504, 28
    %v2678 = vpop.permute.xlu0 %2677
    %2679 = vrot.lane.b32.xlu0 %v2505, 28
    %v2680 = vpop.permute.xlu0 %2679
    %2681 = vrot.lane.b32.xlu0 %v2506, 28
    %v2682 = vpop.permute.xlu0 %2681
    %2683 = vrot.lane.b32.xlu0 %v2507, 28
    %v2684 = vpop.permute.xlu0 %2683
    %2685 = vrot.lane.b32.xlu0 %v2508, 28
    %v2686 = vpop.permute.xlu0 %2685
    %2687 = vrot.lane.b32.xlu0 %v2509, 28
    %v2688 = vpop.permute.xlu0 %2687
    %2689 = vrot.lane.b32.xlu0 %v2510, 28
    %v2690 = vpop.permute.xlu0 %2689
    %2691 = vrot.lane.b32.xlu0 %v2511, 28
    %v2692 = vpop.permute.xlu0 %2691
    %2693 = vrot.lane.b32.xlu0 %v2512, 28
    %v2694 = vpop.permute.xlu0 %2693
    %2695 = vrot.lane.b32.xlu0 %v2513, 28
    %v2696 = vpop.permute.xlu0 %2695
    %2697 = vrot.lane.b32.xlu0 %v2514, 28
    %v2698 = vpop.permute.xlu0 %2697
    %2699 = vrot.lane.b32.xlu0 %v2515, 28
    %v2700 = vpop.permute.xlu0 %2699
    %2701 = vrot.lane.b32.xlu0 %v2516, 28
    %v2702 = vpop.permute.xlu0 %2701
    %2703 = vrot.lane.b32.xlu0 %v2517, 28
    %v2704 = vpop.permute.xlu0 %2703
    %2705 = vrot.lane.b32.xlu0 %v2518, 28
    %v2706 = vpop.permute.xlu0 %2705
    %2707 = vrot.lane.b32.xlu0 %v2519, 28
    %v2708 = vpop.permute.xlu0 %2707
    %2709 = vrot.lane.b32.xlu0 %v2520, 28
    %v2710 = vpop.permute.xlu0 %2709
    %2711 = vrot.lane.b32.xlu0 %v2521, 28
    %v2712 = vpop.permute.xlu0 %2711
    %2713 = vrot.lane.b32.xlu0 %v2522, 28
    %v2714 = vpop.permute.xlu0 %2713
    %vm2779 = vcmask 261344
    %2780 = vst.msk [vmem:[#allocation2] sm:$0xff] %vm2779, %v2588
    %2781 = vst.msk [vmem:[#allocation2 + $0x8] sm:$0xff] %vm2779, %v2590
    %2782 = vst.msk [vmem:[#allocation2 + $0x10] sm:$0xff] %vm2779, %v2592
    %2783 = vst.msk [vmem:[#allocation2 + $0x18] sm:$0xff] %vm2779, %v2594
    %2784 = vst.msk [vmem:[#allocation2 + $0x20] sm:$0xff] %vm2779, %v2596
    %2785 = vst.msk [vmem:[#allocation2 + $0x28] sm:$0xff] %vm2779, %v2598
    %2786 = vst.msk [vmem:[#allocation2 + $0x30] sm:$0xff] %vm2779, %v2600
    %2787 = vst.msk [vmem:[#allocation2 + $0x38] sm:$0xff] %vm2779, %v2602
    %2788 = vst.msk [vmem:[#allocation2 + $0x40] sm:$0xff] %vm2779, %v2604
    %2789 = vst.msk [vmem:[#allocation2 + $0x48] sm:$0xff] %vm2779, %v2606
    %2790 = vst.msk [vmem:[#allocation2 + $0x50] sm:$0xff] %vm2779, %v2608
    %2791 = vst.msk [vmem:[#allocation2 + $0x58] sm:$0xff] %vm2779, %v2610
    %2792 = vst.msk [vmem:[#allocation2 + $0x60] sm:$0xff] %vm2779, %v2612
    %2793 = vst.msk [vmem:[#allocation2 + $0x68] sm:$0xff] %vm2779, %v2614
    %2794 = vst.msk [vmem:[#allocation2 + $0x70] sm:$0xff] %vm2779, %v2616
    %2795 = vst.msk [vmem:[#allocation2 + $0x78] sm:$0xff] %vm2779, %v2618
    %2796 = vst.msk [vmem:[#allocation2 + $0x80] sm:$0xff] %vm2779, %v2620
    %2797 = vst.msk [vmem:[#allocation2 + $0x88] sm:$0xff] %vm2779, %v2622
    %2798 = vst.msk [vmem:[#allocation2 + $0x90] sm:$0xff] %vm2779, %v2624
    %2799 = vst.msk [vmem:[#allocation2 + $0x98] sm:$0xff] %vm2779, %v2626
    %2800 = vst.msk [vmem:[#allocation2 + $0xa0] sm:$0xff] %vm2779, %v2628
    %2801 = vst.msk [vmem:[#allocation2 + $0xa8] sm:$0xff] %vm2779, %v2630
    %2802 = vst.msk [vmem:[#allocation2 + $0xb0] sm:$0xff] %vm2779, %v2632
    %2803 = vst.msk [vmem:[#allocation2 + $0xb8] sm:$0xff] %vm2779, %v2634
    %2804 = vst.msk [vmem:[#allocation2 + $0xc0] sm:$0xff] %vm2779, %v2636
    %2805 = vst.msk [vmem:[#allocation2 + $0xc8] sm:$0xff] %vm2779, %v2638
    %2806 = vst.msk [vmem:[#allocation2 + $0xd0] sm:$0xff] %vm2779, %v2640
    %2807 = vst.msk [vmem:[#allocation2 + $0xd8] sm:$0xff] %vm2779, %v2642
    %2808 = vst.msk [vmem:[#allocation2 + $0xe0] sm:$0xff] %vm2779, %v2644
    %2809 = vst.msk [vmem:[#allocation2 + $0xe8] sm:$0xff] %vm2779, %v2646
    %2810 = vst.msk [vmem:[#allocation2 + $0xf0] sm:$0xff] %vm2779, %v2648
    %2811 = vst.msk [vmem:[#allocation2 + $0xf8] sm:$0xff] %vm2779, %v2650
    %2812 = vst.msk [vmem:[#allocation2 + $0x100] sm:$0xff] %vm2779, %v2652
    %2813 = vst.msk [vmem:[#allocation2 + $0x108] sm:$0xff] %vm2779, %v2654
    %2814 = vst.msk [vmem:[#allocation2 + $0x110] sm:$0xff] %vm2779, %v2656
    %2815 = vst.msk [vmem:[#allocation2 + $0x118] sm:$0xff] %vm2779, %v2658
    %2816 = vst.msk [vmem:[#allocation2 + $0x120] sm:$0xff] %vm2779, %v2660
    %2817 = vst.msk [vmem:[#allocation2 + $0x128] sm:$0xff] %vm2779, %v2662
    %2818 = vst.msk [vmem:[#allocation2 + $0x130] sm:$0xff] %vm2779, %v2664
    %2819 = vst.msk [vmem:[#allocation2 + $0x138] sm:$0xff] %vm2779, %v2666
    %2820 = vst.msk [vmem:[#allocation2 + $0x140] sm:$0xff] %vm2779, %v2668
    %2821 = vst.msk [vmem:[#allocation2 + $0x148] sm:$0xff] %vm2779, %v2670
    %2822 = vst.msk [vmem:[#allocation2 + $0x150] sm:$0xff] %vm2779, %v2672
    %2823 = vst.msk [vmem:[#allocation2 + $0x158] sm:$0xff] %vm2779, %v2674
    %2824 = vst.msk [vmem:[#allocation2 + $0x160] sm:$0xff] %vm2779, %v2676
    %2825 = vst.msk [vmem:[#allocation2 + $0x168] sm:$0xff] %vm2779, %v2678
    %2826 = vst.msk [vmem:[#allocation2 + $0x170] sm:$0xff] %vm2779, %v2680
    %2827 = vst.msk [vmem:[#allocation2 + $0x178] sm:$0xff] %vm2779, %v2682
    %2828 = vst.msk [vmem:[#allocation2 + $0x180] sm:$0xff] %vm2779, %v2684
    %2829 = vst.msk [vmem:[#allocation2 + $0x188] sm:$0xff] %vm2779, %v2686
    %2830 = vst.msk [vmem:[#allocation2 + $0x190] sm:$0xff] %vm2779, %v2688
    %2831 = vst.msk [vmem:[#allocation2 + $0x198] sm:$0xff] %vm2779, %v2690
    %2832 = vst.msk [vmem:[#allocation2 + $0x1a0] sm:$0xff] %vm2779, %v2692
    %2833 = vst.msk [vmem:[#allocation2 + $0x1a8] sm:$0xff] %vm2779, %v2694
    %2834 = vst.msk [vmem:[#allocation2 + $0x1b0] sm:$0xff] %vm2779, %v2696
    %2835 = vst.msk [vmem:[#allocation2 + $0x1b8] sm:$0xff] %vm2779, %v2698
    %2836 = vst.msk [vmem:[#allocation2 + $0x1c0] sm:$0xff] %vm2779, %v2700
    %2837 = vst.msk [vmem:[#allocation2 + $0x1c8] sm:$0xff] %vm2779, %v2702
    %2838 = vst.msk [vmem:[#allocation2 + $0x1d0] sm:$0xff] %vm2779, %v2704
    %2839 = vst.msk [vmem:[#allocation2 + $0x1d8] sm:$0xff] %vm2779, %v2706
    %2840 = vst.msk [vmem:[#allocation2 + $0x1e0] sm:$0xff] %vm2779, %v2708
    %2841 = vst.msk [vmem:[#allocation2 + $0x1e8] sm:$0xff] %vm2779, %v2710
    %2842 = vst.msk [vmem:[#allocation2 + $0x1f0] sm:$0xff] %vm2779, %v2712
    %2843 = vst.msk [vmem:[#allocation2 + $0x1f8] sm:$0xff] %vm2779, %v2714
    %v2844 = vld [vmem:[%s2073 + $0x2] sm:$0xff]
    %v2845 = vld [vmem:[%s2073 + $0xa] sm:$0xff]
    %v2846 = vld [vmem:[%s2073 + $0x1a] sm:$0xff]
    %v2847 = vld [vmem:[%s2073 + $0x22] sm:$0xff]
    %v2848 = vld [vmem:[%s2073 + $0x32] sm:$0xff]
    %v2849 = vld [vmem:[%s2073 + $0x3a] sm:$0xff]
    %v2850 = vld [vmem:[%s2073 + $0x4a] sm:$0xff]
    %v2851 = vld [vmem:[%s2073 + $0x52] sm:$0xff]
    %v2852 = vld [vmem:[%s2073 + $0x62] sm:$0xff]
    %v2853 = vld [vmem:[%s2073 + $0x6a] sm:$0xff]
    %v2854 = vld [vmem:[%s2073 + $0x7a] sm:$0xff]
    %v2855 = vld [vmem:[%s2073 + $0x82] sm:$0xff]
    %v2856 = vld [vmem:[%s2073 + $0x92] sm:$0xff]
    %v2857 = vld [vmem:[%s2073 + $0x9a] sm:$0xff]
    %v2858 = vld [vmem:[%s2073 + $0xaa] sm:$0xff]
    %v2859 = vld [vmem:[%s2073 + $0xb2] sm:$0xff]
    %v2860 = vld [vmem:[%s2073 + $0xc2] sm:$0xff]
    %v2861 = vld [vmem:[%s2073 + $0xca] sm:$0xff]
    %v2862 = vld [vmem:[%s2073 + $0xda] sm:$0xff]
    %v2863 = vld [vmem:[%s2073 + $0xe2] sm:$0xff]
    %v2864 = vld [vmem:[%s2073 + $0xf2] sm:$0xff]
    %v2865 = vld [vmem:[%s2073 + $0xfa] sm:$0xff]
    %v2866 = vld [vmem:[%s2073 + $0x10a] sm:$0xff]
    %v2867 = vld [vmem:[%s2073 + $0x112] sm:$0xff]
    %v2868 = vld [vmem:[%s2073 + $0x122] sm:$0xff]
    %v2869 = vld [vmem:[%s2073 + $0x12a] sm:$0xff]
    %v2870 = vld [vmem:[%s2073 + $0x13a] sm:$0xff]
    %v2871 = vld [vmem:[%s2073 + $0x142] sm:$0xff]
    %v2872 = vld [vmem:[%s2073 + $0x152] sm:$0xff]
    %v2873 = vld [vmem:[%s2073 + $0x15a] sm:$0xff]
    %v2874 = vld [vmem:[%s2073 + $0x16a] sm:$0xff]
    %v2875 = vld [vmem:[%s2073 + $0x172] sm:$0xff]
    %v2876 = vld [vmem:[%s2073 + $0x1b2] sm:$0xff]
    %v2877 = vld [vmem:[%s2073 + $0x1ba] sm:$0xff]
    %v2878 = vld [vmem:[%s2073 + $0x1ca] sm:$0xff]
    %v2879 = vld [vmem:[%s2073 + $0x1d2] sm:$0xff]
    %v2880 = vld [vmem:[%s2073 + $0x1e2] sm:$0xff]
    %v2881 = vld [vmem:[%s2073 + $0x1ea] sm:$0xff]
    %v2882 = vld [vmem:[%s2073 + $0x1fa] sm:$0xff]
    %v2883 = vld [vmem:[%s2073 + $0x202] sm:$0xff]
    %v2884 = vld [vmem:[%s2073 + $0x212] sm:$0xff]
    %v2885 = vld [vmem:[%s2073 + $0x21a] sm:$0xff]
    %v2886 = vld [vmem:[%s2073 + $0x22a] sm:$0xff]
    %v2887 = vld [vmem:[%s2073 + $0x232] sm:$0xff]
    %v2888 = vld [vmem:[%s2073 + $0x242] sm:$0xff]
    %v2889 = vld [vmem:[%s2073 + $0x24a] sm:$0xff]
    %v2890 = vld [vmem:[%s2073 + $0x25a] sm:$0xff]
    %v2891 = vld [vmem:[%s2073 + $0x262] sm:$0xff]
    %v2892 = vld [vmem:[%s2073 + $0x272] sm:$0xff]
    %v2893 = vld [vmem:[%s2073 + $0x27a] sm:$0xff]
    %v2894 = vld [vmem:[%s2073 + $0x28a] sm:$0xff]
    %v2895 = vld [vmem:[%s2073 + $0x292] sm:$0xff]
    %v2896 = vld [vmem:[%s2073 + $0x2a2] sm:$0xff]
    %v2897 = vld [vmem:[%s2073 + $0x2aa] sm:$0xff]
    %v2898 = vld [vmem:[%s2073 + $0x2ba] sm:$0xff]
    %v2899 = vld [vmem:[%s2073 + $0x2c2] sm:$0xff]
    %v2900 = vld [vmem:[%s2073 + $0x2d2] sm:$0xff]
    %v2901 = vld [vmem:[%s2073 + $0x2da] sm:$0xff]
    %v2902 = vld [vmem:[%s2073 + $0x2ea] sm:$0xff]
    %v2903 = vld [vmem:[%s2073 + $0x2f2] sm:$0xff]
    %v2904 = vld [vmem:[%s2073 + $0x302] sm:$0xff]
    %v2905 = vld [vmem:[%s2073 + $0x30a] sm:$0xff]
    %v2906 = vld [vmem:[%s2073 + $0x31a] sm:$0xff]
    %v2907 = vld [vmem:[%s2073 + $0x322] sm:$0xff]
    %2972 = vrot.lane.b32.xlu0 %v2844, 32
    %v2973 = vpop.permute.xlu0 %2972
    %2974 = vrot.lane.b32.xlu0 %v2845, 32
    %v2975 = vpop.permute.xlu0 %2974
    %2976 = vrot.lane.b32.xlu0 %v2846, 32
    %v2977 = vpop.permute.xlu0 %2976
    %2978 = vrot.lane.b32.xlu0 %v2847, 32
    %v2979 = vpop.permute.xlu0 %2978
    %2980 = vrot.lane.b32.xlu0 %v2848, 32
    %v2981 = vpop.permute.xlu0 %2980
    %2982 = vrot.lane.b32.xlu0 %v2849, 32
    %v2983 = vpop.permute.xlu0 %2982
    %2984 = vrot.lane.b32.xlu0 %v2850, 32
    %v2985 = vpop.permute.xlu0 %2984
    %2986 = vrot.lane.b32.xlu0 %v2851, 32
    %v2987 = vpop.permute.xlu0 %2986
    %2988 = vrot.lane.b32.xlu0 %v2852, 32
    %v2989 = vpop.permute.xlu0 %2988
    %2990 = vrot.lane.b32.xlu0 %v2853, 32
    %v2991 = vpop.permute.xlu0 %2990
    %2992 = vrot.lane.b32.xlu0 %v2854, 32
    %v2993 = vpop.permute.xlu0 %2992
    %2994 = vrot.lane.b32.xlu0 %v2855, 32
    %v2995 = vpop.permute.xlu0 %2994
    %2996 = vrot.lane.b32.xlu0 %v2856, 32
    %v2997 = vpop.permute.xlu0 %2996
    %2998 = vrot.lane.b32.xlu0 %v2857, 32
    %v2999 = vpop.permute.xlu0 %2998
    %3000 = vrot.lane.b32.xlu0 %v2858, 32
    %v3001 = vpop.permute.xlu0 %3000
    %3002 = vrot.lane.b32.xlu0 %v2859, 32
    %v3003 = vpop.permute.xlu0 %3002
    %3004 = vrot.lane.b32.xlu0 %v2860, 32
    %v3005 = vpop.permute.xlu0 %3004
    %3006 = vrot.lane.b32.xlu0 %v2861, 32
    %v3007 = vpop.permute.xlu0 %3006
    %3008 = vrot.lane.b32.xlu0 %v2862, 32
    %v3009 = vpop.permute.xlu0 %3008
    %3010 = vrot.lane.b32.xlu0 %v2863, 32
    %v3011 = vpop.permute.xlu0 %3010
    %3012 = vrot.lane.b32.xlu0 %v2864, 32
    %v3013 = vpop.permute.xlu0 %3012
    %3014 = vrot.lane.b32.xlu0 %v2865, 32
    %v3015 = vpop.permute.xlu0 %3014
    %3016 = vrot.lane.b32.xlu0 %v2866, 32
    %v3017 = vpop.permute.xlu0 %3016
    %3018 = vrot.lane.b32.xlu0 %v2867, 32
    %v3019 = vpop.permute.xlu0 %3018
    %3020 = vrot.lane.b32.xlu0 %v2868, 32
    %v3021 = vpop.permute.xlu0 %3020
    %3022 = vrot.lane.b32.xlu0 %v2869, 32
    %v3023 = vpop.permute.xlu0 %3022
    %3024 = vrot.lane.b32.xlu0 %v2870, 32
    %v3025 = vpop.permute.xlu0 %3024
    %3026 = vrot.lane.b32.xlu0 %v2871, 32
    %v3027 = vpop.permute.xlu0 %3026
    %3028 = vrot.lane.b32.xlu0 %v2872, 32
    %v3029 = vpop.permute.xlu0 %3028
    %3030 = vrot.lane.b32.xlu0 %v2873, 32
    %v3031 = vpop.permute.xlu0 %3030
    %3032 = vrot.lane.b32.xlu0 %v2874, 32
    %v3033 = vpop.permute.xlu0 %3032
    %3034 = vrot.lane.b32.xlu0 %v2875, 32
    %v3035 = vpop.permute.xlu0 %3034
    %3036 = vrot.lane.b32.xlu0 %v2876, 32
    %v3037 = vpop.permute.xlu0 %3036
    %3038 = vrot.lane.b32.xlu0 %v2877, 32
    %v3039 = vpop.permute.xlu0 %3038
    %3040 = vrot.lane.b32.xlu0 %v2878, 32
    %v3041 = vpop.permute.xlu0 %3040
    %3042 = vrot.lane.b32.xlu0 %v2879, 32
    %v3043 = vpop.permute.xlu0 %3042
    %3044 = vrot.lane.b32.xlu0 %v2880, 32
    %v3045 = vpop.permute.xlu0 %3044
    %3046 = vrot.lane.b32.xlu0 %v2881, 32
    %v3047 = vpop.permute.xlu0 %3046
    %3048 = vrot.lane.b32.xlu0 %v2882, 32
    %v3049 = vpop.permute.xlu0 %3048
    %3050 = vrot.lane.b32.xlu0 %v2883, 32
    %v3051 = vpop.permute.xlu0 %3050
    %3052 = vrot.lane.b32.xlu0 %v2884, 32
    %v3053 = vpop.permute.xlu0 %3052
    %3054 = vrot.lane.b32.xlu0 %v2885, 32
    %v3055 = vpop.permute.xlu0 %3054
    %3056 = vrot.lane.b32.xlu0 %v2886, 32
    %v3057 = vpop.permute.xlu0 %3056
    %3058 = vrot.lane.b32.xlu0 %v2887, 32
    %v3059 = vpop.permute.xlu0 %3058
    %3060 = vrot.lane.b32.xlu0 %v2888, 32
    %v3061 = vpop.permute.xlu0 %3060
    %3062 = vrot.lane.b32.xlu0 %v2889, 32
    %v3063 = vpop.permute.xlu0 %3062
    %3064 = vrot.lane.b32.xlu0 %v2890, 32
    %v3065 = vpop.permute.xlu0 %3064
    %3066 = vrot.lane.b32.xlu0 %v2891, 32
    %v3067 = vpop.permute.xlu0 %3066
    %3068 = vrot.lane.b32.xlu0 %v2892, 32
    %v3069 = vpop.permute.xlu0 %3068
    %3070 = vrot.lane.b32.xlu0 %v2893, 32
    %v3071 = vpop.permute.xlu0 %3070
    %3072 = vrot.lane.b32.xlu0 %v2894, 32
    %v3073 = vpop.permute.xlu0 %3072
    %3074 = vrot.lane.b32.xlu0 %v2895, 32
    %v3075 = vpop.permute.xlu0 %3074
    %3076 = vrot.lane.b32.xlu0 %v2896, 32
    %v3077 = vpop.permute.xlu0 %3076
    %3078 = vrot.lane.b32.xlu0 %v2897, 32
    %v3079 = vpop.permute.xlu0 %3078
    %3080 = vrot.lane.b32.xlu0 %v2898, 32
    %v3081 = vpop.permute.xlu0 %3080
    %3082 = vrot.lane.b32.xlu0 %v2899, 32
    %v3083 = vpop.permute.xlu0 %3082
    %3084 = vrot.lane.b32.xlu0 %v2900, 32
    %v3085 = vpop.permute.xlu0 %3084
    %3086 = vrot.lane.b32.xlu0 %v2901, 32
    %v3087 = vpop.permute.xlu0 %3086
    %3088 = vrot.lane.b32.xlu0 %v2902, 32
    %v3089 = vpop.permute.xlu0 %3088
    %3090 = vrot.lane.b32.xlu0 %v2903, 32
    %v3091 = vpop.permute.xlu0 %3090
    %3092 = vrot.lane.b32.xlu0 %v2904, 32
    %v3093 = vpop.permute.xlu0 %3092
    %3094 = vrot.lane.b32.xlu0 %v2905, 32
    %v3095 = vpop.permute.xlu0 %3094
    %3096 = vrot.lane.b32.xlu0 %v2906, 32
    %v3097 = vpop.permute.xlu0 %3096
    %3098 = vrot.lane.b32.xlu0 %v2907, 32
    %v3099 = vpop.permute.xlu0 %3098
    %vm3164 = vcmask 294144
    %3165 = vst.msk [vmem:[#allocation2] sm:$0xff] %vm3164, %v2973
    %3166 = vst.msk [vmem:[#allocation2 + $0x8] sm:$0xff] %vm3164, %v2975
    %3167 = vst.msk [vmem:[#allocation2 + $0x10] sm:$0xff] %vm3164, %v2977
    %3168 = vst.msk [vmem:[#allocation2 + $0x18] sm:$0xff] %vm3164, %v2979
    %3169 = vst.msk [vmem:[#allocation2 + $0x20] sm:$0xff] %vm3164, %v2981
    %3170 = vst.msk [vmem:[#allocation2 + $0x28] sm:$0xff] %vm3164, %v2983
    %3171 = vst.msk [vmem:[#allocation2 + $0x30] sm:$0xff] %vm3164, %v2985
    %3172 = vst.msk [vmem:[#allocation2 + $0x38] sm:$0xff] %vm3164, %v2987
    %3173 = vst.msk [vmem:[#allocation2 + $0x40] sm:$0xff] %vm3164, %v2989
    %3174 = vst.msk [vmem:[#allocation2 + $0x48] sm:$0xff] %vm3164, %v2991
    %3175 = vst.msk [vmem:[#allocation2 + $0x50] sm:$0xff] %vm3164, %v2993
    %3176 = vst.msk [vmem:[#allocation2 + $0x58] sm:$0xff] %vm3164, %v2995
    %3177 = vst.msk [vmem:[#allocation2 + $0x60] sm:$0xff] %vm3164, %v2997
    %3178 = vst.msk [vmem:[#allocation2 + $0x68] sm:$0xff] %vm3164, %v2999
    %3179 = vst.msk [vmem:[#allocation2 + $0x70] sm:$0xff] %vm3164, %v3001
    %3180 = vst.msk [vmem:[#allocation2 + $0x78] sm:$0xff] %vm3164, %v3003
    %3181 = vst.msk [vmem:[#allocation2 + $0x80] sm:$0xff] %vm3164, %v3005
    %3182 = vst.msk [vmem:[#allocation2 + $0x88] sm:$0xff] %vm3164, %v3007
    %3183 = vst.msk [vmem:[#allocation2 + $0x90] sm:$0xff] %vm3164, %v3009
    %3184 = vst.msk [vmem:[#allocation2 + $0x98] sm:$0xff] %vm3164, %v3011
    %3185 = vst.msk [vmem:[#allocation2 + $0xa0] sm:$0xff] %vm3164, %v3013
    %3186 = vst.msk [vmem:[#allocation2 + $0xa8] sm:$0xff] %vm3164, %v3015
    %3187 = vst.msk [vmem:[#allocation2 + $0xb0] sm:$0xff] %vm3164, %v3017
    %3188 = vst.msk [vmem:[#allocation2 + $0xb8] sm:$0xff] %vm3164, %v3019
    %3189 = vst.msk [vmem:[#allocation2 + $0xc0] sm:$0xff] %vm3164, %v3021
    %3190 = vst.msk [vmem:[#allocation2 + $0xc8] sm:$0xff] %vm3164, %v3023
    %3191 = vst.msk [vmem:[#allocation2 + $0xd0] sm:$0xff] %vm3164, %v3025
    %3192 = vst.msk [vmem:[#allocation2 + $0xd8] sm:$0xff] %vm3164, %v3027
    %3193 = vst.msk [vmem:[#allocation2 + $0xe0] sm:$0xff] %vm3164, %v3029
    %3194 = vst.msk [vmem:[#allocation2 + $0xe8] sm:$0xff] %vm3164, %v3031
    %3195 = vst.msk [vmem:[#allocation2 + $0xf0] sm:$0xff] %vm3164, %v3033
    %3196 = vst.msk [vmem:[#allocation2 + $0xf8] sm:$0xff] %vm3164, %v3035
    %3197 = vst.msk [vmem:[#allocation2 + $0x100] sm:$0xff] %vm3164, %v3037
    %3198 = vst.msk [vmem:[#allocation2 + $0x108] sm:$0xff] %vm3164, %v3039
    %3199 = vst.msk [vmem:[#allocation2 + $0x110] sm:$0xff] %vm3164, %v3041
    %3200 = vst.msk [vmem:[#allocation2 + $0x118] sm:$0xff] %vm3164, %v3043
    %3201 = vst.msk [vmem:[#allocation2 + $0x120] sm:$0xff] %vm3164, %v3045
    %3202 = vst.msk [vmem:[#allocation2 + $0x128] sm:$0xff] %vm3164, %v3047
    %3203 = vst.msk [vmem:[#allocation2 + $0x130] sm:$0xff] %vm3164, %v3049
    %3204 = vst.msk [vmem:[#allocation2 + $0x138] sm:$0xff] %vm3164, %v3051
    %3205 = vst.msk [vmem:[#allocation2 + $0x140] sm:$0xff] %vm3164, %v3053
    %3206 = vst.msk [vmem:[#allocation2 + $0x148] sm:$0xff] %vm3164, %v3055
    %3207 = vst.msk [vmem:[#allocation2 + $0x150] sm:$0xff] %vm3164, %v3057
    %3208 = vst.msk [vmem:[#allocation2 + $0x158] sm:$0xff] %vm3164, %v3059
    %3209 = vst.msk [vmem:[#allocation2 + $0x160] sm:$0xff] %vm3164, %v3061
    %3210 = vst.msk [vmem:[#allocation2 + $0x168] sm:$0xff] %vm3164, %v3063
    %3211 = vst.msk [vmem:[#allocation2 + $0x170] sm:$0xff] %vm3164, %v3065
    %3212 = vst.msk [vmem:[#allocation2 + $0x178] sm:$0xff] %vm3164, %v3067
    %3213 = vst.msk [vmem:[#allocation2 + $0x180] sm:$0xff] %vm3164, %v3069
    %3214 = vst.msk [vmem:[#allocation2 + $0x188] sm:$0xff] %vm3164, %v3071
    %3215 = vst.msk [vmem:[#allocation2 + $0x190] sm:$0xff] %vm3164, %v3073
    %3216 = vst.msk [vmem:[#allocation2 + $0x198] sm:$0xff] %vm3164, %v3075
    %3217 = vst.msk [vmem:[#allocation2 + $0x1a0] sm:$0xff] %vm3164, %v3077
    %3218 = vst.msk [vmem:[#allocation2 + $0x1a8] sm:$0xff] %vm3164, %v3079
    %3219 = vst.msk [vmem:[#allocation2 + $0x1b0] sm:$0xff] %vm3164, %v3081
    %3220 = vst.msk [vmem:[#allocation2 + $0x1b8] sm:$0xff] %vm3164, %v3083
    %3221 = vst.msk [vmem:[#allocation2 + $0x1c0] sm:$0xff] %vm3164, %v3085
    %3222 = vst.msk [vmem:[#allocation2 + $0x1c8] sm:$0xff] %vm3164, %v3087
    %3223 = vst.msk [vmem:[#allocation2 + $0x1d0] sm:$0xff] %vm3164, %v3089
    %3224 = vst.msk [vmem:[#allocation2 + $0x1d8] sm:$0xff] %vm3164, %v3091
    %3225 = vst.msk [vmem:[#allocation2 + $0x1e0] sm:$0xff] %vm3164, %v3093
    %3226 = vst.msk [vmem:[#allocation2 + $0x1e8] sm:$0xff] %vm3164, %v3095
    %3227 = vst.msk [vmem:[#allocation2 + $0x1f0] sm:$0xff] %vm3164, %v3097
    %3228 = vst.msk [vmem:[#allocation2 + $0x1f8] sm:$0xff] %vm3164, %v3099
    %v3229 = vld [vmem:[#allocation2] sm:$0xff]
    %v3230 = vld [vmem:[#allocation2 + $0x8] sm:$0xff]
    %v3231 = vld [vmem:[#allocation2 + $0x10] sm:$0xff]
    %v3232 = vld [vmem:[#allocation2 + $0x18] sm:$0xff]
    %v3233 = vld [vmem:[#allocation2 + $0x20] sm:$0xff]
    %v3234 = vld [vmem:[#allocation2 + $0x28] sm:$0xff]
    %v3235 = vld [vmem:[#allocation2 + $0x30] sm:$0xff]
    %v3236 = vld [vmem:[#allocation2 + $0x38] sm:$0xff]
    %v3237 = vld [vmem:[#allocation2 + $0x40] sm:$0xff]
    %v3238 = vld [vmem:[#allocation2 + $0x48] sm:$0xff]
    %v3239 = vld [vmem:[#allocation2 + $0x50] sm:$0xff]
    %v3240 = vld [vmem:[#allocation2 + $0x58] sm:$0xff]
    %v3241 = vld [vmem:[#allocation2 + $0x60] sm:$0xff]
    %v3242 = vld [vmem:[#allocation2 + $0x68] sm:$0xff]
    %v3243 = vld [vmem:[#allocation2 + $0x70] sm:$0xff]
    %v3244 = vld [vmem:[#allocation2 + $0x78] sm:$0xff]
    %v3245 = vld [vmem:[#allocation2 + $0x80] sm:$0xff]
    %v3246 = vld [vmem:[#allocation2 + $0x88] sm:$0xff]
    %v3247 = vld [vmem:[#allocation2 + $0x90] sm:$0xff]
    %v3248 = vld [vmem:[#allocation2 + $0x98] sm:$0xff]
    %v3249 = vld [vmem:[#allocation2 + $0xa0] sm:$0xff]
    %v3250 = vld [vmem:[#allocation2 + $0xa8] sm:$0xff]
    %v3251 = vld [vmem:[#allocation2 + $0xb0] sm:$0xff]
    %v3252 = vld [vmem:[#allocation2 + $0xb8] sm:$0xff]
    %v3253 = vld [vmem:[#allocation2 + $0xc0] sm:$0xff]
    %v3254 = vld [vmem:[#allocation2 + $0xc8] sm:$0xff]
    %v3255 = vld [vmem:[#allocation2 + $0xd0] sm:$0xff]
    %v3256 = vld [vmem:[#allocation2 + $0xd8] sm:$0xff]
    %v3257 = vld [vmem:[#allocation2 + $0xe0] sm:$0xff]
    %v3258 = vld [vmem:[#allocation2 + $0xe8] sm:$0xff]
    %v3259 = vld [vmem:[#allocation2 + $0xf0] sm:$0xff]
    %v3260 = vld [vmem:[#allocation2 + $0xf8] sm:$0xff]
    %v3261 = vld [vmem:[#allocation2 + $0x100] sm:$0xff]
    %v3262 = vld [vmem:[#allocation2 + $0x108] sm:$0xff]
    %v3263 = vld [vmem:[#allocation2 + $0x110] sm:$0xff]
    %v3264 = vld [vmem:[#allocation2 + $0x118] sm:$0xff]
    %v3265 = vld [vmem:[#allocation2 + $0x120] sm:$0xff]
    %v3266 = vld [vmem:[#allocation2 + $0x128] sm:$0xff]
    %v3267 = vld [vmem:[#allocation2 + $0x130] sm:$0xff]
    %v3268 = vld [vmem:[#allocation2 + $0x138] sm:$0xff]
    %v3269 = vld [vmem:[#allocation2 + $0x140] sm:$0xff]
    %v3270 = vld [vmem:[#allocation2 + $0x148] sm:$0xff]
    %v3271 = vld [vmem:[#allocation2 + $0x150] sm:$0xff]
    %v3272 = vld [vmem:[#allocation2 + $0x158] sm:$0xff]
    %v3273 = vld [vmem:[#allocation2 + $0x160] sm:$0xff]
    %v3274 = vld [vmem:[#allocation2 + $0x168] sm:$0xff]
    %v3275 = vld [vmem:[#allocation2 + $0x170] sm:$0xff]
    %v3276 = vld [vmem:[#allocation2 + $0x178] sm:$0xff]
    %v3277 = vld [vmem:[#allocation2 + $0x180] sm:$0xff]
    %v3278 = vld [vmem:[#allocation2 + $0x188] sm:$0xff]
    %v3279 = vld [vmem:[#allocation2 + $0x190] sm:$0xff]
    %v3280 = vld [vmem:[#allocation2 + $0x198] sm:$0xff]
    %v3281 = vld [vmem:[#allocation2 + $0x1a0] sm:$0xff]
    %v3282 = vld [vmem:[#allocation2 + $0x1a8] sm:$0xff]
    %v3283 = vld [vmem:[#allocation2 + $0x1b0] sm:$0xff]
    %v3284 = vld [vmem:[#allocation2 + $0x1b8] sm:$0xff]
    %v3285 = vld [vmem:[#allocation2 + $0x1c0] sm:$0xff]
    %v3286 = vld [vmem:[#allocation2 + $0x1c8] sm:$0xff]
    %v3287 = vld [vmem:[#allocation2 + $0x1d0] sm:$0xff]
    %v3288 = vld [vmem:[#allocation2 + $0x1d8] sm:$0xff]
    %v3289 = vld [vmem:[#allocation2 + $0x1e0] sm:$0xff]
    %v3290 = vld [vmem:[#allocation2 + $0x1e8] sm:$0xff]
    %v3291 = vld [vmem:[#allocation2 + $0x1f0] sm:$0xff]
    %v3292 = vld [vmem:[#allocation2 + $0x1f8] sm:$0xff]
    %v3293 = vld [vmem:[%s1] sm:$0xff]
    %v3294 = vld [vmem:[%s1 + $0x8] sm:$0xff]
    %v3295 = vld [vmem:[%s1 + $0x10] sm:$0xff]
    %vm3296 = vcmask 293888
    %v3298 = vsel %vm3296, %v3293, 0
    %v3301 = vsel %vm3296, %v3294, 0
    %v3304 = vsel %vm3296, %v3295, 0
    %v3307 = vsel %vm3296, %v3229, 0
    %v3310 = vsel %vm3296, %v3230, 0
    %v3313 = vsel %vm3296, %v3231, 0
    %v3316 = vsel %vm3296, %v3232, 0
    %v3319 = vsel %vm3296, %v3233, 0
    %v3322 = vsel %vm3296, %v3234, 0
    %v3325 = vsel %vm3296, %v3235, 0
    %v3328 = vsel %vm3296, %v3236, 0
    %v3331 = vsel %vm3296, %v3237, 0
    %v3334 = vsel %vm3296, %v3238, 0
    %v3337 = vsel %vm3296, %v3239, 0
    %v3340 = vsel %vm3296, %v3240, 0
    %v3343 = vsel %vm3296, %v3241, 0
    %v3346 = vsel %vm3296, %v3242, 0
    %v3349 = vsel %vm3296, %v3243, 0
    %v3352 = vsel %vm3296, %v3244, 0
    %v3355 = vsel %vm3296, %v3245, 0
    %v3358 = vsel %vm3296, %v3246, 0
    %v3361 = vsel %vm3296, %v3247, 0
    %v3364 = vsel %vm3296, %v3248, 0
    %v3367 = vsel %vm3296, %v3249, 0
    %v3370 = vsel %vm3296, %v3250, 0
    %v3373 = vsel %vm3296, %v3251, 0
    %v3376 = vsel %vm3296, %v3252, 0
    %v3379 = vsel %vm3296, %v3253, 0
    %v3382 = vsel %vm3296, %v3254, 0
    %v3385 = vsel %vm3296, %v3255, 0
    %v3388 = vsel %vm3296, %v3256, 0
    %v3391 = vsel %vm3296, %v3257, 0
    %v3394 = vsel %vm3296, %v3258, 0
    %v3397 = vsel %vm3296, %v3259, 0
    %v3400 = vsel %vm3296, %v3260, 0
    %v3403 = vsel %vm3296, %v3261, 0
    %v3406 = vsel %vm3296, %v3262, 0
    %v3409 = vsel %vm3296, %v3263, 0
    %v3412 = vsel %vm3296, %v3264, 0
    %v3415 = vsel %vm3296, %v3265, 0
    %v3418 = vsel %vm3296, %v3266, 0
    %v3421 = vsel %vm3296, %v3267, 0
    %v3424 = vsel %vm3296, %v3268, 0
    %v3427 = vsel %vm3296, %v3269, 0
    %v3430 = vsel %vm3296, %v3270, 0
    %v3433 = vsel %vm3296, %v3271, 0
    %v3436 = vsel %vm3296, %v3272, 0
    %v3439 = vsel %vm3296, %v3273, 0
    %v3442 = vsel %vm3296, %v3274, 0
    %v3445 = vsel %vm3296, %v3275, 0
    %v3448 = vsel %vm3296, %v3276, 0
    %v3451 = vsel %vm3296, %v3277, 0
    %v3454 = vsel %vm3296, %v3278, 0
    %v3457 = vsel %vm3296, %v3279, 0
    %v3460 = vsel %vm3296, %v3280, 0
    %v3463 = vsel %vm3296, %v3281, 0
    %v3466 = vsel %vm3296, %v3282, 0
    %v3469 = vsel %vm3296, %v3283, 0
    %v3472 = vsel %vm3296, %v3284, 0
    %v3475 = vsel %vm3296, %v3285, 0
    %v3478 = vsel %vm3296, %v3286, 0
    %v3481 = vsel %vm3296, %v3287, 0
    %v3484 = vsel %vm3296, %v3288, 0
    %v3487 = vsel %vm3296, %v3289, 0
    %v3490 = vsel %vm3296, %v3290, 0
    %v3493 = vsel %vm3296, %v3291, 0
    %v3496 = vsel %vm3296, %v3292, 0
    %v3498 = vand.u32 %v3352, 4294901760
    %3499 = vmatpush.xpose.msra.mxu0 %v3498
    %v3500 = vand.u32 %v3349, 4294901760
    %3501 = vmatpush.xpose.msra.mxu0 %v3500
    %v3502 = vand.u32 %v3346, 4294901760
    %3503 = vmatpush.xpose.msra.mxu0 %v3502
    %v3504 = vand.u32 %v3343, 4294901760
    %3505 = vmatpush.xpose.msra.mxu0 %v3504
    %v3506 = vand.u32 %v3340, 4294901760
    %3507 = vmatpush.xpose.msra.mxu0 %v3506
    %v3508 = vand.u32 %v3337, 4294901760
    %3509 = vmatpush.xpose.msra.mxu0 %v3508
    %v3510 = vand.u32 %v3334, 4294901760
    %3511 = vmatpush.xpose.msra.mxu0 %v3510
    %v3512 = vand.u32 %v3331, 4294901760
    %3513 = vmatpush.xpose.msra.mxu0 %v3512
    %v3514 = vand.u32 %v3328, 4294901760
    %3515 = vmatpush.xpose.msra.mxu0 %v3514
    %v3516 = vand.u32 %v3325, 4294901760
    %3517 = vmatpush.xpose.msra.mxu0 %v3516
    %v3518 = vand.u32 %v3322, 4294901760
    %3519 = vmatpush.xpose.msra.mxu0 %v3518
    %v3520 = vand.u32 %v3319, 4294901760
    %3521 = vmatpush.xpose.msra.mxu0 %v3520
    %v3522 = vand.u32 %v3316, 4294901760
    %3523 = vmatpush.xpose.msra.mxu0 %v3522
    %v3524 = vand.u32 %v3313, 4294901760
    %3525 = vmatpush.xpose.msra.mxu0 %v3524
    %v3526 = vand.u32 %v3310, 4294901760
    %3527 = vmatpush.xpose.msra.mxu0 %v3526
    %v3528 = vand.u32 %v3307, 4294901760
    %3529 = vmatpush.xpose.msra.mxu0 %v3528
    %v3530 = vand.u32 %v3298, 4294901760
    %v3531 = vsub.f32 %v3298, %v3530
    %v3532 = vand.u32 %v3531, 4294901760
    %v3533 = vsub.f32 %v3531, %v3532
    %v3534 = vand.u32 %v3533, 4294901760
    %3535 = vmatmul.f32.gmra.mxu0 %v3534
    %v3536 = vpop.f32.mrf.mxu0
    %v3537 = vadd.f32 0.0, %v3536
    %v3538 = vand.u32 %v3301, 4294901760
    %v3539 = vsub.f32 %v3301, %v3538
    %v3540 = vand.u32 %v3539, 4294901760
    %v3541 = vsub.f32 %v3539, %v3540
    %v3542 = vand.u32 %v3541, 4294901760
    %3543 = vmatmul.f32.gmra.mxu0 %v3542
    %v3544 = vpop.f32.mrf.mxu0
    %v3545 = vadd.f32 0.0, %v3544
    %v3546 = vand.u32 %v3304, 4294901760
    %v3547 = vsub.f32 %v3304, %v3546
    %v3548 = vand.u32 %v3547, 4294901760
    %v3549 = vsub.f32 %v3547, %v3548
    %v3550 = vand.u32 %v3549, 4294901760
    %3551 = vmatmul.f32.gmra.mxu0 %v3550
    %v3552 = vpop.f32.mrf.mxu0
    %v3553 = vadd.f32 0.0, %v3552
    %3554 = vdwg.mxu0
    %v3555 = vand.u32 %v3352, 4294901760
    %v3556 = vsub.f32 %v3352, %v3555
    %v3557 = vand.u32 %v3556, 4294901760
    %v3558 = vsub.f32 %v3556, %v3557
    %v3559 = vand.u32 %v3558, 4294901760
    %3560 = vmatpush.xpose.msra.mxu0 %v3559
    %v3561 = vand.u32 %v3349, 4294901760
    %v3562 = vsub.f32 %v3349, %v3561
    %v3563 = vand.u32 %v3562, 4294901760
    %v3564 = vsub.f32 %v3562, %v3563
    %v3565 = vand.u32 %v3564, 4294901760
    %3566 = vmatpush.xpose.msra.mxu0 %v3565
    %v3567 = vand.u32 %v3346, 4294901760
    %v3568 = vsub.f32 %v3346, %v3567
    %v3569 = vand.u32 %v3568, 4294901760
    %v3570 = vsub.f32 %v3568, %v3569
    %v3571 = vand.u32 %v3570, 4294901760
    %3572 = vmatpush.xpose.msra.mxu0 %v3571
    %v3573 = vand.u32 %v3343, 4294901760
    %v3574 = vsub.f32 %v3343, %v3573
    %v3575 = vand.u32 %v3574, 4294901760
    %v3576 = vsub.f32 %v3574, %v3575
    %v3577 = vand.u32 %v3576, 4294901760
    %3578 = vmatpush.xpose.msra.mxu0 %v3577
    %v3579 = vand.u32 %v3340, 4294901760
    %v3580 = vsub.f32 %v3340, %v3579
    %v3581 = vand.u32 %v3580, 4294901760
    %v3582 = vsub.f32 %v3580, %v3581
    %v3583 = vand.u32 %v3582, 4294901760
    %3584 = vmatpush.xpose.msra.mxu0 %v3583
    %v3585 = vand.u32 %v3337, 4294901760
    %v3586 = vsub.f32 %v3337, %v3585
    %v3587 = vand.u32 %v3586, 4294901760
    %v3588 = vsub.f32 %v3586, %v3587
    %v3589 = vand.u32 %v3588, 4294901760
    %3590 = vmatpush.xpose.msra.mxu0 %v3589
    %v3591 = vand.u32 %v3334, 4294901760
    %v3592 = vsub.f32 %v3334, %v3591
    %v3593 = vand.u32 %v3592, 4294901760
    %v3594 = vsub.f32 %v3592, %v3593
    %v3595 = vand.u32 %v3594, 4294901760
    %3596 = vmatpush.xpose.msra.mxu0 %v3595
    %v3597 = vand.u32 %v3331, 4294901760
    %v3598 = vsub.f32 %v3331, %v3597
    %v3599 = vand.u32 %v3598, 4294901760
    %v3600 = vsub.f32 %v3598, %v3599
    %v3601 = vand.u32 %v3600, 4294901760
    %3602 = vmatpush.xpose.msra.mxu0 %v3601
    %v3603 = vand.u32 %v3328, 4294901760
    %v3604 = vsub.f32 %v3328, %v3603
    %v3605 = vand.u32 %v3604, 4294901760
    %v3606 = vsub.f32 %v3604, %v3605
    %v3607 = vand.u32 %v3606, 4294901760
    %3608 = vmatpush.xpose.msra.mxu0 %v3607
    %v3609 = vand.u32 %v3325, 4294901760
    %v3610 = vsub.f32 %v3325, %v3609
    %v3611 = vand.u32 %v3610, 4294901760
    %v3612 = vsub.f32 %v3610, %v3611
    %v3613 = vand.u32 %v3612, 4294901760
    %3614 = vmatpush.xpose.msra.mxu0 %v3613
    %v3615 = vand.u32 %v3322, 4294901760
    %v3616 = vsub.f32 %v3322, %v3615
    %v3617 = vand.u32 %v3616, 4294901760
    %v3618 = vsub.f32 %v3616, %v3617
    %v3619 = vand.u32 %v3618, 4294901760
    %3620 = vmatpush.xpose.msra.mxu0 %v3619
    %v3621 = vand.u32 %v3319, 4294901760
    %v3622 = vsub.f32 %v3319, %v3621
    %v3623 = vand.u32 %v3622, 4294901760
    %v3624 = vsub.f32 %v3622, %v3623
    %v3625 = vand.u32 %v3624, 4294901760
    %3626 = vmatpush.xpose.msra.mxu0 %v3625
    %v3627 = vand.u32 %v3316, 4294901760
    %v3628 = vsub.f32 %v3316, %v3627
    %v3629 = vand.u32 %v3628, 4294901760
    %v3630 = vsub.f32 %v3628, %v3629
    %v3631 = vand.u32 %v3630, 4294901760
    %3632 = vmatpush.xpose.msra.mxu0 %v3631
    %v3633 = vand.u32 %v3313, 4294901760
    %v3634 = vsub.f32 %v3313, %v3633
    %v3635 = vand.u32 %v3634, 4294901760
    %v3636 = vsub.f32 %v3634, %v3635
    %v3637 = vand.u32 %v3636, 4294901760
    %3638 = vmatpush.xpose.msra.mxu0 %v3637
    %v3639 = vand.u32 %v3310, 4294901760
    %v3640 = vsub.f32 %v3310, %v3639
    %v3641 = vand.u32 %v3640, 4294901760
    %v3642 = vsub.f32 %v3640, %v3641
    %v3643 = vand.u32 %v3642, 4294901760
    %3644 = vmatpush.xpose.msra.mxu0 %v3643
    %v3645 = vand.u32 %v3307, 4294901760
    %v3646 = vsub.f32 %v3307, %v3645
    %v3647 = vand.u32 %v3646, 4294901760
    %v3648 = vsub.f32 %v3646, %v3647
    %v3649 = vand.u32 %v3648, 4294901760
    %3650 = vmatpush.xpose.msra.mxu0 %v3649
    %v3651 = vand.u32 %v3298, 4294901760
    %3652 = vmatmul.f32.gmra.mxu0 %v3651
    %v3653 = vpop.f32.mrf.mxu0
    %v3654 = vadd.f32 %v3537, %v3653
    %v3655 = vand.u32 %v3301, 4294901760
    %3656 = vmatmul.f32.gmra.mxu0 %v3655
    %v3657 = vpop.f32.mrf.mxu0
    %v3658 = vadd.f32 %v3545, %v3657
    %v3659 = vand.u32 %v3304, 4294901760
    %3660 = vmatmul.f32.gmra.mxu0 %v3659
    %v3661 = vpop.f32.mrf.mxu0
    %v3662 = vadd.f32 %v3553, %v3661
    %3663 = vdwg.mxu0
    %v3664 = vand.u32 %v3352, 4294901760
    %v3665 = vsub.f32 %v3352, %v3664
    %3666 = vmatpush.xpose.msra.mxu0 %v3665
    %v3667 = vand.u32 %v3349, 4294901760
    %v3668 = vsub.f32 %v3349, %v3667
    %3669 = vmatpush.xpose.msra.mxu0 %v3668
    %v3670 = vand.u32 %v3346, 4294901760
    %v3671 = vsub.f32 %v3346, %v3670
    %3672 = vmatpush.xpose.msra.mxu0 %v3671
    %v3673 = vand.u32 %v3343, 4294901760
    %v3674 = vsub.f32 %v3343, %v3673
    %3675 = vmatpush.xpose.msra.mxu0 %v3674
    %v3676 = vand.u32 %v3340, 4294901760
    %v3677 = vsub.f32 %v3340, %v3676
    %3678 = vmatpush.xpose.msra.mxu0 %v3677
    %v3679 = vand.u32 %v3337, 4294901760
    %v3680 = vsub.f32 %v3337, %v3679
    %3681 = vmatpush.xpose.msra.mxu0 %v3680
    %v3682 = vand.u32 %v3334, 4294901760
    %v3683 = vsub.f32 %v3334, %v3682
    %3684 = vmatpush.xpose.msra.mxu0 %v3683
    %v3685 = vand.u32 %v3331, 4294901760
    %v3686 = vsub.f32 %v3331, %v3685
    %3687 = vmatpush.xpose.msra.mxu0 %v3686
    %v3688 = vand.u32 %v3328, 4294901760
    %v3689 = vsub.f32 %v3328, %v3688
    %3690 = vmatpush.xpose.msra.mxu0 %v3689
    %v3691 = vand.u32 %v3325, 4294901760
    %v3692 = vsub.f32 %v3325, %v3691
    %3693 = vmatpush.xpose.msra.mxu0 %v3692
    %v3694 = vand.u32 %v3322, 4294901760
    %v3695 = vsub.f32 %v3322, %v3694
    %3696 = vmatpush.xpose.msra.mxu0 %v3695
    %v3697 = vand.u32 %v3319, 4294901760
    %v3698 = vsub.f32 %v3319, %v3697
    %3699 = vmatpush.xpose.msra.mxu0 %v3698
    %v3700 = vand.u32 %v3316, 4294901760
    %v3701 = vsub.f32 %v3316, %v3700
    %3702 = vmatpush.xpose.msra.mxu0 %v3701
    %v3703 = vand.u32 %v3313, 4294901760
    %v3704 = vsub.f32 %v3313, %v3703
    %3705 = vmatpush.xpose.msra.mxu0 %v3704
    %v3706 = vand.u32 %v3310, 4294901760
    %v3707 = vsub.f32 %v3310, %v3706
    %3708 = vmatpush.xpose.msra.mxu0 %v3707
    %v3709 = vand.u32 %v3307, 4294901760
    %v3710 = vsub.f32 %v3307, %v3709
    %3711 = vmatpush.xpose.msra.mxu0 %v3710
    %v3712 = vand.u32 %v3298, 4294901760
    %v3713 = vsub.f32 %v3298, %v3712
    %3714 = vmatmul.f32.gmra.mxu0 %v3713
    %v3715 = vpop.f32.mrf.mxu0
    %v3716 = vadd.f32 %v3654, %v3715
    %v3717 = vand.u32 %v3301, 4294901760
    %v3718 = vsub.f32 %v3301, %v3717
    %3719 = vmatmul.f32.gmra.mxu0 %v3718
    %v3720 = vpop.f32.mrf.mxu0
    %v3721 = vadd.f32 %v3658, %v3720
    %v3722 = vand.u32 %v3304, 4294901760
    %v3723 = vsub.f32 %v3304, %v3722
    %3724 = vmatmul.f32.gmra.mxu0 %v3723
    %v3725 = vpop.f32.mrf.mxu0
    %v3726 = vadd.f32 %v3662, %v3725
    %3727 = vdwg.mxu0
    %v3728 = vand.u32 %v3352, 4294901760
    %3729 = vmatpush.xpose.msra.mxu0 %v3728
    %v3730 = vand.u32 %v3349, 4294901760
    %3731 = vmatpush.xpose.msra.mxu0 %v3730
    %v3732 = vand.u32 %v3346, 4294901760
    %3733 = vmatpush.xpose.msra.mxu0 %v3732
    %v3734 = vand.u32 %v3343, 4294901760
    %3735 = vmatpush.xpose.msra.mxu0 %v3734
    %v3736 = vand.u32 %v3340, 4294901760
    %3737 = vmatpush.xpose.msra.mxu0 %v3736
    %v3738 = vand.u32 %v3337, 4294901760
    %3739 = vmatpush.xpose.msra.mxu0 %v3738
    %v3740 = vand.u32 %v3334, 4294901760
    %3741 = vmatpush.xpose.msra.mxu0 %v3740
    %v3742 = vand.u32 %v3331, 4294901760
    %3743 = vmatpush.xpose.msra.mxu0 %v3742
    %v3744 = vand.u32 %v3328, 4294901760
    %3745 = vmatpush.xpose.msra.mxu0 %v3744
    %v3746 = vand.u32 %v3325, 4294901760
    %3747 = vmatpush.xpose.msra.mxu0 %v3746
    %v3748 = vand.u32 %v3322, 4294901760
    %3749 = vmatpush.xpose.msra.mxu0 %v3748
    %v3750 = vand.u32 %v3319, 4294901760
    %3751 = vmatpush.xpose.msra.mxu0 %v3750
    %v3752 = vand.u32 %v3316, 4294901760
    %3753 = vmatpush.xpose.msra.mxu0 %v3752
    %v3754 = vand.u32 %v3313, 4294901760
    %3755 = vmatpush.xpose.msra.mxu0 %v3754
    %v3756 = vand.u32 %v3310, 4294901760
    %3757 = vmatpush.xpose.msra.mxu0 %v3756
    %v3758 = vand.u32 %v3307, 4294901760
    %3759 = vmatpush.xpose.msra.mxu0 %v3758
    %v3760 = vand.u32 %v3298, 4294901760
    %v3761 = vsub.f32 %v3298, %v3760
    %v3762 = vand.u32 %v3761, 4294901760
    %3763 = vmatmul.f32.gmra.mxu0 %v3762
    %v3764 = vpop.f32.mrf.mxu0
    %v3765 = vadd.f32 %v3716, %v3764
    %v3766 = vand.u32 %v3301, 4294901760
    %v3767 = vsub.f32 %v3301, %v3766
    %v3768 = vand.u32 %v3767, 4294901760
    %3769 = vmatmul.f32.gmra.mxu0 %v3768
    %v3770 = vpop.f32.mrf.mxu0
    %v3771 = vadd.f32 %v3721, %v3770
    %v3772 = vand.u32 %v3304, 4294901760
    %v3773 = vsub.f32 %v3304, %v3772
    %v3774 = vand.u32 %v3773, 4294901760
    %3775 = vmatmul.f32.gmra.mxu0 %v3774
    %v3776 = vpop.f32.mrf.mxu0
    %v3777 = vadd.f32 %v3726, %v3776
    %3778 = vdwg.mxu0
    %v3779 = vand.u32 %v3352, 4294901760
    %v3780 = vsub.f32 %v3352, %v3779
    %v3781 = vand.u32 %v3780, 4294901760
    %3782 = vmatpush.xpose.msra.mxu0 %v3781
    %v3783 = vand.u32 %v3349, 4294901760
    %v3784 = vsub.f32 %v3349, %v3783
    %v3785 = vand.u32 %v3784, 4294901760
    %3786 = vmatpush.xpose.msra.mxu0 %v3785
    %v3787 = vand.u32 %v3346, 4294901760
    %v3788 = vsub.f32 %v3346, %v3787
    %v3789 = vand.u32 %v3788, 4294901760
    %3790 = vmatpush.xpose.msra.mxu0 %v3789
    %v3791 = vand.u32 %v3343, 4294901760
    %v3792 = vsub.f32 %v3343, %v3791
    %v3793 = vand.u32 %v3792, 4294901760
    %3794 = vmatpush.xpose.msra.mxu0 %v3793
    %v3795 = vand.u32 %v3340, 4294901760
    %v3796 = vsub.f32 %v3340, %v3795
    %v3797 = vand.u32 %v3796, 4294901760
    %3798 = vmatpush.xpose.msra.mxu0 %v3797
    %v3799 = vand.u32 %v3337, 4294901760
    %v3800 = vsub.f32 %v3337, %v3799
    %v3801 = vand.u32 %v3800, 4294901760
    %3802 = vmatpush.xpose.msra.mxu0 %v3801
    %v3803 = vand.u32 %v3334, 4294901760
    %v3804 = vsub.f32 %v3334, %v3803
    %v3805 = vand.u32 %v3804, 4294901760
    %3806 = vmatpush.xpose.msra.mxu0 %v3805
    %v3807 = vand.u32 %v3331, 4294901760
    %v3808 = vsub.f32 %v3331, %v3807
    %v3809 = vand.u32 %v3808, 4294901760
    %3810 = vmatpush.xpose.msra.mxu0 %v3809
    %v3811 = vand.u32 %v3328, 4294901760
    %v3812 = vsub.f32 %v3328, %v3811
    %v3813 = vand.u32 %v3812, 4294901760
    %3814 = vmatpush.xpose.msra.mxu0 %v3813
    %v3815 = vand.u32 %v3325, 4294901760
    %v3816 = vsub.f32 %v3325, %v3815
    %v3817 = vand.u32 %v3816, 4294901760
    %3818 = vmatpush.xpose.msra.mxu0 %v3817
    %v3819 = vand.u32 %v3322, 4294901760
    %v3820 = vsub.f32 %v3322, %v3819
    %v3821 = vand.u32 %v3820, 4294901760
    %3822 = vmatpush.xpose.msra.mxu0 %v3821
    %v3823 = vand.u32 %v3319, 4294901760
    %v3824 = vsub.f32 %v3319, %v3823
    %v3825 = vand.u32 %v3824, 4294901760
    %3826 = vmatpush.xpose.msra.mxu0 %v3825
    %v3827 = vand.u32 %v3316, 4294901760
    %v3828 = vsub.f32 %v3316, %v3827
    %v3829 = vand.u32 %v3828, 4294901760
    %3830 = vmatpush.xpose.msra.mxu0 %v3829
    %v3831 = vand.u32 %v3313, 4294901760
    %v3832 = vsub.f32 %v3313, %v3831
    %v3833 = vand.u32 %v3832, 4294901760
    %3834 = vmatpush.xpose.msra.mxu0 %v3833
    %v3835 = vand.u32 %v3310, 4294901760
    %v3836 = vsub.f32 %v3310, %v3835
    %v3837 = vand.u32 %v3836, 4294901760
    %3838 = vmatpush.xpose.msra.mxu0 %v3837
    %v3839 = vand.u32 %v3307, 4294901760
    %v3840 = vsub.f32 %v3307, %v3839
    %v3841 = vand.u32 %v3840, 4294901760
    %3842 = vmatpush.xpose.msra.mxu0 %v3841
    %v3843 = vand.u32 %v3298, 4294901760
    %3844 = vmatmul.f32.gmra.mxu0 %v3843
    %v3845 = vpop.f32.mrf.mxu0
    %v3846 = vadd.f32 %v3765, %v3845
    %v3847 = vand.u32 %v3301, 4294901760
    %3848 = vmatmul.f32.gmra.mxu0 %v3847
    %v3849 = vpop.f32.mrf.mxu0
    %v3850 = vadd.f32 %v3771, %v3849
    %v3851 = vand.u32 %v3304, 4294901760
    %3852 = vmatmul.f32.gmra.mxu0 %v3851
    %v3853 = vpop.f32.mrf.mxu0
    %v3854 = vadd.f32 %v3777, %v3853
    %3855 = vdwg.mxu0
    %v3856 = vand.u32 %v3352, 4294901760
    %3857 = vmatpush.xpose.msra.mxu0 %v3856
    %v3858 = vand.u32 %v3349, 4294901760
    %3859 = vmatpush.xpose.msra.mxu0 %v3858
    %v3860 = vand.u32 %v3346, 4294901760
    %3861 = vmatpush.xpose.msra.mxu0 %v3860
    %v3862 = vand.u32 %v3343, 4294901760
    %3863 = vmatpush.xpose.msra.mxu0 %v3862
    %v3864 = vand.u32 %v3340, 4294901760
    %3865 = vmatpush.xpose.msra.mxu0 %v3864
    %v3866 = vand.u32 %v3337, 4294901760
    %3867 = vmatpush.xpose.msra.mxu0 %v3866
    %v3868 = vand.u32 %v3334, 4294901760
    %3869 = vmatpush.xpose.msra.mxu0 %v3868
    %v3870 = vand.u32 %v3331, 4294901760
    %3871 = vmatpush.xpose.msra.mxu0 %v3870
    %v3872 = vand.u32 %v3328, 4294901760
    %3873 = vmatpush.xpose.msra.mxu0 %v3872
    %v3874 = vand.u32 %v3325, 4294901760
    %3875 = vmatpush.xpose.msra.mxu0 %v3874
    %v3876 = vand.u32 %v3322, 4294901760
    %3877 = vmatpush.xpose.msra.mxu0 %v3876
    %v3878 = vand.u32 %v3319, 4294901760
    %3879 = vmatpush.xpose.msra.mxu0 %v3878
    %v3880 = vand.u32 %v3316, 4294901760
    %3881 = vmatpush.xpose.msra.mxu0 %v3880
    %v3882 = vand.u32 %v3313, 4294901760
    %3883 = vmatpush.xpose.msra.mxu0 %v3882
    %v3884 = vand.u32 %v3310, 4294901760
    %3885 = vmatpush.xpose.msra.mxu0 %v3884
    %v3886 = vand.u32 %v3307, 4294901760
    %3887 = vmatpush.xpose.msra.mxu0 %v3886
    %v3888 = vand.u32 %v3298, 4294901760
    %3889 = vmatmul.f32.gmra.mxu0 %v3888
    %v3890 = vpop.f32.mrf.mxu0
    %v3891 = vadd.f32 %v3846, %v3890
    %v3892 = vand.u32 %v3301, 4294901760
    %3893 = vmatmul.f32.gmra.mxu0 %v3892
    %v3894 = vpop.f32.mrf.mxu0
    %v3895 = vadd.f32 %v3850, %v3894
    %v3896 = vand.u32 %v3304, 4294901760
    %3897 = vmatmul.f32.gmra.mxu0 %v3896
    %v3898 = vpop.f32.mrf.mxu0
    %v3899 = vadd.f32 %v3854, %v3898
    %3900 = vdwg.mxu0
    %v3901 = vand.u32 %v3400, 4294901760
    %3902 = vmatpush.xpose.msra.mxu0 %v3901
    %v3903 = vand.u32 %v3397, 4294901760
    %3904 = vmatpush.xpose.msra.mxu0 %v3903
    %v3905 = vand.u32 %v3394, 4294901760
    %3906 = vmatpush.xpose.msra.mxu0 %v3905
    %v3907 = vand.u32 %v3391, 4294901760
    %3908 = vmatpush.xpose.msra.mxu0 %v3907
    %v3909 = vand.u32 %v3388, 4294901760
    %3910 = vmatpush.xpose.msra.mxu0 %v3909
    %v3911 = vand.u32 %v3385, 4294901760
    %3912 = vmatpush.xpose.msra.mxu0 %v3911
    %v3913 = vand.u32 %v3382, 4294901760
    %3914 = vmatpush.xpose.msra.mxu0 %v3913
    %v3915 = vand.u32 %v3379, 4294901760
    %3916 = vmatpush.xpose.msra.mxu0 %v3915
    %v3917 = vand.u32 %v3376, 4294901760
    %3918 = vmatpush.xpose.msra.mxu0 %v3917
    %v3919 = vand.u32 %v3373, 4294901760
    %3920 = vmatpush.xpose.msra.mxu0 %v3919
    %v3921 = vand.u32 %v3370, 4294901760
    %3922 = vmatpush.xpose.msra.mxu0 %v3921
    %v3923 = vand.u32 %v3367, 4294901760
    %3924 = vmatpush.xpose.msra.mxu0 %v3923
    %v3925 = vand.u32 %v3364, 4294901760
    %3926 = vmatpush.xpose.msra.mxu0 %v3925
    %v3927 = vand.u32 %v3361, 4294901760
    %3928 = vmatpush.xpose.msra.mxu0 %v3927
    %v3929 = vand.u32 %v3358, 4294901760
    %3930 = vmatpush.xpose.msra.mxu0 %v3929
    %v3931 = vand.u32 %v3355, 4294901760
    %3932 = vmatpush.xpose.msra.mxu0 %v3931
    %v3933 = vand.u32 %v3298, 4294901760
    %v3934 = vsub.f32 %v3298, %v3933
    %v3935 = vand.u32 %v3934, 4294901760
    %v3936 = vsub.f32 %v3934, %v3935
    %v3937 = vand.u32 %v3936, 4294901760
    %3938 = vmatmul.f32.gmra.mxu0 %v3937
    %v3939 = vpop.f32.mrf.mxu0
    %v3940 = vadd.f32 0.0, %v3939
    %v3941 = vand.u32 %v3301, 4294901760
    %v3942 = vsub.f32 %v3301, %v3941
    %v3943 = vand.u32 %v3942, 4294901760
    %v3944 = vsub.f32 %v3942, %v3943
    %v3945 = vand.u32 %v3944, 4294901760
    %3946 = vmatmul.f32.gmra.mxu0 %v3945
    %v3947 = vpop.f32.mrf.mxu0
    %v3948 = vadd.f32 0.0, %v3947
    %v3949 = vand.u32 %v3304, 4294901760
    %v3950 = vsub.f32 %v3304, %v3949
    %v3951 = vand.u32 %v3950, 4294901760
    %v3952 = vsub.f32 %v3950, %v3951
    %v3953 = vand.u32 %v3952, 4294901760
    %3954 = vmatmul.f32.gmra.mxu0 %v3953
    %v3955 = vpop.f32.mrf.mxu0
    %v3956 = vadd.f32 0.0, %v3955
    %3957 = vdwg.mxu0
    %v3958 = vand.u32 %v3400, 4294901760
    %v3959 = vsub.f32 %v3400, %v3958
    %v3960 = vand.u32 %v3959, 4294901760
    %v3961 = vsub.f32 %v3959, %v3960
    %v3962 = vand.u32 %v3961, 4294901760
    %3963 = vmatpush.xpose.msra.mxu0 %v3962
    %v3964 = vand.u32 %v3397, 4294901760
    %v3965 = vsub.f32 %v3397, %v3964
    %v3966 = vand.u32 %v3965, 4294901760
    %v3967 = vsub.f32 %v3965, %v3966
    %v3968 = vand.u32 %v3967, 4294901760
    %3969 = vmatpush.xpose.msra.mxu0 %v3968
    %v3970 = vand.u32 %v3394, 4294901760
    %v3971 = vsub.f32 %v3394, %v3970
    %v3972 = vand.u32 %v3971, 4294901760
    %v3973 = vsub.f32 %v3971, %v3972
    %v3974 = vand.u32 %v3973, 4294901760
    %3975 = vmatpush.xpose.msra.mxu0 %v3974
    %v3976 = vand.u32 %v3391, 4294901760
    %v3977 = vsub.f32 %v3391, %v3976
    %v3978 = vand.u32 %v3977, 4294901760
    %v3979 = vsub.f32 %v3977, %v3978
    %v3980 = vand.u32 %v3979, 4294901760
    %3981 = vmatpush.xpose.msra.mxu0 %v3980
    %v3982 = vand.u32 %v3388, 4294901760
    %v3983 = vsub.f32 %v3388, %v3982
    %v3984 = vand.u32 %v3983, 4294901760
    %v3985 = vsub.f32 %v3983, %v3984
    %v3986 = vand.u32 %v3985, 4294901760
    %3987 = vmatpush.xpose.msra.mxu0 %v3986
    %v3988 = vand.u32 %v3385, 4294901760
    %v3989 = vsub.f32 %v3385, %v3988
    %v3990 = vand.u32 %v3989, 4294901760
    %v3991 = vsub.f32 %v3989, %v3990
    %v3992 = vand.u32 %v3991, 4294901760
    %3993 = vmatpush.xpose.msra.mxu0 %v3992
    %v3994 = vand.u32 %v3382, 4294901760
    %v3995 = vsub.f32 %v3382, %v3994
    %v3996 = vand.u32 %v3995, 4294901760
    %v3997 = vsub.f32 %v3995, %v3996
    %v3998 = vand.u32 %v3997, 4294901760
    %3999 = vmatpush.xpose.msra.mxu0 %v3998
    %v4000 = vand.u32 %v3379, 4294901760
    %v4001 = vsub.f32 %v3379, %v4000
    %v4002 = vand.u32 %v4001, 4294901760
    %v4003 = vsub.f32 %v4001, %v4002
    %v4004 = vand.u32 %v4003, 4294901760
    %4005 = vmatpush.xpose.msra.mxu0 %v4004
    %v4006 = vand.u32 %v3376, 4294901760
    %v4007 = vsub.f32 %v3376, %v4006
    %v4008 = vand.u32 %v4007, 4294901760
    %v4009 = vsub.f32 %v4007, %v4008
    %v4010 = vand.u32 %v4009, 4294901760
    %4011 = vmatpush.xpose.msra.mxu0 %v4010
    %v4012 = vand.u32 %v3373, 4294901760
    %v4013 = vsub.f32 %v3373, %v4012
    %v4014 = vand.u32 %v4013, 4294901760
    %v4015 = vsub.f32 %v4013, %v4014
    %v4016 = vand.u32 %v4015, 4294901760
    %4017 = vmatpush.xpose.msra.mxu0 %v4016
    %v4018 = vand.u32 %v3370, 4294901760
    %v4019 = vsub.f32 %v3370, %v4018
    %v4020 = vand.u32 %v4019, 4294901760
    %v4021 = vsub.f32 %v4019, %v4020
    %v4022 = vand.u32 %v4021, 4294901760
    %4023 = vmatpush.xpose.msra.mxu0 %v4022
    %v4024 = vand.u32 %v3367, 4294901760
    %v4025 = vsub.f32 %v3367, %v4024
    %v4026 = vand.u32 %v4025, 4294901760
    %v4027 = vsub.f32 %v4025, %v4026
    %v4028 = vand.u32 %v4027, 4294901760
    %4029 = vmatpush.xpose.msra.mxu0 %v4028
    %v4030 = vand.u32 %v3364, 4294901760
    %v4031 = vsub.f32 %v3364, %v4030
    %v4032 = vand.u32 %v4031, 4294901760
    %v4033 = vsub.f32 %v4031, %v4032
    %v4034 = vand.u32 %v4033, 4294901760
    %4035 = vmatpush.xpose.msra.mxu0 %v4034
    %v4036 = vand.u32 %v3361, 4294901760
    %v4037 = vsub.f32 %v3361, %v4036
    %v4038 = vand.u32 %v4037, 4294901760
    %v4039 = vsub.f32 %v4037, %v4038
    %v4040 = vand.u32 %v4039, 4294901760
    %4041 = vmatpush.xpose.msra.mxu0 %v4040
    %v4042 = vand.u32 %v3358, 4294901760
    %v4043 = vsub.f32 %v3358, %v4042
    %v4044 = vand.u32 %v4043, 4294901760
    %v4045 = vsub.f32 %v4043, %v4044
    %v4046 = vand.u32 %v4045, 4294901760
    %4047 = vmatpush.xpose.msra.mxu0 %v4046
    %v4048 = vand.u32 %v3355, 4294901760
    %v4049 = vsub.f32 %v3355, %v4048
    %v4050 = vand.u32 %v4049, 4294901760
    %v4051 = vsub.f32 %v4049, %v4050
    %v4052 = vand.u32 %v4051, 4294901760
    %4053 = vmatpush.xpose.msra.mxu0 %v4052
    %v4054 = vand.u32 %v3298, 4294901760
    %4055 = vmatmul.f32.gmra.mxu0 %v4054
    %v4056 = vpop.f32.mrf.mxu0
    %v4057 = vadd.f32 %v3940, %v4056
    %v4058 = vand.u32 %v3301, 4294901760
    %4059 = vmatmul.f32.gmra.mxu0 %v4058
    %v4060 = vpop.f32.mrf.mxu0
    %v4061 = vadd.f32 %v3948, %v4060
    %v4062 = vand.u32 %v3304, 4294901760
    %4063 = vmatmul.f32.gmra.mxu0 %v4062
    %v4064 = vpop.f32.mrf.mxu0
    %v4065 = vadd.f32 %v3956, %v4064
    %4066 = vdwg.mxu0
    %v4067 = vand.u32 %v3400, 4294901760
    %v4068 = vsub.f32 %v3400, %v4067
    %4069 = vmatpush.xpose.msra.mxu0 %v4068
    %v4070 = vand.u32 %v3397, 4294901760
    %v4071 = vsub.f32 %v3397, %v4070
    %4072 = vmatpush.xpose.msra.mxu0 %v4071
    %v4073 = vand.u32 %v3394, 4294901760
    %v4074 = vsub.f32 %v3394, %v4073
    %4075 = vmatpush.xpose.msra.mxu0 %v4074
    %v4076 = vand.u32 %v3391, 4294901760
    %v4077 = vsub.f32 %v3391, %v4076
    %4078 = vmatpush.xpose.msra.mxu0 %v4077
    %v4079 = vand.u32 %v3388, 4294901760
    %v4080 = vsub.f32 %v3388, %v4079
    %4081 = vmatpush.xpose.msra.mxu0 %v4080
    %v4082 = vand.u32 %v3385, 4294901760
    %v4083 = vsub.f32 %v3385, %v4082
    %4084 = vmatpush.xpose.msra.mxu0 %v4083
    %v4085 = vand.u32 %v3382, 4294901760
    %v4086 = vsub.f32 %v3382, %v4085
    %4087 = vmatpush.xpose.msra.mxu0 %v4086
    %v4088 = vand.u32 %v3379, 4294901760
    %v4089 = vsub.f32 %v3379, %v4088
    %4090 = vmatpush.xpose.msra.mxu0 %v4089
    %v4091 = vand.u32 %v3376, 4294901760
    %v4092 = vsub.f32 %v3376, %v4091
    %4093 = vmatpush.xpose.msra.mxu0 %v4092
    %v4094 = vand.u32 %v3373, 4294901760
    %v4095 = vsub.f32 %v3373, %v4094
    %4096 = vmatpush.xpose.msra.mxu0 %v4095
    %v4097 = vand.u32 %v3370, 4294901760
    %v4098 = vsub.f32 %v3370, %v4097
    %4099 = vmatpush.xpose.msra.mxu0 %v4098
    %v4100 = vand.u32 %v3367, 4294901760
    %v4101 = vsub.f32 %v3367, %v4100
    %4102 = vmatpush.xpose.msra.mxu0 %v4101
    %v4103 = vand.u32 %v3364, 4294901760
    %v4104 = vsub.f32 %v3364, %v4103
    %4105 = vmatpush.xpose.msra.mxu0 %v4104
    %v4106 = vand.u32 %v3361, 4294901760
    %v4107 = vsub.f32 %v3361, %v4106
    %4108 = vmatpush.xpose.msra.mxu0 %v4107
    %v4109 = vand.u32 %v3358, 4294901760
    %v4110 = vsub.f32 %v3358, %v4109
    %4111 = vmatpush.xpose.msra.mxu0 %v4110
    %v4112 = vand.u32 %v3355, 4294901760
    %v4113 = vsub.f32 %v3355, %v4112
    %4114 = vmatpush.xpose.msra.mxu0 %v4113
    %v4115 = vand.u32 %v3298, 4294901760
    %v4116 = vsub.f32 %v3298, %v4115
    %4117 = vmatmul.f32.gmra.mxu0 %v4116
    %v4118 = vpop.f32.mrf.mxu0
    %v4119 = vadd.f32 %v4057, %v4118
    %v4120 = vand.u32 %v3301, 4294901760
    %v4121 = vsub.f32 %v3301, %v4120
    %4122 = vmatmul.f32.gmra.mxu0 %v4121
    %v4123 = vpop.f32.mrf.mxu0
    %v4124 = vadd.f32 %v4061, %v4123
    %v4125 = vand.u32 %v3304, 4294901760
    %v4126 = vsub.f32 %v3304, %v4125
    %4127 = vmatmul.f32.gmra.mxu0 %v4126
    %v4128 = vpop.f32.mrf.mxu0
    %v4129 = vadd.f32 %v4065, %v4128
    %4130 = vdwg.mxu0
    %v4131 = vand.u32 %v3400, 4294901760
    %4132 = vmatpush.xpose.msra.mxu0 %v4131
    %v4133 = vand.u32 %v3397, 4294901760
    %4134 = vmatpush.xpose.msra.mxu0 %v4133
    %v4135 = vand.u32 %v3394, 4294901760
    %4136 = vmatpush.xpose.msra.mxu0 %v4135
    %v4137 = vand.u32 %v3391, 4294901760
    %4138 = vmatpush.xpose.msra.mxu0 %v4137
    %v4139 = vand.u32 %v3388, 4294901760
    %4140 = vmatpush.xpose.msra.mxu0 %v4139
    %v4141 = vand.u32 %v3385, 4294901760
    %4142 = vmatpush.xpose.msra.mxu0 %v4141
    %v4143 = vand.u32 %v3382, 4294901760
    %4144 = vmatpush.xpose.msra.mxu0 %v4143
    %v4145 = vand.u32 %v3379, 4294901760
    %4146 = vmatpush.xpose.msra.mxu0 %v4145
    %v4147 = vand.u32 %v3376, 4294901760
    %4148 = vmatpush.xpose.msra.mxu0 %v4147
    %v4149 = vand.u32 %v3373, 4294901760
    %4150 = vmatpush.xpose.msra.mxu0 %v4149
    %v4151 = vand.u32 %v3370, 4294901760
    %4152 = vmatpush.xpose.msra.mxu0 %v4151
    %v4153 = vand.u32 %v3367, 4294901760
    %4154 = vmatpush.xpose.msra.mxu0 %v4153
    %v4155 = vand.u32 %v3364, 4294901760
    %4156 = vmatpush.xpose.msra.mxu0 %v4155
    %v4157 = vand.u32 %v3361, 4294901760
    %4158 = vmatpush.xpose.msra.mxu0 %v4157
    %v4159 = vand.u32 %v3358, 4294901760
    %4160 = vmatpush.xpose.msra.mxu0 %v4159
    %v4161 = vand.u32 %v3355, 4294901760
    %4162 = vmatpush.xpose.msra.mxu0 %v4161
    %v4163 = vand.u32 %v3298, 4294901760
    %v4164 = vsub.f32 %v3298, %v4163
    %v4165 = vand.u32 %v4164, 4294901760
    %4166 = vmatmul.f32.gmra.mxu0 %v4165
    %v4167 = vpop.f32.mrf.mxu0
    %v4168 = vadd.f32 %v4119, %v4167
    %v4169 = vand.u32 %v3301, 4294901760
    %v4170 = vsub.f32 %v3301, %v4169
    %v4171 = vand.u32 %v4170, 4294901760
    %4172 = vmatmul.f32.gmra.mxu0 %v4171
    %v4173 = vpop.f32.mrf.mxu0
    %v4174 = vadd.f32 %v4124, %v4173
    %v4175 = vand.u32 %v3304, 4294901760
    %v4176 = vsub.f32 %v3304, %v4175
    %v4177 = vand.u32 %v4176, 4294901760
    %4178 = vmatmul.f32.gmra.mxu0 %v4177
    %v4179 = vpop.f32.mrf.mxu0
    %v4180 = vadd.f32 %v4129, %v4179
    %4181 = vdwg.mxu0
    %v4182 = vand.u32 %v3400, 4294901760
    %v4183 = vsub.f32 %v3400, %v4182
    %v4184 = vand.u32 %v4183, 4294901760
    %4185 = vmatpush.xpose.msra.mxu0 %v4184
    %v4186 = vand.u32 %v3397, 4294901760
    %v4187 = vsub.f32 %v3397, %v4186
    %v4188 = vand.u32 %v4187, 4294901760
    %4189 = vmatpush.xpose.msra.mxu0 %v4188
    %v4190 = vand.u32 %v3394, 4294901760
    %v4191 = vsub.f32 %v3394, %v4190
    %v4192 = vand.u32 %v4191, 4294901760
    %4193 = vmatpush.xpose.msra.mxu0 %v4192
    %v4194 = vand.u32 %v3391, 4294901760
    %v4195 = vsub.f32 %v3391, %v4194
    %v4196 = vand.u32 %v4195, 4294901760
    %4197 = vmatpush.xpose.msra.mxu0 %v4196
    %v4198 = vand.u32 %v3388, 4294901760
    %v4199 = vsub.f32 %v3388, %v4198
    %v4200 = vand.u32 %v4199, 4294901760
    %4201 = vmatpush.xpose.msra.mxu0 %v4200
    %v4202 = vand.u32 %v3385, 4294901760
    %v4203 = vsub.f32 %v3385, %v4202
    %v4204 = vand.u32 %v4203, 4294901760
    %4205 = vmatpush.xpose.msra.mxu0 %v4204
    %v4206 = vand.u32 %v3382, 4294901760
    %v4207 = vsub.f32 %v3382, %v4206
    %v4208 = vand.u32 %v4207, 4294901760
    %4209 = vmatpush.xpose.msra.mxu0 %v4208
    %v4210 = vand.u32 %v3379, 4294901760
    %v4211 = vsub.f32 %v3379, %v4210
    %v4212 = vand.u32 %v4211, 4294901760
    %4213 = vmatpush.xpose.msra.mxu0 %v4212
    %v4214 = vand.u32 %v3376, 4294901760
    %v4215 = vsub.f32 %v3376, %v4214
    %v4216 = vand.u32 %v4215, 4294901760
    %4217 = vmatpush.xpose.msra.mxu0 %v4216
    %v4218 = vand.u32 %v3373, 4294901760
    %v4219 = vsub.f32 %v3373, %v4218
    %v4220 = vand.u32 %v4219, 4294901760
    %4221 = vmatpush.xpose.msra.mxu0 %v4220
    %v4222 = vand.u32 %v3370, 4294901760
    %v4223 = vsub.f32 %v3370, %v4222
    %v4224 = vand.u32 %v4223, 4294901760
    %4225 = vmatpush.xpose.msra.mxu0 %v4224
    %v4226 = vand.u32 %v3367, 4294901760
    %v4227 = vsub.f32 %v3367, %v4226
    %v4228 = vand.u32 %v4227, 4294901760
    %4229 = vmatpush.xpose.msra.mxu0 %v4228
    %v4230 = vand.u32 %v3364, 4294901760
    %v4231 = vsub.f32 %v3364, %v4230
    %v4232 = vand.u32 %v4231, 4294901760
    %4233 = vmatpush.xpose.msra.mxu0 %v4232
    %v4234 = vand.u32 %v3361, 4294901760
    %v4235 = vsub.f32 %v3361, %v4234
    %v4236 = vand.u32 %v4235, 4294901760
    %4237 = vmatpush.xpose.msra.mxu0 %v4236
    %v4238 = vand.u32 %v3358, 4294901760
    %v4239 = vsub.f32 %v3358, %v4238
    %v4240 = vand.u32 %v4239, 4294901760
    %4241 = vmatpush.xpose.msra.mxu0 %v4240
    %v4242 = vand.u32 %v3355, 4294901760
    %v4243 = vsub.f32 %v3355, %v4242
    %v4244 = vand.u32 %v4243, 4294901760
    %4245 = vmatpush.xpose.msra.mxu0 %v4244
    %v4246 = vand.u32 %v3298, 4294901760
    %4247 = vmatmul.f32.gmra.mxu0 %v4246
    %v4248 = vpop.f32.mrf.mxu0
    %v4249 = vadd.f32 %v4168, %v4248
    %v4250 = vand.u32 %v3301, 4294901760
    %4251 = vmatmul.f32.gmra.mxu0 %v4250
    %v4252 = vpop.f32.mrf.mxu0
    %v4253 = vadd.f32 %v4174, %v4252
    %v4254 = vand.u32 %v3304, 4294901760
    %4255 = vmatmul.f32.gmra.mxu0 %v4254
    %v4256 = vpop.f32.mrf.mxu0
    %v4257 = vadd.f32 %v4180, %v4256
    %4258 = vdwg.mxu0
    %v4259 = vand.u32 %v3400, 4294901760
    %4260 = vmatpush.xpose.msra.mxu0 %v4259
    %v4261 = vand.u32 %v3397, 4294901760
    %4262 = vmatpush.xpose.msra.mxu0 %v4261
    %v4263 = vand.u32 %v3394, 4294901760
    %4264 = vmatpush.xpose.msra.mxu0 %v4263
    %v4265 = vand.u32 %v3391, 4294901760
    %4266 = vmatpush.xpose.msra.mxu0 %v4265
    %v4267 = vand.u32 %v3388, 4294901760
    %4268 = vmatpush.xpose.msra.mxu0 %v4267
    %v4269 = vand.u32 %v3385, 4294901760
    %4270 = vmatpush.xpose.msra.mxu0 %v4269
    %v4271 = vand.u32 %v3382, 4294901760
    %4272 = vmatpush.xpose.msra.mxu0 %v4271
    %v4273 = vand.u32 %v3379, 4294901760
    %4274 = vmatpush.xpose.msra.mxu0 %v4273
    %v4275 = vand.u32 %v3376, 4294901760
    %4276 = vmatpush.xpose.msra.mxu0 %v4275
    %v4277 = vand.u32 %v3373, 4294901760
    %4278 = vmatpush.xpose.msra.mxu0 %v4277
    %v4279 = vand.u32 %v3370, 4294901760
    %4280 = vmatpush.xpose.msra.mxu0 %v4279
    %v4281 = vand.u32 %v3367, 4294901760
    %4282 = vmatpush.xpose.msra.mxu0 %v4281
    %v4283 = vand.u32 %v3364, 4294901760
    %4284 = vmatpush.xpose.msra.mxu0 %v4283
    %v4285 = vand.u32 %v3361, 4294901760
    %4286 = vmatpush.xpose.msra.mxu0 %v4285
    %v4287 = vand.u32 %v3358, 4294901760
    %4288 = vmatpush.xpose.msra.mxu0 %v4287
    %v4289 = vand.u32 %v3355, 4294901760
    %4290 = vmatpush.xpose.msra.mxu0 %v4289
    %v4291 = vand.u32 %v3298, 4294901760
    %4292 = vmatmul.f32.gmra.mxu0 %v4291
    %v4293 = vpop.f32.mrf.mxu0
    %v4294 = vadd.f32 %v4249, %v4293
    %v4295 = vand.u32 %v3301, 4294901760
    %4296 = vmatmul.f32.gmra.mxu0 %v4295
    %v4297 = vpop.f32.mrf.mxu0
    %v4298 = vadd.f32 %v4253, %v4297
    %v4299 = vand.u32 %v3304, 4294901760
    %4300 = vmatmul.f32.gmra.mxu0 %v4299
    %v4301 = vpop.f32.mrf.mxu0
    %v4302 = vadd.f32 %v4257, %v4301
    %4303 = vdwg.mxu0
    %v4304 = vand.u32 %v3448, 4294901760
    %4305 = vmatpush.xpose.msra.mxu0 %v4304
    %v4306 = vand.u32 %v3445, 4294901760
    %4307 = vmatpush.xpose.msra.mxu0 %v4306
    %v4308 = vand.u32 %v3442, 4294901760
    %4309 = vmatpush.xpose.msra.mxu0 %v4308
    %v4310 = vand.u32 %v3439, 4294901760
    %4311 = vmatpush.xpose.msra.mxu0 %v4310
    %v4312 = vand.u32 %v3436, 4294901760
    %4313 = vmatpush.xpose.msra.mxu0 %v4312
    %v4314 = vand.u32 %v3433, 4294901760
    %4315 = vmatpush.xpose.msra.mxu0 %v4314
    %v4316 = vand.u32 %v3430, 4294901760
    %4317 = vmatpush.xpose.msra.mxu0 %v4316
    %v4318 = vand.u32 %v3427, 4294901760
    %4319 = vmatpush.xpose.msra.mxu0 %v4318
    %v4320 = vand.u32 %v3424, 4294901760
    %4321 = vmatpush.xpose.msra.mxu0 %v4320
    %v4322 = vand.u32 %v3421, 4294901760
    %4323 = vmatpush.xpose.msra.mxu0 %v4322
    %v4324 = vand.u32 %v3418, 4294901760
    %4325 = vmatpush.xpose.msra.mxu0 %v4324
    %v4326 = vand.u32 %v3415, 4294901760
    %4327 = vmatpush.xpose.msra.mxu0 %v4326
    %v4328 = vand.u32 %v3412, 4294901760
    %4329 = vmatpush.xpose.msra.mxu0 %v4328
    %v4330 = vand.u32 %v3409, 4294901760
    %4331 = vmatpush.xpose.msra.mxu0 %v4330
    %v4332 = vand.u32 %v3406, 4294901760
    %4333 = vmatpush.xpose.msra.mxu0 %v4332
    %v4334 = vand.u32 %v3403, 4294901760
    %4335 = vmatpush.xpose.msra.mxu0 %v4334
    %v4336 = vand.u32 %v3298, 4294901760
    %v4337 = vsub.f32 %v3298, %v4336
    %v4338 = vand.u32 %v4337, 4294901760
    %v4339 = vsub.f32 %v4337, %v4338
    %v4340 = vand.u32 %v4339, 4294901760
    %4341 = vmatmul.f32.gmra.mxu0 %v4340
    %v4342 = vpop.f32.mrf.mxu0
    %v4343 = vadd.f32 0.0, %v4342
    %v4344 = vand.u32 %v3301, 4294901760
    %v4345 = vsub.f32 %v3301, %v4344
    %v4346 = vand.u32 %v4345, 4294901760
    %v4347 = vsub.f32 %v4345, %v4346
    %v4348 = vand.u32 %v4347, 4294901760
    %4349 = vmatmul.f32.gmra.mxu0 %v4348
    %v4350 = vpop.f32.mrf.mxu0
    %v4351 = vadd.f32 0.0, %v4350
    %v4352 = vand.u32 %v3304, 4294901760
    %v4353 = vsub.f32 %v3304, %v4352
    %v4354 = vand.u32 %v4353, 4294901760
    %v4355 = vsub.f32 %v4353, %v4354
    %v4356 = vand.u32 %v4355, 4294901760
    %4357 = vmatmul.f32.gmra.mxu0 %v4356
    %v4358 = vpop.f32.mrf.mxu0
    %v4359 = vadd.f32 0.0, %v4358
    %4360 = vdwg.mxu0
    %v4361 = vand.u32 %v3448, 4294901760
    %v4362 = vsub.f32 %v3448, %v4361
    %v4363 = vand.u32 %v4362, 4294901760
    %v4364 = vsub.f32 %v4362, %v4363
    %v4365 = vand.u32 %v4364, 4294901760
    %4366 = vmatpush.xpose.msra.mxu0 %v4365
    %v4367 = vand.u32 %v3445, 4294901760
    %v4368 = vsub.f32 %v3445, %v4367
    %v4369 = vand.u32 %v4368, 4294901760
    %v4370 = vsub.f32 %v4368, %v4369
    %v4371 = vand.u32 %v4370, 4294901760
    %4372 = vmatpush.xpose.msra.mxu0 %v4371
    %v4373 = vand.u32 %v3442, 4294901760
    %v4374 = vsub.f32 %v3442, %v4373
    %v4375 = vand.u32 %v4374, 4294901760
    %v4376 = vsub.f32 %v4374, %v4375
    %v4377 = vand.u32 %v4376, 4294901760
    %4378 = vmatpush.xpose.msra.mxu0 %v4377
    %v4379 = vand.u32 %v3439, 4294901760
    %v4380 = vsub.f32 %v3439, %v4379
    %v4381 = vand.u32 %v4380, 4294901760
    %v4382 = vsub.f32 %v4380, %v4381
    %v4383 = vand.u32 %v4382, 4294901760
    %4384 = vmatpush.xpose.msra.mxu0 %v4383
    %v4385 = vand.u32 %v3436, 4294901760
    %v4386 = vsub.f32 %v3436, %v4385
    %v4387 = vand.u32 %v4386, 4294901760
    %v4388 = vsub.f32 %v4386, %v4387
    %v4389 = vand.u32 %v4388, 4294901760
    %4390 = vmatpush.xpose.msra.mxu0 %v4389
    %v4391 = vand.u32 %v3433, 4294901760
    %v4392 = vsub.f32 %v3433, %v4391
    %v4393 = vand.u32 %v4392, 4294901760
    %v4394 = vsub.f32 %v4392, %v4393
    %v4395 = vand.u32 %v4394, 4294901760
    %4396 = vmatpush.xpose.msra.mxu0 %v4395
    %v4397 = vand.u32 %v3430, 4294901760
    %v4398 = vsub.f32 %v3430, %v4397
    %v4399 = vand.u32 %v4398, 4294901760
    %v4400 = vsub.f32 %v4398, %v4399
    %v4401 = vand.u32 %v4400, 4294901760
    %4402 = vmatpush.xpose.msra.mxu0 %v4401
    %v4403 = vand.u32 %v3427, 4294901760
    %v4404 = vsub.f32 %v3427, %v4403
    %v4405 = vand.u32 %v4404, 4294901760
    %v4406 = vsub.f32 %v4404, %v4405
    %v4407 = vand.u32 %v4406, 4294901760
    %4408 = vmatpush.xpose.msra.mxu0 %v4407
    %v4409 = vand.u32 %v3424, 4294901760
    %v4410 = vsub.f32 %v3424, %v4409
    %v4411 = vand.u32 %v4410, 4294901760
    %v4412 = vsub.f32 %v4410, %v4411
    %v4413 = vand.u32 %v4412, 4294901760
    %4414 = vmatpush.xpose.msra.mxu0 %v4413
    %v4415 = vand.u32 %v3421, 4294901760
    %v4416 = vsub.f32 %v3421, %v4415
    %v4417 = vand.u32 %v4416, 4294901760
    %v4418 = vsub.f32 %v4416, %v4417
    %v4419 = vand.u32 %v4418, 4294901760
    %4420 = vmatpush.xpose.msra.mxu0 %v4419
    %v4421 = vand.u32 %v3418, 4294901760
    %v4422 = vsub.f32 %v3418, %v4421
    %v4423 = vand.u32 %v4422, 4294901760
    %v4424 = vsub.f32 %v4422, %v4423
    %v4425 = vand.u32 %v4424, 4294901760
    %4426 = vmatpush.xpose.msra.mxu0 %v4425
    %v4427 = vand.u32 %v3415, 4294901760
    %v4428 = vsub.f32 %v3415, %v4427
    %v4429 = vand.u32 %v4428, 4294901760
    %v4430 = vsub.f32 %v4428, %v4429
    %v4431 = vand.u32 %v4430, 4294901760
    %4432 = vmatpush.xpose.msra.mxu0 %v4431
    %v4433 = vand.u32 %v3412, 4294901760
    %v4434 = vsub.f32 %v3412, %v4433
    %v4435 = vand.u32 %v4434, 4294901760
    %v4436 = vsub.f32 %v4434, %v4435
    %v4437 = vand.u32 %v4436, 4294901760
    %4438 = vmatpush.xpose.msra.mxu0 %v4437
    %v4439 = vand.u32 %v3409, 4294901760
    %v4440 = vsub.f32 %v3409, %v4439
    %v4441 = vand.u32 %v4440, 4294901760
    %v4442 = vsub.f32 %v4440, %v4441
    %v4443 = vand.u32 %v4442, 4294901760
    %4444 = vmatpush.xpose.msra.mxu0 %v4443
    %v4445 = vand.u32 %v3406, 4294901760
    %v4446 = vsub.f32 %v3406, %v4445
    %v4447 = vand.u32 %v4446, 4294901760
    %v4448 = vsub.f32 %v4446, %v4447
    %v4449 = vand.u32 %v4448, 4294901760
    %4450 = vmatpush.xpose.msra.mxu0 %v4449
    %v4451 = vand.u32 %v3403, 4294901760
    %v4452 = vsub.f32 %v3403, %v4451
    %v4453 = vand.u32 %v4452, 4294901760
    %v4454 = vsub.f32 %v4452, %v4453
    %v4455 = vand.u32 %v4454, 4294901760
    %4456 = vmatpush.xpose.msra.mxu0 %v4455
    %v4457 = vand.u32 %v3298, 4294901760
    %4458 = vmatmul.f32.gmra.mxu0 %v4457
    %v4459 = vpop.f32.mrf.mxu0
    %v4460 = vadd.f32 %v4343, %v4459
    %v4461 = vand.u32 %v3301, 4294901760
    %4462 = vmatmul.f32.gmra.mxu0 %v4461
    %v4463 = vpop.f32.mrf.mxu0
    %v4464 = vadd.f32 %v4351, %v4463
    %v4465 = vand.u32 %v3304, 4294901760
    %4466 = vmatmul.f32.gmra.mxu0 %v4465
    %v4467 = vpop.f32.mrf.mxu0
    %v4468 = vadd.f32 %v4359, %v4467
    %4469 = vdwg.mxu0
    %v4470 = vand.u32 %v3448, 4294901760
    %v4471 = vsub.f32 %v3448, %v4470
    %4472 = vmatpush.xpose.msra.mxu0 %v4471
    %v4473 = vand.u32 %v3445, 4294901760
    %v4474 = vsub.f32 %v3445, %v4473
    %4475 = vmatpush.xpose.msra.mxu0 %v4474
    %v4476 = vand.u32 %v3442, 4294901760
    %v4477 = vsub.f32 %v3442, %v4476
    %4478 = vmatpush.xpose.msra.mxu0 %v4477
    %v4479 = vand.u32 %v3439, 4294901760
    %v4480 = vsub.f32 %v3439, %v4479
    %4481 = vmatpush.xpose.msra.mxu0 %v4480
    %v4482 = vand.u32 %v3436, 4294901760
    %v4483 = vsub.f32 %v3436, %v4482
    %4484 = vmatpush.xpose.msra.mxu0 %v4483
    %v4485 = vand.u32 %v3433, 4294901760
    %v4486 = vsub.f32 %v3433, %v4485
    %4487 = vmatpush.xpose.msra.mxu0 %v4486
    %v4488 = vand.u32 %v3430, 4294901760
    %v4489 = vsub.f32 %v3430, %v4488
    %4490 = vmatpush.xpose.msra.mxu0 %v4489
    %v4491 = vand.u32 %v3427, 4294901760
    %v4492 = vsub.f32 %v3427, %v4491
    %4493 = vmatpush.xpose.msra.mxu0 %v4492
    %v4494 = vand.u32 %v3424, 4294901760
    %v4495 = vsub.f32 %v3424, %v4494
    %4496 = vmatpush.xpose.msra.mxu0 %v4495
    %v4497 = vand.u32 %v3421, 4294901760
    %v4498 = vsub.f32 %v3421, %v4497
    %4499 = vmatpush.xpose.msra.mxu0 %v4498
    %v4500 = vand.u32 %v3418, 4294901760
    %v4501 = vsub.f32 %v3418, %v4500
    %4502 = vmatpush.xpose.msra.mxu0 %v4501
    %v4503 = vand.u32 %v3415, 4294901760
    %v4504 = vsub.f32 %v3415, %v4503
    %4505 = vmatpush.xpose.msra.mxu0 %v4504
    %v4506 = vand.u32 %v3412, 4294901760
    %v4507 = vsub.f32 %v3412, %v4506
    %4508 = vmatpush.xpose.msra.mxu0 %v4507
    %v4509 = vand.u32 %v3409, 4294901760
    %v4510 = vsub.f32 %v3409, %v4509
    %4511 = vmatpush.xpose.msra.mxu0 %v4510
    %v4512 = vand.u32 %v3406, 4294901760
    %v4513 = vsub.f32 %v3406, %v4512
    %4514 = vmatpush.xpose.msra.mxu0 %v4513
    %v4515 = vand.u32 %v3403, 4294901760
    %v4516 = vsub.f32 %v3403, %v4515
    %4517 = vmatpush.xpose.msra.mxu0 %v4516
    %v4518 = vand.u32 %v3298, 4294901760
    %v4519 = vsub.f32 %v3298, %v4518
    %4520 = vmatmul.f32.gmra.mxu0 %v4519
    %v4521 = vpop.f32.mrf.mxu0
    %v4522 = vadd.f32 %v4460, %v4521
    %v4523 = vand.u32 %v3301, 4294901760
    %v4524 = vsub.f32 %v3301, %v4523
    %4525 = vmatmul.f32.gmra.mxu0 %v4524
    %v4526 = vpop.f32.mrf.mxu0
    %v4527 = vadd.f32 %v4464, %v4526
    %v4528 = vand.u32 %v3304, 4294901760
    %v4529 = vsub.f32 %v3304, %v4528
    %4530 = vmatmul.f32.gmra.mxu0 %v4529
    %v4531 = vpop.f32.mrf.mxu0
    %v4532 = vadd.f32 %v4468, %v4531
    %4533 = vdwg.mxu0
    %v4534 = vand.u32 %v3448, 4294901760
    %4535 = vmatpush.xpose.msra.mxu0 %v4534
    %v4536 = vand.u32 %v3445, 4294901760
    %4537 = vmatpush.xpose.msra.mxu0 %v4536
    %v4538 = vand.u32 %v3442, 4294901760
    %4539 = vmatpush.xpose.msra.mxu0 %v4538
    %v4540 = vand.u32 %v3439, 4294901760
    %4541 = vmatpush.xpose.msra.mxu0 %v4540
    %v4542 = vand.u32 %v3436, 4294901760
    %4543 = vmatpush.xpose.msra.mxu0 %v4542
    %v4544 = vand.u32 %v3433, 4294901760
    %4545 = vmatpush.xpose.msra.mxu0 %v4544
    %v4546 = vand.u32 %v3430, 4294901760
    %4547 = vmatpush.xpose.msra.mxu0 %v4546
    %v4548 = vand.u32 %v3427, 4294901760
    %4549 = vmatpush.xpose.msra.mxu0 %v4548
    %v4550 = vand.u32 %v3424, 4294901760
    %4551 = vmatpush.xpose.msra.mxu0 %v4550
    %v4552 = vand.u32 %v3421, 4294901760
    %4553 = vmatpush.xpose.msra.mxu0 %v4552
    %v4554 = vand.u32 %v3418, 4294901760
    %4555 = vmatpush.xpose.msra.mxu0 %v4554
    %v4556 = vand.u32 %v3415, 4294901760
    %4557 = vmatpush.xpose.msra.mxu0 %v4556
    %v4558 = vand.u32 %v3412, 4294901760
    %4559 = vmatpush.xpose.msra.mxu0 %v4558
    %v4560 = vand.u32 %v3409, 4294901760
    %4561 = vmatpush.xpose.msra.mxu0 %v4560
    %v4562 = vand.u32 %v3406, 4294901760
    %4563 = vmatpush.xpose.msra.mxu0 %v4562
    %v4564 = vand.u32 %v3403, 4294901760
    %4565 = vmatpush.xpose.msra.mxu0 %v4564
    %v4566 = vand.u32 %v3298, 4294901760
    %v4567 = vsub.f32 %v3298, %v4566
    %v4568 = vand.u32 %v4567, 4294901760
    %4569 = vmatmul.f32.gmra.mxu0 %v4568
    %v4570 = vpop.f32.mrf.mxu0
    %v4571 = vadd.f32 %v4522, %v4570
    %v4572 = vand.u32 %v3301, 4294901760
    %v4573 = vsub.f32 %v3301, %v4572
    %v4574 = vand.u32 %v4573, 4294901760
    %4575 = vmatmul.f32.gmra.mxu0 %v4574
    %v4576 = vpop.f32.mrf.mxu0
    %v4577 = vadd.f32 %v4527, %v4576
    %v4578 = vand.u32 %v3304, 4294901760
    %v4579 = vsub.f32 %v3304, %v4578
    %v4580 = vand.u32 %v4579, 4294901760
    %4581 = vmatmul.f32.gmra.mxu0 %v4580
    %v4582 = vpop.f32.mrf.mxu0
    %v4583 = vadd.f32 %v4532, %v4582
    %4584 = vdwg.mxu0
    %v4585 = vand.u32 %v3448, 4294901760
    %v4586 = vsub.f32 %v3448, %v4585
    %v4587 = vand.u32 %v4586, 4294901760
    %4588 = vmatpush.xpose.msra.mxu0 %v4587
    %v4589 = vand.u32 %v3445, 4294901760
    %v4590 = vsub.f32 %v3445, %v4589
    %v4591 = vand.u32 %v4590, 4294901760
    %4592 = vmatpush.xpose.msra.mxu0 %v4591
    %v4593 = vand.u32 %v3442, 4294901760
    %v4594 = vsub.f32 %v3442, %v4593
    %v4595 = vand.u32 %v4594, 4294901760
    %4596 = vmatpush.xpose.msra.mxu0 %v4595
    %v4597 = vand.u32 %v3439, 4294901760
    %v4598 = vsub.f32 %v3439, %v4597
    %v4599 = vand.u32 %v4598, 4294901760
    %4600 = vmatpush.xpose.msra.mxu0 %v4599
    %v4601 = vand.u32 %v3436, 4294901760
    %v4602 = vsub.f32 %v3436, %v4601
    %v4603 = vand.u32 %v4602, 4294901760
    %4604 = vmatpush.xpose.msra.mxu0 %v4603
    %v4605 = vand.u32 %v3433, 4294901760
    %v4606 = vsub.f32 %v3433, %v4605
    %v4607 = vand.u32 %v4606, 4294901760
    %4608 = vmatpush.xpose.msra.mxu0 %v4607
    %v4609 = vand.u32 %v3430, 4294901760
    %v4610 = vsub.f32 %v3430, %v4609
    %v4611 = vand.u32 %v4610, 4294901760
    %4612 = vmatpush.xpose.msra.mxu0 %v4611
    %v4613 = vand.u32 %v3427, 4294901760
    %v4614 = vsub.f32 %v3427, %v4613
    %v4615 = vand.u32 %v4614, 4294901760
    %4616 = vmatpush.xpose.msra.mxu0 %v4615
    %v4617 = vand.u32 %v3424, 4294901760
    %v4618 = vsub.f32 %v3424, %v4617
    %v4619 = vand.u32 %v4618, 4294901760
    %4620 = vmatpush.xpose.msra.mxu0 %v4619
    %v4621 = vand.u32 %v3421, 4294901760
    %v4622 = vsub.f32 %v3421, %v4621
    %v4623 = vand.u32 %v4622, 4294901760
    %4624 = vmatpush.xpose.msra.mxu0 %v4623
    %v4625 = vand.u32 %v3418, 4294901760
    %v4626 = vsub.f32 %v3418, %v4625
    %v4627 = vand.u32 %v4626, 4294901760
    %4628 = vmatpush.xpose.msra.mxu0 %v4627
    %v4629 = vand.u32 %v3415, 4294901760
    %v4630 = vsub.f32 %v3415, %v4629
    %v4631 = vand.u32 %v4630, 4294901760
    %4632 = vmatpush.xpose.msra.mxu0 %v4631
    %v4633 = vand.u32 %v3412, 4294901760
    %v4634 = vsub.f32 %v3412, %v4633
    %v4635 = vand.u32 %v4634, 4294901760
    %4636 = vmatpush.xpose.msra.mxu0 %v4635
    %v4637 = vand.u32 %v3409, 4294901760
    %v4638 = vsub.f32 %v3409, %v4637
    %v4639 = vand.u32 %v4638, 4294901760
    %4640 = vmatpush.xpose.msra.mxu0 %v4639
    %v4641 = vand.u32 %v3406, 4294901760
    %v4642 = vsub.f32 %v3406, %v4641
    %v4643 = vand.u32 %v4642, 4294901760
    %4644 = vmatpush.xpose.msra.mxu0 %v4643
    %v4645 = vand.u32 %v3403, 4294901760
    %v4646 = vsub.f32 %v3403, %v4645
    %v4647 = vand.u32 %v4646, 4294901760
    %4648 = vmatpush.xpose.msra.mxu0 %v4647
    %v4649 = vand.u32 %v3298, 4294901760
    %4650 = vmatmul.f32.gmra.mxu0 %v4649
    %v4651 = vpop.f32.mrf.mxu0
    %v4652 = vadd.f32 %v4571, %v4651
    %v4653 = vand.u32 %v3301, 4294901760
    %4654 = vmatmul.f32.gmra.mxu0 %v4653
    %v4655 = vpop.f32.mrf.mxu0
    %v4656 = vadd.f32 %v4577, %v4655
    %v4657 = vand.u32 %v3304, 4294901760
    %4658 = vmatmul.f32.gmra.mxu0 %v4657
    %v4659 = vpop.f32.mrf.mxu0
    %v4660 = vadd.f32 %v4583, %v4659
    %4661 = vdwg.mxu0
    %v4662 = vand.u32 %v3448, 4294901760
    %4663 = vmatpush.xpose.msra.mxu0 %v4662
    %v4664 = vand.u32 %v3445, 4294901760
    %4665 = vmatpush.xpose.msra.mxu0 %v4664
    %v4666 = vand.u32 %v3442, 4294901760
    %4667 = vmatpush.xpose.msra.mxu0 %v4666
    %v4668 = vand.u32 %v3439, 4294901760
    %4669 = vmatpush.xpose.msra.mxu0 %v4668
    %v4670 = vand.u32 %v3436, 4294901760
    %4671 = vmatpush.xpose.msra.mxu0 %v4670
    %v4672 = vand.u32 %v3433, 4294901760
    %4673 = vmatpush.xpose.msra.mxu0 %v4672
    %v4674 = vand.u32 %v3430, 4294901760
    %4675 = vmatpush.xpose.msra.mxu0 %v4674
    %v4676 = vand.u32 %v3427, 4294901760
    %4677 = vmatpush.xpose.msra.mxu0 %v4676
    %v4678 = vand.u32 %v3424, 4294901760
    %4679 = vmatpush.xpose.msra.mxu0 %v4678
    %v4680 = vand.u32 %v3421, 4294901760
    %4681 = vmatpush.xpose.msra.mxu0 %v4680
    %v4682 = vand.u32 %v3418, 4294901760
    %4683 = vmatpush.xpose.msra.mxu0 %v4682
    %v4684 = vand.u32 %v3415, 4294901760
    %4685 = vmatpush.xpose.msra.mxu0 %v4684
    %v4686 = vand.u32 %v3412, 4294901760
    %4687 = vmatpush.xpose.msra.mxu0 %v4686
    %v4688 = vand.u32 %v3409, 4294901760
    %4689 = vmatpush.xpose.msra.mxu0 %v4688
    %v4690 = vand.u32 %v3406, 4294901760
    %4691 = vmatpush.xpose.msra.mxu0 %v4690
    %v4692 = vand.u32 %v3403, 4294901760
    %4693 = vmatpush.xpose.msra.mxu0 %v4692
    %v4694 = vand.u32 %v3298, 4294901760
    %4695 = vmatmul.f32.gmra.mxu0 %v4694
    %v4696 = vpop.f32.mrf.mxu0
    %v4697 = vadd.f32 %v4652, %v4696
    %v4698 = vand.u32 %v3301, 4294901760
    %4699 = vmatmul.f32.gmra.mxu0 %v4698
    %v4700 = vpop.f32.mrf.mxu0
    %v4701 = vadd.f32 %v4656, %v4700
    %v4702 = vand.u32 %v3304, 4294901760
    %4703 = vmatmul.f32.gmra.mxu0 %v4702
    %v4704 = vpop.f32.mrf.mxu0
    %v4705 = vadd.f32 %v4660, %v4704
    %4706 = vdwg.mxu0
    %v4707 = vand.u32 %v3496, 4294901760
    %4708 = vmatpush.xpose.msra.mxu0 %v4707
    %v4709 = vand.u32 %v3493, 4294901760
    %4710 = vmatpush.xpose.msra.mxu0 %v4709
    %v4711 = vand.u32 %v3490, 4294901760
    %4712 = vmatpush.xpose.msra.mxu0 %v4711
    %v4713 = vand.u32 %v3487, 4294901760
    %4714 = vmatpush.xpose.msra.mxu0 %v4713
    %v4715 = vand.u32 %v3484, 4294901760
    %4716 = vmatpush.xpose.msra.mxu0 %v4715
    %v4717 = vand.u32 %v3481, 4294901760
    %4718 = vmatpush.xpose.msra.mxu0 %v4717
    %v4719 = vand.u32 %v3478, 4294901760
    %4720 = vmatpush.xpose.msra.mxu0 %v4719
    %v4721 = vand.u32 %v3475, 4294901760
    %4722 = vmatpush.xpose.msra.mxu0 %v4721
    %v4723 = vand.u32 %v3472, 4294901760
    %4724 = vmatpush.xpose.msra.mxu0 %v4723
    %v4725 = vand.u32 %v3469, 4294901760
    %4726 = vmatpush.xpose.msra.mxu0 %v4725
    %v4727 = vand.u32 %v3466, 4294901760
    %4728 = vmatpush.xpose.msra.mxu0 %v4727
    %v4729 = vand.u32 %v3463, 4294901760
    %4730 = vmatpush.xpose.msra.mxu0 %v4729
    %v4731 = vand.u32 %v3460, 4294901760
    %4732 = vmatpush.xpose.msra.mxu0 %v4731
    %v4733 = vand.u32 %v3457, 4294901760
    %4734 = vmatpush.xpose.msra.mxu0 %v4733
    %v4735 = vand.u32 %v3454, 4294901760
    %4736 = vmatpush.xpose.msra.mxu0 %v4735
    %v4737 = vand.u32 %v3451, 4294901760
    %4738 = vmatpush.xpose.msra.mxu0 %v4737
    %v4739 = vand.u32 %v3298, 4294901760
    %v4740 = vsub.f32 %v3298, %v4739
    %v4741 = vand.u32 %v4740, 4294901760
    %v4742 = vsub.f32 %v4740, %v4741
    %v4743 = vand.u32 %v4742, 4294901760
    %4744 = vmatmul.f32.gmra.mxu0 %v4743
    %v4745 = vpop.f32.mrf.mxu0
    %v4746 = vadd.f32 0.0, %v4745
    %v4747 = vand.u32 %v3301, 4294901760
    %v4748 = vsub.f32 %v3301, %v4747
    %v4749 = vand.u32 %v4748, 4294901760
    %v4750 = vsub.f32 %v4748, %v4749
    %v4751 = vand.u32 %v4750, 4294901760
    %4752 = vmatmul.f32.gmra.mxu0 %v4751
    %v4753 = vpop.f32.mrf.mxu0
    %v4754 = vadd.f32 0.0, %v4753
    %v4755 = vand.u32 %v3304, 4294901760
    %v4756 = vsub.f32 %v3304, %v4755
    %v4757 = vand.u32 %v4756, 4294901760
    %v4758 = vsub.f32 %v4756, %v4757
    %v4759 = vand.u32 %v4758, 4294901760
    %4760 = vmatmul.f32.gmra.mxu0 %v4759
    %v4761 = vpop.f32.mrf.mxu0
    %v4762 = vadd.f32 0.0, %v4761
    %4763 = vdwg.mxu0
    %v4764 = vand.u32 %v3496, 4294901760
    %v4765 = vsub.f32 %v3496, %v4764
    %v4766 = vand.u32 %v4765, 4294901760
    %v4767 = vsub.f32 %v4765, %v4766
    %v4768 = vand.u32 %v4767, 4294901760
    %4769 = vmatpush.xpose.msra.mxu0 %v4768
    %v4770 = vand.u32 %v3493, 4294901760
    %v4771 = vsub.f32 %v3493, %v4770
    %v4772 = vand.u32 %v4771, 4294901760
    %v4773 = vsub.f32 %v4771, %v4772
    %v4774 = vand.u32 %v4773, 4294901760
    %4775 = vmatpush.xpose.msra.mxu0 %v4774
    %v4776 = vand.u32 %v3490, 4294901760
    %v4777 = vsub.f32 %v3490, %v4776
    %v4778 = vand.u32 %v4777, 4294901760
    %v4779 = vsub.f32 %v4777, %v4778
    %v4780 = vand.u32 %v4779, 4294901760
    %4781 = vmatpush.xpose.msra.mxu0 %v4780
    %v4782 = vand.u32 %v3487, 4294901760
    %v4783 = vsub.f32 %v3487, %v4782
    %v4784 = vand.u32 %v4783, 4294901760
    %v4785 = vsub.f32 %v4783, %v4784
    %v4786 = vand.u32 %v4785, 4294901760
    %4787 = vmatpush.xpose.msra.mxu0 %v4786
    %v4788 = vand.u32 %v3484, 4294901760
    %v4789 = vsub.f32 %v3484, %v4788
    %v4790 = vand.u32 %v4789, 4294901760
    %v4791 = vsub.f32 %v4789, %v4790
    %v4792 = vand.u32 %v4791, 4294901760
    %4793 = vmatpush.xpose.msra.mxu0 %v4792
    %v4794 = vand.u32 %v3481, 4294901760
    %v4795 = vsub.f32 %v3481, %v4794
    %v4796 = vand.u32 %v4795, 4294901760
    %v4797 = vsub.f32 %v4795, %v4796
    %v4798 = vand.u32 %v4797, 4294901760
    %4799 = vmatpush.xpose.msra.mxu0 %v4798
    %v4800 = vand.u32 %v3478, 4294901760
    %v4801 = vsub.f32 %v3478, %v4800
    %v4802 = vand.u32 %v4801, 4294901760
    %v4803 = vsub.f32 %v4801, %v4802
    %v4804 = vand.u32 %v4803, 4294901760
    %4805 = vmatpush.xpose.msra.mxu0 %v4804
    %v4806 = vand.u32 %v3475, 4294901760
    %v4807 = vsub.f32 %v3475, %v4806
    %v4808 = vand.u32 %v4807, 4294901760
    %v4809 = vsub.f32 %v4807, %v4808
    %v4810 = vand.u32 %v4809, 4294901760
    %4811 = vmatpush.xpose.msra.mxu0 %v4810
    %v4812 = vand.u32 %v3472, 4294901760
    %v4813 = vsub.f32 %v3472, %v4812
    %v4814 = vand.u32 %v4813, 4294901760
    %v4815 = vsub.f32 %v4813, %v4814
    %v4816 = vand.u32 %v4815, 4294901760
    %4817 = vmatpush.xpose.msra.mxu0 %v4816
    %v4818 = vand.u32 %v3469, 4294901760
    %v4819 = vsub.f32 %v3469, %v4818
    %v4820 = vand.u32 %v4819, 4294901760
    %v4821 = vsub.f32 %v4819, %v4820
    %v4822 = vand.u32 %v4821, 4294901760
    %4823 = vmatpush.xpose.msra.mxu0 %v4822
    %v4824 = vand.u32 %v3466, 4294901760
    %v4825 = vsub.f32 %v3466, %v4824
    %v4826 = vand.u32 %v4825, 4294901760
    %v4827 = vsub.f32 %v4825, %v4826
    %v4828 = vand.u32 %v4827, 4294901760
    %4829 = vmatpush.xpose.msra.mxu0 %v4828
    %v4830 = vand.u32 %v3463, 4294901760
    %v4831 = vsub.f32 %v3463, %v4830
    %v4832 = vand.u32 %v4831, 4294901760
    %v4833 = vsub.f32 %v4831, %v4832
    %v4834 = vand.u32 %v4833, 4294901760
    %4835 = vmatpush.xpose.msra.mxu0 %v4834
    %v4836 = vand.u32 %v3460, 4294901760
    %v4837 = vsub.f32 %v3460, %v4836
    %v4838 = vand.u32 %v4837, 4294901760
    %v4839 = vsub.f32 %v4837, %v4838
    %v4840 = vand.u32 %v4839, 4294901760
    %4841 = vmatpush.xpose.msra.mxu0 %v4840
    %v4842 = vand.u32 %v3457, 4294901760
    %v4843 = vsub.f32 %v3457, %v4842
    %v4844 = vand.u32 %v4843, 4294901760
    %v4845 = vsub.f32 %v4843, %v4844
    %v4846 = vand.u32 %v4845, 4294901760
    %4847 = vmatpush.xpose.msra.mxu0 %v4846
    %v4848 = vand.u32 %v3454, 4294901760
    %v4849 = vsub.f32 %v3454, %v4848
    %v4850 = vand.u32 %v4849, 4294901760
    %v4851 = vsub.f32 %v4849, %v4850
    %v4852 = vand.u32 %v4851, 4294901760
    %4853 = vmatpush.xpose.msra.mxu0 %v4852
    %v4854 = vand.u32 %v3451, 4294901760
    %v4855 = vsub.f32 %v3451, %v4854
    %v4856 = vand.u32 %v4855, 4294901760
    %v4857 = vsub.f32 %v4855, %v4856
    %v4858 = vand.u32 %v4857, 4294901760
    %4859 = vmatpush.xpose.msra.mxu0 %v4858
    %v4860 = vand.u32 %v3298, 4294901760
    %4861 = vmatmul.f32.gmra.mxu0 %v4860
    %v4862 = vpop.f32.mrf.mxu0
    %v4863 = vadd.f32 %v4746, %v4862
    %v4864 = vand.u32 %v3301, 4294901760
    %4865 = vmatmul.f32.gmra.mxu0 %v4864
    %v4866 = vpop.f32.mrf.mxu0
    %v4867 = vadd.f32 %v4754, %v4866
    %v4868 = vand.u32 %v3304, 4294901760
    %4869 = vmatmul.f32.gmra.mxu0 %v4868
    %v4870 = vpop.f32.mrf.mxu0
    %v4871 = vadd.f32 %v4762, %v4870
    %4872 = vdwg.mxu0
    %v4873 = vand.u32 %v3496, 4294901760
    %v4874 = vsub.f32 %v3496, %v4873
    %4875 = vmatpush.xpose.msra.mxu0 %v4874
    %v4876 = vand.u32 %v3493, 4294901760
    %v4877 = vsub.f32 %v3493, %v4876
    %4878 = vmatpush.xpose.msra.mxu0 %v4877
    %v4879 = vand.u32 %v3490, 4294901760
    %v4880 = vsub.f32 %v3490, %v4879
    %4881 = vmatpush.xpose.msra.mxu0 %v4880
    %v4882 = vand.u32 %v3487, 4294901760
    %v4883 = vsub.f32 %v3487, %v4882
    %4884 = vmatpush.xpose.msra.mxu0 %v4883
    %v4885 = vand.u32 %v3484, 4294901760
    %v4886 = vsub.f32 %v3484, %v4885
    %4887 = vmatpush.xpose.msra.mxu0 %v4886
    %v4888 = vand.u32 %v3481, 4294901760
    %v4889 = vsub.f32 %v3481, %v4888
    %4890 = vmatpush.xpose.msra.mxu0 %v4889
    %v4891 = vand.u32 %v3478, 4294901760
    %v4892 = vsub.f32 %v3478, %v4891
    %4893 = vmatpush.xpose.msra.mxu0 %v4892
    %v4894 = vand.u32 %v3475, 4294901760
    %v4895 = vsub.f32 %v3475, %v4894
    %4896 = vmatpush.xpose.msra.mxu0 %v4895
    %v4897 = vand.u32 %v3472, 4294901760
    %v4898 = vsub.f32 %v3472, %v4897
    %4899 = vmatpush.xpose.msra.mxu0 %v4898
    %v4900 = vand.u32 %v3469, 4294901760
    %v4901 = vsub.f32 %v3469, %v4900
    %4902 = vmatpush.xpose.msra.mxu0 %v4901
    %v4903 = vand.u32 %v3466, 4294901760
    %v4904 = vsub.f32 %v3466, %v4903
    %4905 = vmatpush.xpose.msra.mxu0 %v4904
    %v4906 = vand.u32 %v3463, 4294901760
    %v4907 = vsub.f32 %v3463, %v4906
    %4908 = vmatpush.xpose.msra.mxu0 %v4907
    %v4909 = vand.u32 %v3460, 4294901760
    %v4910 = vsub.f32 %v3460, %v4909
    %4911 = vmatpush.xpose.msra.mxu0 %v4910
    %v4912 = vand.u32 %v3457, 4294901760
    %v4913 = vsub.f32 %v3457, %v4912
    %4914 = vmatpush.xpose.msra.mxu0 %v4913
    %v4915 = vand.u32 %v3454, 4294901760
    %v4916 = vsub.f32 %v3454, %v4915
    %4917 = vmatpush.xpose.msra.mxu0 %v4916
    %v4918 = vand.u32 %v3451, 4294901760
    %v4919 = vsub.f32 %v3451, %v4918
    %4920 = vmatpush.xpose.msra.mxu0 %v4919
    %v4921 = vand.u32 %v3298, 4294901760
    %v4922 = vsub.f32 %v3298, %v4921
    %4923 = vmatmul.f32.gmra.mxu0 %v4922
    %v4924 = vpop.f32.mrf.mxu0
    %v4925 = vadd.f32 %v4863, %v4924
    %v4926 = vand.u32 %v3301, 4294901760
    %v4927 = vsub.f32 %v3301, %v4926
    %4928 = vmatmul.f32.gmra.mxu0 %v4927
    %v4929 = vpop.f32.mrf.mxu0
    %v4930 = vadd.f32 %v4867, %v4929
    %v4931 = vand.u32 %v3304, 4294901760
    %v4932 = vsub.f32 %v3304, %v4931
    %4933 = vmatmul.f32.gmra.mxu0 %v4932
    %v4934 = vpop.f32.mrf.mxu0
    %v4935 = vadd.f32 %v4871, %v4934
    %4936 = vdwg.mxu0
    %v4937 = vand.u32 %v3496, 4294901760
    %4938 = vmatpush.xpose.msra.mxu0 %v4937
    %v4939 = vand.u32 %v3493, 4294901760
    %4940 = vmatpush.xpose.msra.mxu0 %v4939
    %v4941 = vand.u32 %v3490, 4294901760
    %4942 = vmatpush.xpose.msra.mxu0 %v4941
    %v4943 = vand.u32 %v3487, 4294901760
    %4944 = vmatpush.xpose.msra.mxu0 %v4943
    %v4945 = vand.u32 %v3484, 4294901760
    %4946 = vmatpush.xpose.msra.mxu0 %v4945
    %v4947 = vand.u32 %v3481, 4294901760
    %4948 = vmatpush.xpose.msra.mxu0 %v4947
    %v4949 = vand.u32 %v3478, 4294901760
    %4950 = vmatpush.xpose.msra.mxu0 %v4949
    %v4951 = vand.u32 %v3475, 4294901760
    %4952 = vmatpush.xpose.msra.mxu0 %v4951
    %v4953 = vand.u32 %v3472, 4294901760
    %4954 = vmatpush.xpose.msra.mxu0 %v4953
    %v4955 = vand.u32 %v3469, 4294901760
    %4956 = vmatpush.xpose.msra.mxu0 %v4955
    %v4957 = vand.u32 %v3466, 4294901760
    %4958 = vmatpush.xpose.msra.mxu0 %v4957
    %v4959 = vand.u32 %v3463, 4294901760
    %4960 = vmatpush.xpose.msra.mxu0 %v4959
    %v4961 = vand.u32 %v3460, 4294901760
    %4962 = vmatpush.xpose.msra.mxu0 %v4961
    %v4963 = vand.u32 %v3457, 4294901760
    %4964 = vmatpush.xpose.msra.mxu0 %v4963
    %v4965 = vand.u32 %v3454, 4294901760
    %4966 = vmatpush.xpose.msra.mxu0 %v4965
    %v4967 = vand.u32 %v3451, 4294901760
    %4968 = vmatpush.xpose.msra.mxu0 %v4967
    %v4969 = vand.u32 %v3298, 4294901760
    %v4970 = vsub.f32 %v3298, %v4969
    %v4971 = vand.u32 %v4970, 4294901760
    %4972 = vmatmul.f32.gmra.mxu0 %v4971
    %v4973 = vpop.f32.mrf.mxu0
    %v4974 = vadd.f32 %v4925, %v4973
    %v4975 = vand.u32 %v3301, 4294901760
    %v4976 = vsub.f32 %v3301, %v4975
    %v4977 = vand.u32 %v4976, 4294901760
    %4978 = vmatmul.f32.gmra.mxu0 %v4977
    %v4979 = vpop.f32.mrf.mxu0
    %v4980 = vadd.f32 %v4930, %v4979
    %v4981 = vand.u32 %v3304, 4294901760
    %v4982 = vsub.f32 %v3304, %v4981
    %v4983 = vand.u32 %v4982, 4294901760
    %4984 = vmatmul.f32.gmra.mxu0 %v4983
    %v4985 = vpop.f32.mrf.mxu0
    %v4986 = vadd.f32 %v4935, %v4985
    %4987 = vdwg.mxu0
    %v4988 = vand.u32 %v3496, 4294901760
    %v4989 = vsub.f32 %v3496, %v4988
    %v4990 = vand.u32 %v4989, 4294901760
    %4991 = vmatpush.xpose.msra.mxu0 %v4990
    %v4992 = vand.u32 %v3493, 4294901760
    %v4993 = vsub.f32 %v3493, %v4992
    %v4994 = vand.u32 %v4993, 4294901760
    %4995 = vmatpush.xpose.msra.mxu0 %v4994
    %v4996 = vand.u32 %v3490, 4294901760
    %v4997 = vsub.f32 %v3490, %v4996
    %v4998 = vand.u32 %v4997, 4294901760
    %4999 = vmatpush.xpose.msra.mxu0 %v4998
    %v5000 = vand.u32 %v3487, 4294901760
    %v5001 = vsub.f32 %v3487, %v5000
    %v5002 = vand.u32 %v5001, 4294901760
    %5003 = vmatpush.xpose.msra.mxu0 %v5002
    %v5004 = vand.u32 %v3484, 4294901760
    %v5005 = vsub.f32 %v3484, %v5004
    %v5006 = vand.u32 %v5005, 4294901760
    %5007 = vmatpush.xpose.msra.mxu0 %v5006
    %v5008 = vand.u32 %v3481, 4294901760
    %v5009 = vsub.f32 %v3481, %v5008
    %v5010 = vand.u32 %v5009, 4294901760
    %5011 = vmatpush.xpose.msra.mxu0 %v5010
    %v5012 = vand.u32 %v3478, 4294901760
    %v5013 = vsub.f32 %v3478, %v5012
    %v5014 = vand.u32 %v5013, 4294901760
    %5015 = vmatpush.xpose.msra.mxu0 %v5014
    %v5016 = vand.u32 %v3475, 4294901760
    %v5017 = vsub.f32 %v3475, %v5016
    %v5018 = vand.u32 %v5017, 4294901760
    %5019 = vmatpush.xpose.msra.mxu0 %v5018
    %v5020 = vand.u32 %v3472, 4294901760
    %v5021 = vsub.f32 %v3472, %v5020
    %v5022 = vand.u32 %v5021, 4294901760
    %5023 = vmatpush.xpose.msra.mxu0 %v5022
    %v5024 = vand.u32 %v3469, 4294901760
    %v5025 = vsub.f32 %v3469, %v5024
    %v5026 = vand.u32 %v5025, 4294901760
    %5027 = vmatpush.xpose.msra.mxu0 %v5026
    %v5028 = vand.u32 %v3466, 4294901760
    %v5029 = vsub.f32 %v3466, %v5028
    %v5030 = vand.u32 %v5029, 4294901760
    %5031 = vmatpush.xpose.msra.mxu0 %v5030
    %v5032 = vand.u32 %v3463, 4294901760
    %v5033 = vsub.f32 %v3463, %v5032
    %v5034 = vand.u32 %v5033, 4294901760
    %5035 = vmatpush.xpose.msra.mxu0 %v5034
    %v5036 = vand.u32 %v3460, 4294901760
    %v5037 = vsub.f32 %v3460, %v5036
    %v5038 = vand.u32 %v5037, 4294901760
    %5039 = vmatpush.xpose.msra.mxu0 %v5038
    %v5040 = vand.u32 %v3457, 4294901760
    %v5041 = vsub.f32 %v3457, %v5040
    %v5042 = vand.u32 %v5041, 4294901760
    %5043 = vmatpush.xpose.msra.mxu0 %v5042
    %v5044 = vand.u32 %v3454, 4294901760
    %v5045 = vsub.f32 %v3454, %v5044
    %v5046 = vand.u32 %v5045, 4294901760
    %5047 = vmatpush.xpose.msra.mxu0 %v5046
    %v5048 = vand.u32 %v3451, 4294901760
    %v5049 = vsub.f32 %v3451, %v5048
    %v5050 = vand.u32 %v5049, 4294901760
    %5051 = vmatpush.xpose.msra.mxu0 %v5050
    %v5052 = vand.u32 %v3298, 4294901760
    %5053 = vmatmul.f32.gmra.mxu0 %v5052
    %v5054 = vpop.f32.mrf.mxu0
    %v5055 = vadd.f32 %v4974, %v5054
    %v5056 = vand.u32 %v3301, 4294901760
    %5057 = vmatmul.f32.gmra.mxu0 %v5056
    %v5058 = vpop.f32.mrf.mxu0
    %v5059 = vadd.f32 %v4980, %v5058
    %v5060 = vand.u32 %v3304, 4294901760
    %5061 = vmatmul.f32.gmra.mxu0 %v5060
    %v5062 = vpop.f32.mrf.mxu0
    %v5063 = vadd.f32 %v4986, %v5062
    %5064 = vdwg.mxu0
    %v5065 = vand.u32 %v3496, 4294901760
    %5066 = vmatpush.xpose.msra.mxu0 %v5065
    %v5067 = vand.u32 %v3493, 4294901760
    %5068 = vmatpush.xpose.msra.mxu0 %v5067
    %v5069 = vand.u32 %v3490, 4294901760
    %5070 = vmatpush.xpose.msra.mxu0 %v5069
    %v5071 = vand.u32 %v3487, 4294901760
    %5072 = vmatpush.xpose.msra.mxu0 %v5071
    %v5073 = vand.u32 %v3484, 4294901760
    %5074 = vmatpush.xpose.msra.mxu0 %v5073
    %v5075 = vand.u32 %v3481, 4294901760
    %5076 = vmatpush.xpose.msra.mxu0 %v5075
    %v5077 = vand.u32 %v3478, 4294901760
    %5078 = vmatpush.xpose.msra.mxu0 %v5077
    %v5079 = vand.u32 %v3475, 4294901760
    %5080 = vmatpush.xpose.msra.mxu0 %v5079
    %v5081 = vand.u32 %v3472, 4294901760
    %5082 = vmatpush.xpose.msra.mxu0 %v5081
    %v5083 = vand.u32 %v3469, 4294901760
    %5084 = vmatpush.xpose.msra.mxu0 %v5083
    %v5085 = vand.u32 %v3466, 4294901760
    %5086 = vmatpush.xpose.msra.mxu0 %v5085
    %v5087 = vand.u32 %v3463, 4294901760
    %5088 = vmatpush.xpose.msra.mxu0 %v5087
    %v5089 = vand.u32 %v3460, 4294901760
    %5090 = vmatpush.xpose.msra.mxu0 %v5089
    %v5091 = vand.u32 %v3457, 4294901760
    %5092 = vmatpush.xpose.msra.mxu0 %v5091
    %v5093 = vand.u32 %v3454, 4294901760
    %5094 = vmatpush.xpose.msra.mxu0 %v5093
    %v5095 = vand.u32 %v3451, 4294901760
    %5096 = vmatpush.xpose.msra.mxu0 %v5095
    %v5097 = vand.u32 %v3298, 4294901760
    %5098 = vmatmul.f32.gmra.mxu0 %v5097
    %v5099 = vpop.f32.mrf.mxu0
    %v5100 = vadd.f32 %v5055, %v5099
    %v5101 = vand.u32 %v3301, 4294901760
    %5102 = vmatmul.f32.gmra.mxu0 %v5101
    %v5103 = vpop.f32.mrf.mxu0
    %v5104 = vadd.f32 %v5059, %v5103
    %v5105 = vand.u32 %v3304, 4294901760
    %5106 = vmatmul.f32.gmra.mxu0 %v5105
    %v5107 = vpop.f32.mrf.mxu0
    %v5108 = vadd.f32 %v5063, %v5107
    %5109 = vdwg.mxu0
    %v5110 = vadd.f32 %v3891, %v4294
    %v5111 = vadd.f32 %v5110, %v4697
    %v5112 = vadd.f32 %v5111, %v5100
    %5113 = vadd.xlane.f32.xlu0 %v5112
    %v5114 = vpop.xlane.xlu0 %5113
    %v5115 = vadd.f32 %v3895, %v4298
    %v5116 = vadd.f32 %v5115, %v4701
    %v5117 = vadd.f32 %v5116, %v5104
    %5118 = vadd.xlane.f32.xlu0 %v5117
    %v5119 = vpop.xlane.xlu0 %5118
    %v5120 = vadd.f32 %v3899, %v4302
    %v5121 = vadd.f32 %v5120, %v4705
    %v5122 = vadd.f32 %v5121, %v5108
    %5123 = vadd.xlane.f32.xlu0 %v5122
    %v5124 = vpop.xlane.xlu0 %5123
    %v5125 = vrcp.pop 512.0
    %v5126 = vmul.f32 512.0, %v5125
    %v5127 = vsub.f32 1.0, %v5126
    %v5128 = vmul.f32 %v5125, %v5127
    %v5129 = vadd.f32 %v5125, %v5128
    %vm5130 = vweird.f32 %v5125
    %v5131 = vsel %vm5130, %v5125, %v5129
    %v5132 = vmul.f32 %v5114, %v5131
    %v5133 = vmul.f32 %v5119, %v5131
    %v5134 = vmul.f32 %v5124, %v5131
    %v5135 = vmul.f32 %v3891, %v3891
    %v5136 = vmul.f32 %v4294, %v4294
    %v5137 = vmul.f32 %v4697, %v4697
    %v5138 = vmul.f32 %v5100, %v5100
    %v5139 = vmul.f32 %v3895, %v3895
    %v5140 = vmul.f32 %v4298, %v4298
    %v5141 = vmul.f32 %v4701, %v4701
    %v5142 = vmul.f32 %v5104, %v5104
    %v5143 = vmul.f32 %v3899, %v3899
    %v5144 = vmul.f32 %v4302, %v4302
    %v5145 = vmul.f32 %v4705, %v4705
    %v5146 = vmul.f32 %v5108, %v5108
    %v5147 = vadd.f32 %v5135, %v5136
    %v5148 = vadd.f32 %v5147, %v5137
    %v5149 = vadd.f32 %v5148, %v5138
    %5150 = vadd.xlane.f32.xlu0 %v5149
    %v5151 = vpop.xlane.xlu0 %5150
    %v5152 = vadd.f32 %v5139, %v5140
    %v5153 = vadd.f32 %v5152, %v5141
    %v5154 = vadd.f32 %v5153, %v5142
    %5155 = vadd.xlane.f32.xlu0 %v5154
    %v5156 = vpop.xlane.xlu0 %5155
    %v5157 = vadd.f32 %v5143, %v5144
    %v5158 = vadd.f32 %v5157, %v5145
    %v5159 = vadd.f32 %v5158, %v5146
    %5160 = vadd.xlane.f32.xlu0 %v5159
    %v5161 = vpop.xlane.xlu0 %5160
    %v5162 = vmul.f32 %v5151, %v5131
    %v5163 = vmul.f32 %v5156, %v5131
    %v5164 = vmul.f32 %v5161, %v5131
    %v5165 = vmul.f32 %v5132, %v5132
    %v5166 = vmul.f32 %v5133, %v5133
    %v5167 = vmul.f32 %v5134, %v5134
    %v5168 = vsub.f32 %v5162, %v5165
    %v5169 = vsub.f32 %v5163, %v5166
    %v5170 = vsub.f32 %v5164, %v5167
    %v5171 = vld [vmem:[%s2] sm:$0xff]
    %v5172 = vld [vmem:[%s2 + $0x8] sm:$0xff]
    %v5173 = vld [vmem:[%s2 + $0x10] sm:$0xff]
    %v5174 = vadd.f32 %v5168, 0.001
    %v5175 = vadd.f32 %v5169, 0.001
    %v5176 = vadd.f32 %v5170, 0.001
    %v5177 = vrsqrt.pop %v5174
    %v5178 = vmul.f32 %v5177, %v5174
    %v5179 = vmul.f32 %v5178, %v5177
    %v5180 = vmul.f32 0.5, %v5179
    %v5181 = vsub.f32 1.5, %v5180
    %v5182 = vmul.f32 %v5177, %v5181
    %vm5183 = vweird.f32 %v5174
    %vm5184 = vweird.f32 %v5177
    %vm5185 = vmor %vm5183, %vm5184
    %v5186 = vsel %vm5185, %v5177, %v5182
    %v5187 = vrsqrt.pop %v5175
    %v5188 = vmul.f32 %v5187, %v5175
    %v5189 = vmul.f32 %v5188, %v5187
    %v5190 = vmul.f32 0.5, %v5189
    %v5191 = vsub.f32 1.5, %v5190
    %v5192 = vmul.f32 %v5187, %v5191
    %vm5193 = vweird.f32 %v5175
    %vm5194 = vweird.f32 %v5187
    %vm5195 = vmor %vm5193, %vm5194
    %v5196 = vsel %vm5195, %v5187, %v5192
    %v5197 = vrsqrt.pop %v5176
    %v5198 = vmul.f32 %v5197, %v5176
    %v5199 = vmul.f32 %v5198, %v5197
    %v5200 = vmul.f32 0.5, %v5199
    %v5201 = vsub.f32 1.5, %v5200
    %v5202 = vmul.f32 %v5197, %v5201
    %vm5203 = vweird.f32 %v5176
    %vm5204 = vweird.f32 %v5197
    %vm5205 = vmor %vm5203, %vm5204
    %v5206 = vsel %vm5205, %v5197, %v5202
    %v5207 = vmul.f32 %v5171, %v5186
    %v5208 = vmul.f32 %v5172, %v5196
    %v5209 = vmul.f32 %v5173, %v5206
    %v5210 = vld [vmem:[%s3] sm:$0xff]
    %v5211 = vld [vmem:[%s3 + $0x8] sm:$0xff]
    %v5212 = vld [vmem:[%s3 + $0x10] sm:$0xff]
    %v5213 = vmul.f32 %v5132, %v5207
    %v5214 = vmul.f32 %v5133, %v5208
    %v5215 = vmul.f32 %v5134, %v5209
    %v5216 = vsub.f32 %v5210, %v5213
    %v5217 = vsub.f32 %v5211, %v5214
    %v5218 = vsub.f32 %v5212, %v5215
    %5220 = vset.pattern.permute.xlu0 0
    %5221 = vperm.xlu0 %5220, %v5207
    %v5222 = vpop.permute.xlu0 %5221
    %5225 = vset.pattern.permute.xlu0 0
    %5226 = vperm.xlu0 %5225, %v5208
    %v5227 = vpop.permute.xlu0 %5226
    %5230 = vset.pattern.permute.xlu0 0
    %5231 = vperm.xlu0 %5230, %v5209
    %v5232 = vpop.permute.xlu0 %5231
    %v5234 = vmul.f32 %v3891, %v5222
    %v5235 = vmul.f32 %v4294, %v5222
    %v5236 = vmul.f32 %v4697, %v5222
    %v5237 = vmul.f32 %v5100, %v5222
    %v5238 = vmul.f32 %v3895, %v5227
    %v5239 = vmul.f32 %v4298, %v5227
    %v5240 = vmul.f32 %v4701, %v5227
    %v5241 = vmul.f32 %v5104, %v5227
    %v5242 = vmul.f32 %v3899, %v5232
    %v5243 = vmul.f32 %v4302, %v5232
    %v5244 = vmul.f32 %v4705, %v5232
    %v5245 = vmul.f32 %v5108, %v5232
    %5247 = vset.pattern.permute.xlu0 0
    %5248 = vperm.xlu0 %5247, %v5216
    %v5249 = vpop.permute.xlu0 %5248
    %5252 = vset.pattern.permute.xlu0 0
    %5253 = vperm.xlu0 %5252, %v5217
    %v5254 = vpop.permute.xlu0 %5253
    %5257 = vset.pattern.permute.xlu0 0
    %5258 = vperm.xlu0 %5257, %v5218
    %v5259 = vpop.permute.xlu0 %5258
    %v5261 = vadd.f32 %v5234, %v5249
    %v5262 = vadd.f32 %v5235, %v5249
    %v5263 = vadd.f32 %v5236, %v5249
    %v5264 = vadd.f32 %v5237, %v5249
    %v5265 = vadd.f32 %v5238, %v5254
    %v5266 = vadd.f32 %v5239, %v5254
    %v5267 = vadd.f32 %v5240, %v5254
    %v5268 = vadd.f32 %v5241, %v5254
    %v5269 = vadd.f32 %v5242, %v5259
    %v5270 = vadd.f32 %v5243, %v5259
    %v5271 = vadd.f32 %v5244, %v5259
    %v5272 = vadd.f32 %v5245, %v5259
    %v5273 = vadd.f32 %v5261, %v5265
    %v5274 = vadd.f32 %v5262, %v5266
    %v5275 = vadd.f32 %v5263, %v5267
    %v5276 = vadd.f32 %v5264, %v5268
    %v5277 = vadd.f32 %v5273, %v5269
    %v5278 = vadd.f32 %v5274, %v5270
    %v5279 = vadd.f32 %v5275, %v5271
    %v5280 = vadd.f32 %v5276, %v5272
    %v5281 = vmax.f32 %v5277, 0.0
    %v5282 = vmax.f32 %v5278, 0.0
    %v5283 = vmax.f32 %v5279, 0.0
    %v5284 = vmax.f32 %v5280, 0.0
    %5285 = vst [vmem:[#allocation3] sm:$0xff] %v5281
    %5286 = vst [vmem:[#allocation3 + $0x8] sm:$0xff] %v5282
    %s5287 = scalar_lea.vmem [#allocation3], 16
    %5288 = vst [vmem:[%s5287] sm:$0xff] %v5283
    %5289 = vst [vmem:[%s5287 + $0x8] sm:$0xff] %v5284
    // Predicated region
    $region18: #{tpu_custom_call.1} parent=1 // pred_check
      _
    $region19: #{tpu_custom_call.1} parent=1 // pred_check_branch
      %5291 = sbr.rel (0) target = $region21
    $region20: #{tpu_custom_call.1} parent=1 // pred_region
      %5293 = vsyncadd [#allocation4], 0
      %s5294 = sshll.u32 [#allocation3], 4
      %s5295 = int_to_ptr.vmem [resolvable:$true] %s5294
      %s5296 = sshll.u32 %s4, 4
      %s5297 = int_to_ptr.hbm [resolvable:$true] %s5296
      %5302 = dma.vmem_to_hbm [thread:$0]  %s5295, 512, %s5297, [#allocation4], 256, 256, 16
    $region21: #{tpu_custom_call.1} parent=1 // pred_fallthru
      _
    // Predicated region
    $region22: #{tpu_custom_call.1} parent=1 // pred_check
      _
    $region23: #{tpu_custom_call.1} parent=1 // pred_check_branch
      %5304 = sbr.rel (0) target = $region25
    $region24: #{tpu_custom_call.1} parent=1 // pred_region
      %5306 = dma.done [#allocation4], 512
    $region25: #{tpu_custom_call.1} parent=1 // pred_fallthru
      _
    %5307 = vsyncpa [#allocation4], 1

</llo_original>
